<compile_context>
chip_gen: v6e
topology: v6e:2x2x1
jax: 0.10.0
libtpu: 0.0.40
codegen_flags: <defaults>
</compile_context>

<pallas_src>
import jax
import jax.numpy as jnp
from jax.experimental import pallas as pl
from jax.experimental.pallas import tpu as pltpu

# Layer sizes from the module definition.
LAYER_SIZES = [28 * 28, 256, 512, 1024, 256, 10]
LANE = 128
SUBLANE_BF16 = 16


def _round_up(x, m):
    return (x + m - 1) // m * m


def _cdiv(a, b):
    return -(-a // b)


# Lane-dense (128-aligned) sizes used inside the kernel.
PADDED_IN = _round_up(LAYER_SIZES[0], LANE)     # 784 -> 896
PADDED_OUT = _round_up(LAYER_SIZES[-1], LANE)   # 10  -> 128
PADDED_SIZES = [PADDED_IN] + LAYER_SIZES[1:-1] + [PADDED_OUT]


def _mlp_kernel(x_ref,
                w1_ref, b1_ref,
                w2_ref, b2_ref,
                w3_ref, b3_ref,
                w4_ref, b4_ref,
                w5_ref, b5_ref,
                o_ref):
    """Fused 5-layer MLP forward for one (tm, 896) bf16 batch tile.

    Matmuls are bf16 x bf16 -> f32 on the MXU; bias-add / ReLU run on the VPU
    in f32; activations are recast to bf16 between layers to stay on the MXU
    fast path.  All padded bf16 weights (~2.4 MB) stay VMEM-resident.
    """
    h = x_ref[...]                                                   # bf16 (tm, 896)

    h = jnp.dot(h, w1_ref[...], preferred_element_type=jnp.float32) + b1_ref[...]
    h = jnp.maximum(h, 0.0).astype(jnp.bfloat16)
    h = jnp.dot(h, w2_ref[...], preferred_element_type=jnp.float32) + b2_ref[...]
    h = jnp.maximum(h, 0.0).astype(jnp.bfloat16)
    h = jnp.dot(h, w3_ref[...], preferred_element_type=jnp.float32) + b3_ref[...]
    h = jnp.maximum(h, 0.0).astype(jnp.bfloat16)
    h = jnp.dot(h, w4_ref[...], preferred_element_type=jnp.float32) + b4_ref[...]
    h = jnp.maximum(h, 0.0).astype(jnp.bfloat16)

    # Final layer: Linear only (padded to 128 output lanes -> unmasked stores).
    out = jnp.dot(h, w5_ref[...], preferred_element_type=jnp.float32) + b5_ref[...]
    o_ref[...] = out.astype(o_ref.dtype)                             # f32 (tm, 128)


def _num_tensorcores_per_chip():
    """2 TensorCores per chip on v7x; 1 on v5e/v6e. Defaults to 1 on failure."""
    try:
        kind = jax.devices()[0].device_kind.lower()
    except Exception:
        return 1
    return 2 if "v7" in kind else 1


def _pick_batch_tile(B, requested, num_cores):
    """Batch-tile heuristic per TPU generation.

    * B <= 64: pad only to the bf16 sublane multiple (16) - latency-bound,
      don't stream mostly-zero rows through the MXU.
    * single-TC chips (v5e/v6e): one large 128-aligned tile (default 512);
      never split just to create grid steps (per-step overhead ~0.35us).
    * v7x (2 TCs): split into an EVEN number of >=256-row steps only when
      B_pad >= 512, so both cores get equal work via dimension_semantics.
    """
    if B <= 64:
        return _round_up(max(B, 1), SUBLANE_BF16)
    requested = max(LANE, _round_up(requested, LANE))
    b128 = _round_up(B, LANE)
    if num_cores >= 2 and b128 >= 4 * LANE:
        steps = 2 * _cdiv(b128, 2 * requested)      # even grid length
        return max(2 * LANE, _round_up(_cdiv(b128, steps), LANE))
    return min(requested, b128)


def prepare_params(params):
    """One-time prep: zero-pad to lane-dense shapes; weights -> bf16, biases f32.

    Call once at init / whenever the parameters change and reuse the result
    for every forward call (re-padding/re-casting per call is pure overhead).
    """
    padded = []
    for li, (w, b) in enumerate(params):
        fi, fo = w.shape
        fi_p, fo_p = PADDED_SIZES[li], PADDED_SIZES[li + 1]
        w_p = jnp.pad(w.astype(jnp.bfloat16), ((0, fi_p - fi), (0, fo_p - fo)))
        b_p = jnp.pad(jnp.asarray(b, jnp.float32).reshape(1, -1),
                      ((0, 0), (0, fo_p - fo)))
        padded.append((w_p, b_p))
    return padded


def deep_neural_network_forward(x_nchw, prepared_params, *,
                                batch_tile=512, num_cores=None):
    """Forward pass matching DeepNeuralNetwork.forward.

    x_nchw:          (B, C, H, W) with C*H*W == 784 (e.g. (B, 1, 28, 28)).
    prepared_params: output of prepare_params(params).
    Returns: (B, 10) float32 logits.
    """
    B = x_nchw.shape[0]
    x_flat = x_nchw.reshape(B, -1)                                   # nn.Flatten()
    assert x_flat.shape[1] == LAYER_SIZES[0], "flattened feature dim must be 784"

    if num_cores is None:
        num_cores = _num_tensorcores_per_chip()
    tm = _pick_batch_tile(B, batch_tile, num_cores)
    B_pad = _round_up(B, tm)
    grid = (B_pad // tm,)

    # Single bf16 pad (cast first): batch -> tile multiple, features 784 -> 896.
    x_pad = jnp.pad(x_flat.astype(jnp.bfloat16),
                    ((0, B_pad - B), (0, PADDED_IN - LAYER_SIZES[0])))

    in_specs = [pl.BlockSpec((tm, PADDED_IN), lambda i: (i, 0))]
    flat_params = []
    for (w, b) in prepared_params:
        # Grid-invariant operands (constant index_map): fetched once, kept
        # VMEM-resident by the pipeline. Default buffering per perf review.
        in_specs.append(pl.BlockSpec(w.shape, lambda i: (0, 0)))
        in_specs.append(pl.BlockSpec(b.shape, lambda i: (0, 0)))
        flat_params.extend([w, b])

    out_spec = pl.BlockSpec((tm, PADDED_OUT), lambda i: (i, 0))

    flops = 2 * B_pad * sum(fi * fo for fi, fo in
                            zip(PADDED_SIZES[:-1], PADDED_SIZES[1:]))
    bytes_accessed = (
        x_pad.size * x_pad.dtype.itemsize
        + sum(a.size * a.dtype.itemsize for a in flat_params)
        + B_pad * PADDED_OUT * 4)

    fn = pl.pallas_call(
        _mlp_kernel,
        out_shape=jax.ShapeDtypeStruct((B_pad, PADDED_OUT), jnp.float32),
        grid_spec=pltpu.PrefetchScalarGridSpec(
            num_scalar_prefetch=0,
            grid=grid,
            in_specs=in_specs,
            out_specs=out_spec,
        ),
        compiler_params=pltpu.CompilerParams(
            dimension_semantics=("parallel",),
            # Raise scoped VMEM (v5e default is 16 MiB) so large batch tiles
            # (up to ~1024 rows) fit comfortably on every generation.
            vmem_limit_bytes=32 * 1024 * 1024,
        ),
        cost_estimate=pl.CostEstimate(
            flops=flops, transcendentals=0, bytes_accessed=bytes_accessed),
    )
    out_padded = fn(x_pad, *flat_params)
    return out_padded[:B, :LAYER_SIZES[-1]]


def init_params(key):
    """Deterministic init mirroring nn.Linear (stored transposed: (in, out))."""
    params = []
    for fan_in, fan_out in zip(LAYER_SIZES[:-1], LAYER_SIZES[1:]):
        key, kw, kb = jax.random.split(key, 3)
        bound = 1.0 / jnp.sqrt(fan_in)
        w = jax.random.uniform(kw, (fan_in, fan_out), jnp.float32, -bound, bound)
        b = jax.random.uniform(kb, (1, fan_out), jnp.float32, -bound, bound)
        params.append((w, b))
    return params


def _reference_forward(x_nchw, params):
    """Pure-JAX f32 reference for correctness checking."""
    h = x_nchw.reshape(x_nchw.shape[0], -1).astype(jnp.float32)
    for i, (w, b) in enumerate(params):
        h = h @ w + b
        if i < len(params) - 1:
            h = jnp.maximum(h, 0.0)
    return h


if __name__ == "__main__":
    key = jax.random.PRNGKey(0)
    key, kx = jax.random.split(key)

    # Small MNIST-like input: NCHW (batch=8, 1, 28, 28).
    x = jax.random.normal(kx, (8, 1, 28, 28), jnp.float32)
    params = init_params(key)
    prepared = prepare_params(params)     # hoisted one-time param prep

    out = deep_neural_network_forward(x, prepared)
    out = jax.block_until_ready(out)

    ref = _reference_forward(x, params)
    assert out.shape == (8, 10)
    # bf16 weights/activations on the MXU -> loosened tolerance vs f32 reference.
    assert jnp.allclose(out, ref, atol=2e-2, rtol=2e-2), (
        f"max abs diff {jnp.max(jnp.abs(out - ref))}")

    print("KERNEL_OK")
</pallas_src>

<mosaic_0001>
module attributes {stable_mosaic.version = 11 : i64} {
  func.func @_mlp_kernel(%arg0: i32, %arg1: memref<16x896xbf16, #tpu.memory_space<vmem>>, %arg2: memref<896x256xbf16, #tpu.memory_space<vmem>>, %arg3: memref<1x256xf32, #tpu.memory_space<vmem>>, %arg4: memref<256x512xbf16, #tpu.memory_space<vmem>>, %arg5: memref<1x512xf32, #tpu.memory_space<vmem>>, %arg6: memref<512x1024xbf16, #tpu.memory_space<vmem>>, %arg7: memref<1x1024xf32, #tpu.memory_space<vmem>>, %arg8: memref<1024x256xbf16, #tpu.memory_space<vmem>>, %arg9: memref<1x256xf32, #tpu.memory_space<vmem>>, %arg10: memref<256x128xbf16, #tpu.memory_space<vmem>>, %arg11: memref<1x128xf32, #tpu.memory_space<vmem>>, %arg12: memref<16x128xf32, #tpu.memory_space<vmem>>) attributes {dimension_semantics = [#tpu.dimension_semantics<parallel>], iteration_bounds = array<i64: 1>, scalar_prefetch = 0 : i64, scratch_operands = 0 : i64, tpu.core_type = #tpu.core_type<tc>, window_params = [{transform_indices = @transform_0, window_bounds = array<i64: 16, 896>}, {pipeline_mode = #tpu.pipeline_mode<synchronous>, transform_indices = @transform_1, window_bounds = array<i64: 896, 256>}, {pipeline_mode = #tpu.pipeline_mode<synchronous>, transform_indices = @transform_2, window_bounds = array<i64: 1, 256>}, {pipeline_mode = #tpu.pipeline_mode<synchronous>, transform_indices = @transform_3, window_bounds = array<i64: 256, 512>}, {pipeline_mode = #tpu.pipeline_mode<synchronous>, transform_indices = @transform_4, window_bounds = array<i64: 1, 512>}, {pipeline_mode = #tpu.pipeline_mode<synchronous>, transform_indices = @transform_5, window_bounds = array<i64: 512, 1024>}, {pipeline_mode = #tpu.pipeline_mode<synchronous>, transform_indices = @transform_6, window_bounds = array<i64: 1, 1024>}, {pipeline_mode = #tpu.pipeline_mode<synchronous>, transform_indices = @transform_7, window_bounds = array<i64: 1024, 256>}, {pipeline_mode = #tpu.pipeline_mode<synchronous>, transform_indices = @transform_8, window_bounds = array<i64: 1, 256>}, {pipeline_mode = #tpu.pipeline_mode<synchronous>, transform_indices = @transform_9, window_bounds = array<i64: 256, 128>}, {pipeline_mode = #tpu.pipeline_mode<synchronous>, transform_indices = @transform_10, window_bounds = array<i64: 1, 128>}, {transform_indices = @transform_11, window_bounds = array<i64: 16, 128>}]} {
    %c0 = arith.constant 0 : index
    %c0_0 = arith.constant 0 : index
    %0 = vector.load %arg1[%c0, %c0_0] : memref<16x896xbf16, #tpu.memory_space<vmem>>, vector<16x896xbf16>
    %c0_1 = arith.constant 0 : index
    %c0_2 = arith.constant 0 : index
    %1 = vector.load %arg2[%c0_1, %c0_2] : memref<896x256xbf16, #tpu.memory_space<vmem>>, vector<896x256xbf16>
    %cst = arith.constant dense<0.000000e+00> : vector<16x256xf32>
    %2 = tpu.matmul %0, %1, %cst {dimension_numbers = #tpu.dot_dimension_numbers<[1], [0], [0], [1], [0, 0, 1, 1], [], []>} : vector<16x896xbf16>, vector<896x256xbf16>, vector<16x256xf32> -> vector<16x256xf32>
    %c0_3 = arith.constant 0 : index
    %c0_4 = arith.constant 0 : index
    %3 = vector.load %arg3[%c0_3, %c0_4] : memref<1x256xf32, #tpu.memory_space<vmem>>, vector<1x256xf32>
    %4 = vector.broadcast %3 : vector<1x256xf32> to vector<16x256xf32>
    %5 = arith.addf %2, %4 : vector<16x256xf32>
    %cst_5 = arith.constant 0.000000e+00 : f32
    %6 = vector.broadcast %cst_5 : f32 to vector<16x256xf32>
    %7 = arith.maximumf %5, %6 : vector<16x256xf32>
    %8 = arith.truncf %7 : vector<16x256xf32> to vector<16x256xbf16>
    %c0_6 = arith.constant 0 : index
    %c0_7 = arith.constant 0 : index
    %9 = vector.load %arg4[%c0_6, %c0_7] : memref<256x512xbf16, #tpu.memory_space<vmem>>, vector<256x512xbf16>
    %cst_8 = arith.constant dense<0.000000e+00> : vector<16x512xf32>
    %10 = tpu.matmul %8, %9, %cst_8 {dimension_numbers = #tpu.dot_dimension_numbers<[1], [0], [0], [1], [0, 0, 1, 1], [], []>} : vector<16x256xbf16>, vector<256x512xbf16>, vector<16x512xf32> -> vector<16x512xf32>
    %c0_9 = arith.constant 0 : index
    %c0_10 = arith.constant 0 : index
    %11 = vector.load %arg5[%c0_9, %c0_10] : memref<1x512xf32, #tpu.memory_space<vmem>>, vector<1x512xf32>
    %12 = vector.broadcast %11 : vector<1x512xf32> to vector<16x512xf32>
    %13 = arith.addf %10, %12 : vector<16x512xf32>
    %cst_11 = arith.constant 0.000000e+00 : f32
    %14 = vector.broadcast %cst_11 : f32 to vector<16x512xf32>
    %15 = arith.maximumf %13, %14 : vector<16x512xf32>
    %16 = arith.truncf %15 : vector<16x512xf32> to vector<16x512xbf16>
    %c0_12 = arith.constant 0 : index
    %c0_13 = arith.constant 0 : index
    %17 = vector.load %arg6[%c0_12, %c0_13] : memref<512x1024xbf16, #tpu.memory_space<vmem>>, vector<512x1024xbf16>
    %cst_14 = arith.constant dense<0.000000e+00> : vector<16x1024xf32>
    %18 = tpu.matmul %16, %17, %cst_14 {dimension_numbers = #tpu.dot_dimension_numbers<[1], [0], [0], [1], [0, 0, 1, 1], [], []>} : vector<16x512xbf16>, vector<512x1024xbf16>, vector<16x1024xf32> -> vector<16x1024xf32>
    %c0_15 = arith.constant 0 : index
    %c0_16 = arith.constant 0 : index
    %19 = vector.load %arg7[%c0_15, %c0_16] : memref<1x1024xf32, #tpu.memory_space<vmem>>, vector<1x1024xf32>
    %20 = vector.broadcast %19 : vector<1x1024xf32> to vector<16x1024xf32>
    %21 = arith.addf %18, %20 : vector<16x1024xf32>
    %cst_17 = arith.constant 0.000000e+00 : f32
    %22 = vector.broadcast %cst_17 : f32 to vector<16x1024xf32>
    %23 = arith.maximumf %21, %22 : vector<16x1024xf32>
    %24 = arith.truncf %23 : vector<16x1024xf32> to vector<16x1024xbf16>
    %c0_18 = arith.constant 0 : index
    %c0_19 = arith.constant 0 : index
    %25 = vector.load %arg8[%c0_18, %c0_19] : memref<1024x256xbf16, #tpu.memory_space<vmem>>, vector<1024x256xbf16>
    %cst_20 = arith.constant dense<0.000000e+00> : vector<16x256xf32>
    %26 = tpu.matmul %24, %25, %cst_20 {dimension_numbers = #tpu.dot_dimension_numbers<[1], [0], [0], [1], [0, 0, 1, 1], [], []>} : vector<16x1024xbf16>, vector<1024x256xbf16>, vector<16x256xf32> -> vector<16x256xf32>
    %c0_21 = arith.constant 0 : index
    %c0_22 = arith.constant 0 : index
    %27 = vector.load %arg9[%c0_21, %c0_22] : memref<1x256xf32, #tpu.memory_space<vmem>>, vector<1x256xf32>
    %28 = vector.broadcast %27 : vector<1x256xf32> to vector<16x256xf32>
    %29 = arith.addf %26, %28 : vector<16x256xf32>
    %cst_23 = arith.constant 0.000000e+00 : f32
    %30 = vector.broadcast %cst_23 : f32 to vector<16x256xf32>
    %31 = arith.maximumf %29, %30 : vector<16x256xf32>
    %32 = arith.truncf %31 : vector<16x256xf32> to vector<16x256xbf16>
    %c0_24 = arith.constant 0 : index
    %c0_25 = arith.constant 0 : index
    %33 = vector.load %arg10[%c0_24, %c0_25] : memref<256x128xbf16, #tpu.memory_space<vmem>>, vector<256x128xbf16>
    %cst_26 = arith.constant dense<0.000000e+00> : vector<16x128xf32>
    %34 = tpu.matmul %32, %33, %cst_26 {dimension_numbers = #tpu.dot_dimension_numbers<[1], [0], [0], [1], [0, 0, 1, 1], [], []>} : vector<16x256xbf16>, vector<256x128xbf16>, vector<16x128xf32> -> vector<16x128xf32>
    %c0_27 = arith.constant 0 : index
    %c0_28 = arith.constant 0 : index
    %35 = vector.load %arg11[%c0_27, %c0_28] : memref<1x128xf32, #tpu.memory_space<vmem>>, vector<1x128xf32>
    %36 = vector.broadcast %35 : vector<1x128xf32> to vector<16x128xf32>
    %37 = arith.addf %34, %36 : vector<16x128xf32>
    %c0_29 = arith.constant 0 : index
    %c0_30 = arith.constant 0 : index
    %38 = vector.load %arg12[%c0_29, %c0_30] : memref<16x128xf32, #tpu.memory_space<vmem>>, vector<16x128xf32>
    tpu.vector_store %arg12[%c0_29, %c0_30], %37 {strides = array<i32>} : memref<16x128xf32, #tpu.memory_space<vmem>>, vector<16x128xf32>,
    return
  }
  func.func @transform_0(%arg0: i32) -> (i32, i32) {
    %c0_i32 = arith.constant 0 : i32
    %c0_i32_0 = arith.constant 0 : i32
    return %arg0, %c0_i32 : i32, i32
  }
  func.func @transform_1(%arg0: i32) -> (i32, i32) {
    %c0_i32 = arith.constant 0 : i32
    %c0_i32_0 = arith.constant 0 : i32
    %c0_i32_1 = arith.constant 0 : i32
    return %c0_i32, %c0_i32_0 : i32, i32
  }
  func.func @transform_2(%arg0: i32) -> (i32, i32) {
    %c0_i32 = arith.constant 0 : i32
    %c0_i32_0 = arith.constant 0 : i32
    %c0_i32_1 = arith.constant 0 : i32
    return %c0_i32, %c0_i32_0 : i32, i32
  }
  func.func @transform_3(%arg0: i32) -> (i32, i32) {
    %c0_i32 = arith.constant 0 : i32
    %c0_i32_0 = arith.constant 0 : i32
    %c0_i32_1 = arith.constant 0 : i32
    return %c0_i32, %c0_i32_0 : i32, i32
  }
  func.func @transform_4(%arg0: i32) -> (i32, i32) {
    %c0_i32 = arith.constant 0 : i32
    %c0_i32_0 = arith.constant 0 : i32
    %c0_i32_1 = arith.constant 0 : i32
    return %c0_i32, %c0_i32_0 : i32, i32
  }
  func.func @transform_5(%arg0: i32) -> (i32, i32) {
    %c0_i32 = arith.constant 0 : i32
    %c0_i32_0 = arith.constant 0 : i32
    %c0_i32_1 = arith.constant 0 : i32
    return %c0_i32, %c0_i32_0 : i32, i32
  }
  func.func @transform_6(%arg0: i32) -> (i32, i32) {
    %c0_i32 = arith.constant 0 : i32
    %c0_i32_0 = arith.constant 0 : i32
    %c0_i32_1 = arith.constant 0 : i32
    return %c0_i32, %c0_i32_0 : i32, i32
  }
  func.func @transform_7(%arg0: i32) -> (i32, i32) {
    %c0_i32 = arith.constant 0 : i32
    %c0_i32_0 = arith.constant 0 : i32
    %c0_i32_1 = arith.constant 0 : i32
    return %c0_i32, %c0_i32_0 : i32, i32
  }
  func.func @transform_8(%arg0: i32) -> (i32, i32) {
    %c0_i32 = arith.constant 0 : i32
    %c0_i32_0 = arith.constant 0 : i32
    %c0_i32_1 = arith.constant 0 : i32
    return %c0_i32, %c0_i32_0 : i32, i32
  }
  func.func @transform_9(%arg0: i32) -> (i32, i32) {
    %c0_i32 = arith.constant 0 : i32
    %c0_i32_0 = arith.constant 0 : i32
    %c0_i32_1 = arith.constant 0 : i32
    return %c0_i32, %c0_i32_0 : i32, i32
  }
  func.func @transform_10(%arg0: i32) -> (i32, i32) {
    %c0_i32 = arith.constant 0 : i32
    %c0_i32_0 = arith.constant 0 : i32
    %c0_i32_1 = arith.constant 0 : i32
    return %c0_i32, %c0_i32_0 : i32, i32
  }
  func.func @transform_11(%arg0: i32) -> (i32, i32) {
    %c0_i32 = arith.constant 0 : i32
    %c0_i32_0 = arith.constant 0 : i32
    return %arg0, %c0_i32 : i32, i32
  }
}

</mosaic_0001>

<llo_original>
// kernel: tpu_custom_call.1
$region0: #{tpu_custom_call.1}
  #allocation0 [shape = 'u32[]', space=smem, size = 0x4, offset = 0x4, fixed_abs, tag = 'smem constant byte address 0x4 - core index']
  #allocation1 [shape = 'u32[144,128]{1,0:T(1,128)}', space=vmem, size = 0x12000, scoped, tag = 'internal scratch']
  %s0 = inlined_call_operand.hbm [shape: bf16[16,896], index: 0, kind: input, shape index: {}]
  %s1 = inlined_call_operand.hbm [shape: bf16[896,256], index: 1, kind: input, shape index: {}]
  %s2 = inlined_call_operand.vmem [shape: f32[1,256], index: 2, kind: input, shape index: {}]
  %s3 = inlined_call_operand.hbm [shape: bf16[256,512], index: 3, kind: input, shape index: {}]
  %s4 = inlined_call_operand.hbm [shape: f32[1,512], index: 4, kind: input, shape index: {}]
  %s5 = inlined_call_operand.hbm [shape: bf16[512,1024], index: 5, kind: input, shape index: {}]
  %s6 = inlined_call_operand.vmem [shape: f32[1,1024], index: 6, kind: input, shape index: {}]
  %s7 = inlined_call_operand.hbm [shape: bf16[1024,256], index: 7, kind: input, shape index: {}]
  %s8 = inlined_call_operand.vmem [shape: f32[1,256], index: 8, kind: input, shape index: {}]
  %s9 = inlined_call_operand.hbm [shape: bf16[256,128], index: 9, kind: input, shape index: {}]
  %s10 = inlined_call_operand.vmem [shape: f32[1,128], index: 10, kind: input, shape index: {}]
  %s11 = inlined_call_operand.hbm [shape: f32[16,128], index: 11, kind: output, shape index: {}]
  %s12 = sld [smem:[#allocation0]]
  $region82: #{tpu_custom_call.1} parent=0
    _
  %s14 = ssub.s32 1, %s12
  %s15 = scalar_select 0, %s14, %s12
  $region1: #{tpu_custom_call.1} parent=0
    #allocation2 [shape = 'u8[28672]{0}', space=vmem, size = 0x7000, scoped, tag = 'input window, operand 0, single buffered']
    #allocation3 [shape = 's32[1]{0}', space=sflag, size = 0x4, scoped, tag = 'scoped memory for tpu_custom_call.1']
    #allocation4 [shape = 's32[1]{0}', space=sflag, size = 0x4, scoped, tag = 'scoped memory for tpu_custom_call.1']
    #allocation5 [shape = 'u8[458752]{0}', space=vmem, size = 0x70000, scoped, tag = 'input window, operand 1, single buffered']
    #allocation6 [shape = 's32[1]{0}', space=sflag, size = 0x4, scoped, tag = 'scoped memory for tpu_custom_call.1']
    #allocation7 [shape = 'u8[262144]{0}', space=vmem, size = 0x40000, scoped, tag = 'input window, operand 3, single buffered']
    #allocation8 [shape = 'u8[2048]{0}', space=vmem, size = 0x800, scoped, tag = 'input window, operand 4, single buffered']
    #allocation9 [shape = 's32[1]{0}', space=sflag, size = 0x4, scoped, tag = 'scoped memory for tpu_custom_call.1']
    #allocation10 [shape = 'u8[1048576]{0}', space=vmem, size = 0x100000, scoped, tag = 'input window, operand 5, single buffered']
    #allocation11 [shape = 'u8[524288]{0}', space=vmem, size = 0x80000, scoped, tag = 'input window, operand 7, single buffered']
    #allocation12 [shape = 's32[1]{0}', space=sflag, size = 0x4, scoped, tag = 'scoped memory for tpu_custom_call.1']
    #allocation13 [shape = 'u8[65536]{0}', space=vmem, size = 0x10000, scoped, tag = 'input window, operand 9, single buffered']
    #allocation14 [shape = 'u8[8192]{0}', space=vmem, size = 0x2000, scoped, tag = 'output window, operand 0, single buffered']
    %16 = vsyncpa [#allocation3], 0
    %17 = vsyncpa [#allocation6], 0
    %18 = vsyncpa [#allocation9], 0
    %19 = vsyncpa [#allocation12], 0
    %20 = vsyncpa [#allocation4], 0
    // Predicated region
    $region2: #{tpu_custom_call.1} parent=1 // pred_check
      _
    $region3: #{tpu_custom_call.1} parent=1 // pred_check_branch
      %22 = sbr.rel (0) target = $region5
    $region4: #{tpu_custom_call.1} parent=1 // pred_region
      %s24 = ssub.s32 896, 896
      %25 = vsyncadd [#allocation3], %s24
      %s26 = sshll.u32 [#allocation2], 4
      %s27 = int_to_ptr.vmem [resolvable:$true] %s26
      %32 = dma.hbm_to_vmem [thread:$0]  %s0, 896, %s27, [#allocation3], 448, 448, 28
    $region5: #{tpu_custom_call.1} parent=1 // pred_fallthru
      _
    // Predicated region
    $region6: #{tpu_custom_call.1} parent=1 // pred_check
      _
    $region7: #{tpu_custom_call.1} parent=1 // pred_check_branch
      %34 = sbr.rel (0) target = $region9
    $region8: #{tpu_custom_call.1} parent=1 // pred_region
      %s36 = ssub.s32 14336, 14336
      %37 = vsyncadd [#allocation6], %s36
      %s38 = sshll.u32 [#allocation5], 4
      %s39 = int_to_ptr.vmem [resolvable:$true] %s38
      %44 = dma.hbm_to_vmem [thread:$0]  %s1, 14336, %s39, [#allocation6], 128, 128, 8
    $region9: #{tpu_custom_call.1} parent=1 // pred_fallthru
      _
    // Predicated region
    $region10: #{tpu_custom_call.1} parent=1 // pred_check
      _
    $region11: #{tpu_custom_call.1} parent=1 // pred_check_branch
      %46 = sbr.rel (0) target = $region13
    $region12: #{tpu_custom_call.1} parent=1 // pred_region
      _
    $region13: #{tpu_custom_call.1} parent=1 // pred_fallthru
      _
    // Predicated region
    $region14: #{tpu_custom_call.1} parent=1 // pred_check
      _
    $region15: #{tpu_custom_call.1} parent=1 // pred_check_branch
      %48 = sbr.rel (0) target = $region17
    $region16: #{tpu_custom_call.1} parent=1 // pred_region
      %s50 = ssub.s32 8192, 8192
      %51 = vsyncadd [#allocation6], %s50
      %s52 = sshll.u32 [#allocation7], 4
      %s53 = int_to_ptr.vmem [resolvable:$true] %s52
      %58 = dma.hbm_to_vmem [thread:$0]  %s3, 8192, %s53, [#allocation6], 256, 256, 16
    $region17: #{tpu_custom_call.1} parent=1 // pred_fallthru
      _
    // Predicated region
    $region18: #{tpu_custom_call.1} parent=1 // pred_check
      _
    $region19: #{tpu_custom_call.1} parent=1 // pred_check_branch
      %60 = sbr.rel (0) target = $region21
    $region20: #{tpu_custom_call.1} parent=1 // pred_region
      %s62 = ssub.s32 64, 64
      %63 = vsyncadd [#allocation9], %s62
      %s65 = sshll.u32 [#allocation8], 4
      %s66 = int_to_ptr.vmem [resolvable:$true] %s65
      %68 = dma.hbm_to_vmem [thread:$0]  %s4, 64, %s66, [#allocation9]
    $region21: #{tpu_custom_call.1} parent=1 // pred_fallthru
      _
    // Predicated region
    $region22: #{tpu_custom_call.1} parent=1 // pred_check
      _
    $region23: #{tpu_custom_call.1} parent=1 // pred_check_branch
      %70 = sbr.rel (0) target = $region25
    $region24: #{tpu_custom_call.1} parent=1 // pred_region
      %s72 = ssub.s32 32768, 32768
      %73 = vsyncadd [#allocation9], %s72
      %s74 = sshll.u32 [#allocation10], 4
      %s75 = int_to_ptr.vmem [resolvable:$true] %s74
      %80 = dma.hbm_to_vmem [thread:$0]  %s5, 32768, %s75, [#allocation9], 512, 512, 32
    $region25: #{tpu_custom_call.1} parent=1 // pred_fallthru
      _
    // Predicated region
    $region26: #{tpu_custom_call.1} parent=1 // pred_check
      _
    $region27: #{tpu_custom_call.1} parent=1 // pred_check_branch
      %82 = sbr.rel (0) target = $region29
    $region28: #{tpu_custom_call.1} parent=1 // pred_region
      _
    $region29: #{tpu_custom_call.1} parent=1 // pred_fallthru
      _
    // Predicated region
    $region30: #{tpu_custom_call.1} parent=1 // pred_check
      _
    $region31: #{tpu_custom_call.1} parent=1 // pred_check_branch
      %84 = sbr.rel (0) target = $region33
    $region32: #{tpu_custom_call.1} parent=1 // pred_region
      %s86 = ssub.s32 16384, 16384
      %87 = vsyncadd [#allocation12], %s86
      %s88 = sshll.u32 [#allocation11], 4
      %s89 = int_to_ptr.vmem [resolvable:$true] %s88
      %94 = dma.hbm_to_vmem [thread:$0]  %s7, 16384, %s89, [#allocation12], 128, 128, 8
    $region33: #{tpu_custom_call.1} parent=1 // pred_fallthru
      _
    // Predicated region
    $region34: #{tpu_custom_call.1} parent=1 // pred_check
      _
    $region35: #{tpu_custom_call.1} parent=1 // pred_check_branch
      %96 = sbr.rel (0) target = $region37
    $region36: #{tpu_custom_call.1} parent=1 // pred_region
      _
    $region37: #{tpu_custom_call.1} parent=1 // pred_fallthru
      _
    // Predicated region
    $region38: #{tpu_custom_call.1} parent=1 // pred_check
      _
    $region39: #{tpu_custom_call.1} parent=1 // pred_check_branch
      %98 = sbr.rel (0) target = $region41
    $region40: #{tpu_custom_call.1} parent=1 // pred_region
      %s100 = ssub.s32 2048, 2048
      %101 = vsyncadd [#allocation12], %s100
      %s102 = sshll.u32 [#allocation13], 4
      %s103 = int_to_ptr.vmem [resolvable:$true] %s102
      %108 = dma.hbm_to_vmem [thread:$0]  %s9, 2048, %s103, [#allocation12], 64, 64, 4
    $region41: #{tpu_custom_call.1} parent=1 // pred_fallthru
      _
    // Predicated region
    $region42: #{tpu_custom_call.1} parent=1 // pred_check
      _
    $region43: #{tpu_custom_call.1} parent=1 // pred_check_branch
      %110 = sbr.rel (0) target = $region45
    $region44: #{tpu_custom_call.1} parent=1 // pred_region
      _
    $region45: #{tpu_custom_call.1} parent=1 // pred_fallthru
      _
    // Predicated region
    $region46: #{tpu_custom_call.1} parent=1 // pred_check
      _
    $region47: #{tpu_custom_call.1} parent=1 // pred_check_branch
      %112 = sbr.rel (0) target = $region49
    $region48: #{tpu_custom_call.1} parent=1 // pred_region
      %113 = dma.done [#allocation3], 896
    $region49: #{tpu_custom_call.1} parent=1 // pred_fallthru
      _
    // Predicated region
    $region50: #{tpu_custom_call.1} parent=1 // pred_check
      _
    $region51: #{tpu_custom_call.1} parent=1 // pred_check_branch
      %115 = sbr.rel (0) target = $region53
    $region52: #{tpu_custom_call.1} parent=1 // pred_region
      %116 = dma.done [#allocation6], 14336
    $region53: #{tpu_custom_call.1} parent=1 // pred_fallthru
      _
    // Predicated region
    $region54: #{tpu_custom_call.1} parent=1 // pred_check
      _
    $region55: #{tpu_custom_call.1} parent=1 // pred_check_branch
      %118 = sbr.rel (0) target = $region57
    $region56: #{tpu_custom_call.1} parent=1 // pred_region
      %119 = dma.done [#allocation6], 8192
    $region57: #{tpu_custom_call.1} parent=1 // pred_fallthru
      _
    // Predicated region
    $region58: #{tpu_custom_call.1} parent=1 // pred_check
      _
    $region59: #{tpu_custom_call.1} parent=1 // pred_check_branch
      %121 = sbr.rel (0) target = $region61
    $region60: #{tpu_custom_call.1} parent=1 // pred_region
      %122 = dma.done [#allocation9], 64
    $region61: #{tpu_custom_call.1} parent=1 // pred_fallthru
      _
    // Predicated region
    $region62: #{tpu_custom_call.1} parent=1 // pred_check
      _
    $region63: #{tpu_custom_call.1} parent=1 // pred_check_branch
      %124 = sbr.rel (0) target = $region65
    $region64: #{tpu_custom_call.1} parent=1 // pred_region
      %125 = dma.done [#allocation9], 32768
    $region65: #{tpu_custom_call.1} parent=1 // pred_fallthru
      _
    // Predicated region
    $region66: #{tpu_custom_call.1} parent=1 // pred_check
      _
    $region67: #{tpu_custom_call.1} parent=1 // pred_check_branch
      %127 = sbr.rel (0) target = $region69
    $region68: #{tpu_custom_call.1} parent=1 // pred_region
      %128 = dma.done [#allocation12], 16384
    $region69: #{tpu_custom_call.1} parent=1 // pred_fallthru
      _
    // Predicated region
    $region70: #{tpu_custom_call.1} parent=1 // pred_check
      _
    $region71: #{tpu_custom_call.1} parent=1 // pred_check_branch
      %130 = sbr.rel (0) target = $region73
    $region72: #{tpu_custom_call.1} parent=1 // pred_region
      %131 = dma.done [#allocation12], 2048
    $region73: #{tpu_custom_call.1} parent=1 // pred_fallthru
      _
    %v133 = vld [vmem:[#allocation2] sm:$0xff]
    %v134 = vld [vmem:[#allocation2 + $0x8] sm:$0xff]
    %v135 = vld [vmem:[#allocation2 + $0x10] sm:$0xff]
    %v136 = vld [vmem:[#allocation2 + $0x18] sm:$0xf]
    %v137 = vld [vmem:[#allocation2 + $0x1c] sm:$0xff]
    %v138 = vld [vmem:[#allocation2 + $0x24] sm:$0xff]
    %v139 = vld [vmem:[#allocation2 + $0x2c] sm:$0xff]
    %v140 = vld [vmem:[#allocation2 + $0x34] sm:$0xf]
    %v141 = vld [vmem:[#allocation5] sm:$0xff]
    %v142 = vld [vmem:[#allocation5 + $0x8] sm:$0xff]
    %v143 = vld [vmem:[#allocation5 + $0x10] sm:$0xff]
    %v144 = vld [vmem:[#allocation5 + $0x18] sm:$0xff]
    %v145 = vld [vmem:[#allocation5 + $0x20] sm:$0xff]
    %v146 = vld [vmem:[#allocation5 + $0x28] sm:$0xff]
    %v147 = vld [vmem:[#allocation5 + $0x30] sm:$0xff]
    %v148 = vld [vmem:[#allocation5 + $0x38] sm:$0xff]
    %v149 = vld [vmem:[#allocation5 + $0x40] sm:$0xff]
    %v150 = vld [vmem:[#allocation5 + $0x48] sm:$0xff]
    %v151 = vld [vmem:[#allocation5 + $0x50] sm:$0xff]
    %v152 = vld [vmem:[#allocation5 + $0x58] sm:$0xff]
    %v153 = vld [vmem:[#allocation5 + $0x60] sm:$0xff]
    %v154 = vld [vmem:[#allocation5 + $0x68] sm:$0xff]
    %v155 = vld [vmem:[#allocation5 + $0x70] sm:$0xff]
    %v156 = vld [vmem:[#allocation5 + $0x78] sm:$0xff]
    %v157 = vld [vmem:[#allocation5 + $0x80] sm:$0xff]
    %v158 = vld [vmem:[#allocation5 + $0x88] sm:$0xff]
    %v159 = vld [vmem:[#allocation5 + $0x90] sm:$0xff]
    %v160 = vld [vmem:[#allocation5 + $0x98] sm:$0xff]
    %v161 = vld [vmem:[#allocation5 + $0xa0] sm:$0xff]
    %v162 = vld [vmem:[#allocation5 + $0xa8] sm:$0xff]
    %v163 = vld [vmem:[#allocation5 + $0xb0] sm:$0xff]
    %v164 = vld [vmem:[#allocation5 + $0xb8] sm:$0xff]
    %v165 = vld [vmem:[#allocation5 + $0xc0] sm:$0xff]
    %v166 = vld [vmem:[#allocation5 + $0xc8] sm:$0xff]
    %v167 = vld [vmem:[#allocation5 + $0xd0] sm:$0xff]
    %v168 = vld [vmem:[#allocation5 + $0xd8] sm:$0xff]
    %v169 = vld [vmem:[#allocation5 + $0xe0] sm:$0xff]
    %v170 = vld [vmem:[#allocation5 + $0xe8] sm:$0xff]
    %v171 = vld [vmem:[#allocation5 + $0xf0] sm:$0xff]
    %v172 = vld [vmem:[#allocation5 + $0xf8] sm:$0xff]
    %v173 = vld [vmem:[#allocation5 + $0x100] sm:$0xff]
    %v174 = vld [vmem:[#allocation5 + $0x108] sm:$0xff]
    %v175 = vld [vmem:[#allocation5 + $0x110] sm:$0xff]
    %v176 = vld [vmem:[#allocation5 + $0x118] sm:$0xff]
    %v177 = vld [vmem:[#allocation5 + $0x120] sm:$0xff]
    %v178 = vld [vmem:[#allocation5 + $0x128] sm:$0xff]
    %v179 = vld [vmem:[#allocation5 + $0x130] sm:$0xff]
    %v180 = vld [vmem:[#allocation5 + $0x138] sm:$0xff]
    %v181 = vld [vmem:[#allocation5 + $0x140] sm:$0xff]
    %v182 = vld [vmem:[#allocation5 + $0x148] sm:$0xff]
    %v183 = vld [vmem:[#allocation5 + $0x150] sm:$0xff]
    %v184 = vld [vmem:[#allocation5 + $0x158] sm:$0xff]
    %v185 = vld [vmem:[#allocation5 + $0x160] sm:$0xff]
    %v186 = vld [vmem:[#allocation5 + $0x168] sm:$0xff]
    %v187 = vld [vmem:[#allocation5 + $0x170] sm:$0xff]
    %v188 = vld [vmem:[#allocation5 + $0x178] sm:$0xff]
    %v189 = vld [vmem:[#allocation5 + $0x180] sm:$0xff]
    %v190 = vld [vmem:[#allocation5 + $0x188] sm:$0xff]
    %v191 = vld [vmem:[#allocation5 + $0x190] sm:$0xff]
    %v192 = vld [vmem:[#allocation5 + $0x198] sm:$0xff]
    %v193 = vld [vmem:[#allocation5 + $0x1a0] sm:$0xff]
    %v194 = vld [vmem:[#allocation5 + $0x1a8] sm:$0xff]
    %v195 = vld [vmem:[#allocation5 + $0x1b0] sm:$0xff]
    %v196 = vld [vmem:[#allocation5 + $0x1b8] sm:$0xff]
    %v197 = vld [vmem:[#allocation5 + $0x1c0] sm:$0xff]
    %v198 = vld [vmem:[#allocation5 + $0x1c8] sm:$0xff]
    %v199 = vld [vmem:[#allocation5 + $0x1d0] sm:$0xff]
    %v200 = vld [vmem:[#allocation5 + $0x1d8] sm:$0xff]
    %v201 = vld [vmem:[#allocation5 + $0x1e0] sm:$0xff]
    %v202 = vld [vmem:[#allocation5 + $0x1e8] sm:$0xff]
    %v203 = vld [vmem:[#allocation5 + $0x1f0] sm:$0xff]
    %v204 = vld [vmem:[#allocation5 + $0x1f8] sm:$0xff]
    %v205 = vld [vmem:[#allocation5 + $0x200] sm:$0xff]
    %v206 = vld [vmem:[#allocation5 + $0x208] sm:$0xff]
    %v207 = vld [vmem:[#allocation5 + $0x210] sm:$0xff]
    %v208 = vld [vmem:[#allocation5 + $0x218] sm:$0xff]
    %v209 = vld [vmem:[#allocation5 + $0x220] sm:$0xff]
    %v210 = vld [vmem:[#allocation5 + $0x228] sm:$0xff]
    %v211 = vld [vmem:[#allocation5 + $0x230] sm:$0xff]
    %v212 = vld [vmem:[#allocation5 + $0x238] sm:$0xff]
    %v213 = vld [vmem:[#allocation5 + $0x240] sm:$0xff]
    %v214 = vld [vmem:[#allocation5 + $0x248] sm:$0xff]
    %v215 = vld [vmem:[#allocation5 + $0x250] sm:$0xff]
    %v216 = vld [vmem:[#allocation5 + $0x258] sm:$0xff]
    %v217 = vld [vmem:[#allocation5 + $0x260] sm:$0xff]
    %v218 = vld [vmem:[#allocation5 + $0x268] sm:$0xff]
    %v219 = vld [vmem:[#allocation5 + $0x270] sm:$0xff]
    %v220 = vld [vmem:[#allocation5 + $0x278] sm:$0xff]
    %v221 = vld [vmem:[#allocation5 + $0x280] sm:$0xff]
    %v222 = vld [vmem:[#allocation5 + $0x288] sm:$0xff]
    %v223 = vld [vmem:[#allocation5 + $0x290] sm:$0xff]
    %v224 = vld [vmem:[#allocation5 + $0x298] sm:$0xff]
    %v225 = vld [vmem:[#allocation5 + $0x2a0] sm:$0xff]
    %v226 = vld [vmem:[#allocation5 + $0x2a8] sm:$0xff]
    %v227 = vld [vmem:[#allocation5 + $0x2b0] sm:$0xff]
    %v228 = vld [vmem:[#allocation5 + $0x2b8] sm:$0xff]
    %v229 = vld [vmem:[#allocation5 + $0x2c0] sm:$0xff]
    %v230 = vld [vmem:[#allocation5 + $0x2c8] sm:$0xff]
    %v231 = vld [vmem:[#allocation5 + $0x2d0] sm:$0xff]
    %v232 = vld [vmem:[#allocation5 + $0x2d8] sm:$0xff]
    %v233 = vld [vmem:[#allocation5 + $0x2e0] sm:$0xff]
    %v234 = vld [vmem:[#allocation5 + $0x2e8] sm:$0xff]
    %v235 = vld [vmem:[#allocation5 + $0x2f0] sm:$0xff]
    %v236 = vld [vmem:[#allocation5 + $0x2f8] sm:$0xff]
    %v237 = vld [vmem:[#allocation5 + $0x300] sm:$0xff]
    %v238 = vld [vmem:[#allocation5 + $0x308] sm:$0xff]
    %v239 = vld [vmem:[#allocation5 + $0x310] sm:$0xff]
    %v240 = vld [vmem:[#allocation5 + $0x318] sm:$0xff]
    %v241 = vld [vmem:[#allocation5 + $0x320] sm:$0xff]
    %v242 = vld [vmem:[#allocation5 + $0x328] sm:$0xff]
    %v243 = vld [vmem:[#allocation5 + $0x330] sm:$0xff]
    %v244 = vld [vmem:[#allocation5 + $0x338] sm:$0xff]
    %v245 = vld [vmem:[#allocation5 + $0x340] sm:$0xff]
    %v246 = vld [vmem:[#allocation5 + $0x348] sm:$0xff]
    %v247 = vld [vmem:[#allocation5 + $0x350] sm:$0xff]
    %v248 = vld [vmem:[#allocation5 + $0x358] sm:$0xff]
    %v249 = vld [vmem:[#allocation5 + $0x360] sm:$0xff]
    %v250 = vld [vmem:[#allocation5 + $0x368] sm:$0xff]
    %v251 = vld [vmem:[#allocation5 + $0x370] sm:$0xff]
    %v252 = vld [vmem:[#allocation5 + $0x378] sm:$0xff]
    %v253 = vld [vmem:[%s2] sm:$0x3]
    %v255 = vlaneseq
    %v256 = vshrl.u32 %v255, 7
    %v257 = vsub.s32 0, %v256
    %v258 = vrot.slane %v253, %v257
    %v259 = vlaneseq
    %v260 = vshrl.u32 %v259, 7
    %v261 = vsub.s32 1, %v260
    %v262 = vrot.slane %v253, %v261
    %v273 = vunpack.c.l.b16 %v133
    %v274 = vunpack.c.h.b16 %v133
    %v275 = vunpack.c.l.b16 %v134
    %v276 = vunpack.c.h.b16 %v134
    %v277 = vunpack.c.l.b16 %v135
    %v278 = vunpack.c.h.b16 %v135
    %v279 = vunpack.c.l.b16 %v136
    %v280 = vunpack.c.l.b16 %v137
    %v281 = vunpack.c.h.b16 %v137
    %v282 = vunpack.c.l.b16 %v138
    %v283 = vunpack.c.h.b16 %v138
    %v284 = vunpack.c.l.b16 %v139
    %v285 = vunpack.c.h.b16 %v139
    %v286 = vunpack.c.l.b16 %v140
    %v287 = vpack.c.b16 %v280, %v273
    %v288 = vpack.c.b16 %v281, %v274
    %v289 = vpack.c.b16 %v282, %v275
    %v290 = vpack.c.b16 %v283, %v276
    %v291 = vpack.c.b16 %v284, %v277
    %v292 = vpack.c.b16 %v285, %v278
    %v293 = vpack.c.b16 %v286, %v279
    %v413 = vunpack.c.l.b16 %v141
    %v414 = vunpack.c.h.b16 %v141
    %v415 = vunpack.c.l.b16 %v142
    %v416 = vunpack.c.h.b16 %v142
    %v417 = vunpack.c.l.b16 %v143
    %v418 = vunpack.c.h.b16 %v143
    %v419 = vunpack.c.l.b16 %v144
    %v420 = vunpack.c.h.b16 %v144
    %v421 = vunpack.c.l.b16 %v145
    %v422 = vunpack.c.h.b16 %v145
    %v423 = vunpack.c.l.b16 %v146
    %v424 = vunpack.c.h.b16 %v146
    %v425 = vunpack.c.l.b16 %v147
    %v426 = vunpack.c.h.b16 %v147
    %v427 = vunpack.c.l.b16 %v148
    %v428 = vunpack.c.h.b16 %v148
    %v429 = vunpack.c.l.b16 %v149
    %v430 = vunpack.c.h.b16 %v149
    %v431 = vunpack.c.l.b16 %v150
    %v432 = vunpack.c.h.b16 %v150
    %v433 = vunpack.c.l.b16 %v151
    %v434 = vunpack.c.h.b16 %v151
    %v435 = vunpack.c.l.b16 %v152
    %v436 = vunpack.c.h.b16 %v152
    %v437 = vunpack.c.l.b16 %v153
    %v438 = vunpack.c.h.b16 %v153
    %v439 = vunpack.c.l.b16 %v154
    %v440 = vunpack.c.h.b16 %v154
    %v441 = vunpack.c.l.b16 %v155
    %v442 = vunpack.c.h.b16 %v155
    %v443 = vunpack.c.l.b16 %v156
    %v444 = vunpack.c.h.b16 %v156
    %v445 = vunpack.c.l.b16 %v157
    %v446 = vunpack.c.h.b16 %v157
    %v447 = vunpack.c.l.b16 %v158
    %v448 = vunpack.c.h.b16 %v158
    %v449 = vunpack.c.l.b16 %v159
    %v450 = vunpack.c.h.b16 %v159
    %v451 = vunpack.c.l.b16 %v160
    %v452 = vunpack.c.h.b16 %v160
    %v453 = vunpack.c.l.b16 %v161
    %v454 = vunpack.c.h.b16 %v161
    %v455 = vunpack.c.l.b16 %v162
    %v456 = vunpack.c.h.b16 %v162
    %v457 = vunpack.c.l.b16 %v163
    %v458 = vunpack.c.h.b16 %v163
    %v459 = vunpack.c.l.b16 %v164
    %v460 = vunpack.c.h.b16 %v164
    %v461 = vunpack.c.l.b16 %v165
    %v462 = vunpack.c.h.b16 %v165
    %v463 = vunpack.c.l.b16 %v166
    %v464 = vunpack.c.h.b16 %v166
    %v465 = vunpack.c.l.b16 %v167
    %v466 = vunpack.c.h.b16 %v167
    %v467 = vunpack.c.l.b16 %v168
    %v468 = vunpack.c.h.b16 %v168
    %v469 = vunpack.c.l.b16 %v169
    %v470 = vunpack.c.h.b16 %v169
    %v471 = vunpack.c.l.b16 %v170
    %v472 = vunpack.c.h.b16 %v170
    %v473 = vunpack.c.l.b16 %v171
    %v474 = vunpack.c.h.b16 %v171
    %v475 = vunpack.c.l.b16 %v172
    %v476 = vunpack.c.h.b16 %v172
    %v477 = vunpack.c.l.b16 %v173
    %v478 = vunpack.c.h.b16 %v173
    %v479 = vunpack.c.l.b16 %v174
    %v480 = vunpack.c.h.b16 %v174
    %v481 = vunpack.c.l.b16 %v175
    %v482 = vunpack.c.h.b16 %v175
    %v483 = vunpack.c.l.b16 %v176
    %v484 = vunpack.c.h.b16 %v176
    %v485 = vunpack.c.l.b16 %v177
    %v486 = vunpack.c.h.b16 %v177
    %v487 = vunpack.c.l.b16 %v178
    %v488 = vunpack.c.h.b16 %v178
    %v489 = vunpack.c.l.b16 %v179
    %v490 = vunpack.c.h.b16 %v179
    %v491 = vunpack.c.l.b16 %v180
    %v492 = vunpack.c.h.b16 %v180
    %v493 = vunpack.c.l.b16 %v181
    %v494 = vunpack.c.h.b16 %v181
    %v495 = vunpack.c.l.b16 %v182
    %v496 = vunpack.c.h.b16 %v182
    %v497 = vunpack.c.l.b16 %v183
    %v498 = vunpack.c.h.b16 %v183
    %v499 = vunpack.c.l.b16 %v184
    %v500 = vunpack.c.h.b16 %v184
    %v501 = vunpack.c.l.b16 %v185
    %v502 = vunpack.c.h.b16 %v185
    %v503 = vunpack.c.l.b16 %v186
    %v504 = vunpack.c.h.b16 %v186
    %v505 = vunpack.c.l.b16 %v187
    %v506 = vunpack.c.h.b16 %v187
    %v507 = vunpack.c.l.b16 %v188
    %v508 = vunpack.c.h.b16 %v188
    %v509 = vunpack.c.l.b16 %v189
    %v510 = vunpack.c.h.b16 %v189
    %v511 = vunpack.c.l.b16 %v190
    %v512 = vunpack.c.h.b16 %v190
    %v513 = vunpack.c.l.b16 %v191
    %v514 = vunpack.c.h.b16 %v191
    %v515 = vunpack.c.l.b16 %v192
    %v516 = vunpack.c.h.b16 %v192
    %v517 = vunpack.c.l.b16 %v193
    %v518 = vunpack.c.h.b16 %v193
    %v519 = vunpack.c.l.b16 %v194
    %v520 = vunpack.c.h.b16 %v194
    %v521 = vunpack.c.l.b16 %v195
    %v522 = vunpack.c.h.b16 %v195
    %v523 = vunpack.c.l.b16 %v196
    %v524 = vunpack.c.h.b16 %v196
    %v525 = vunpack.c.l.b16 %v197
    %v526 = vunpack.c.h.b16 %v197
    %v527 = vunpack.c.l.b16 %v198
    %v528 = vunpack.c.h.b16 %v198
    %v529 = vunpack.c.l.b16 %v199
    %v530 = vunpack.c.h.b16 %v199
    %v531 = vunpack.c.l.b16 %v200
    %v532 = vunpack.c.h.b16 %v200
    %v533 = vunpack.c.l.b16 %v201
    %v534 = vunpack.c.h.b16 %v201
    %v535 = vunpack.c.l.b16 %v202
    %v536 = vunpack.c.h.b16 %v202
    %v537 = vunpack.c.l.b16 %v203
    %v538 = vunpack.c.h.b16 %v203
    %v539 = vunpack.c.l.b16 %v204
    %v540 = vunpack.c.h.b16 %v204
    %v541 = vunpack.c.l.b16 %v205
    %v542 = vunpack.c.h.b16 %v205
    %v543 = vunpack.c.l.b16 %v206
    %v544 = vunpack.c.h.b16 %v206
    %v545 = vunpack.c.l.b16 %v207
    %v546 = vunpack.c.h.b16 %v207
    %v547 = vunpack.c.l.b16 %v208
    %v548 = vunpack.c.h.b16 %v208
    %v549 = vunpack.c.l.b16 %v209
    %v550 = vunpack.c.h.b16 %v209
    %v551 = vunpack.c.l.b16 %v210
    %v552 = vunpack.c.h.b16 %v210
    %v553 = vunpack.c.l.b16 %v211
    %v554 = vunpack.c.h.b16 %v211
    %v555 = vunpack.c.l.b16 %v212
    %v556 = vunpack.c.h.b16 %v212
    %v557 = vunpack.c.l.b16 %v213
    %v558 = vunpack.c.h.b16 %v213
    %v559 = vunpack.c.l.b16 %v214
    %v560 = vunpack.c.h.b16 %v214
    %v561 = vunpack.c.l.b16 %v215
    %v562 = vunpack.c.h.b16 %v215
    %v563 = vunpack.c.l.b16 %v216
    %v564 = vunpack.c.h.b16 %v216
    %v565 = vunpack.c.l.b16 %v217
    %v566 = vunpack.c.h.b16 %v217
    %v567 = vunpack.c.l.b16 %v218
    %v568 = vunpack.c.h.b16 %v218
    %v569 = vunpack.c.l.b16 %v219
    %v570 = vunpack.c.h.b16 %v219
    %v571 = vunpack.c.l.b16 %v220
    %v572 = vunpack.c.h.b16 %v220
    %v573 = vunpack.c.l.b16 %v221
    %v574 = vunpack.c.h.b16 %v221
    %v575 = vunpack.c.l.b16 %v222
    %v576 = vunpack.c.h.b16 %v222
    %v577 = vunpack.c.l.b16 %v223
    %v578 = vunpack.c.h.b16 %v223
    %v579 = vunpack.c.l.b16 %v224
    %v580 = vunpack.c.h.b16 %v224
    %v581 = vunpack.c.l.b16 %v225
    %v582 = vunpack.c.h.b16 %v225
    %v583 = vunpack.c.l.b16 %v226
    %v584 = vunpack.c.h.b16 %v226
    %v585 = vunpack.c.l.b16 %v227
    %v586 = vunpack.c.h.b16 %v227
    %v587 = vunpack.c.l.b16 %v228
    %v588 = vunpack.c.h.b16 %v228
    %v589 = vunpack.c.l.b16 %v229
    %v590 = vunpack.c.h.b16 %v229
    %v591 = vunpack.c.l.b16 %v230
    %v592 = vunpack.c.h.b16 %v230
    %v593 = vunpack.c.l.b16 %v231
    %v594 = vunpack.c.h.b16 %v231
    %v595 = vunpack.c.l.b16 %v232
    %v596 = vunpack.c.h.b16 %v232
    %v597 = vunpack.c.l.b16 %v233
    %v598 = vunpack.c.h.b16 %v233
    %v599 = vunpack.c.l.b16 %v234
    %v600 = vunpack.c.h.b16 %v234
    %v601 = vunpack.c.l.b16 %v235
    %v602 = vunpack.c.h.b16 %v235
    %v603 = vunpack.c.l.b16 %v236
    %v604 = vunpack.c.h.b16 %v236
    %v605 = vunpack.c.l.b16 %v237
    %v606 = vunpack.c.h.b16 %v237
    %v607 = vunpack.c.l.b16 %v238
    %v608 = vunpack.c.h.b16 %v238
    %v609 = vunpack.c.l.b16 %v239
    %v610 = vunpack.c.h.b16 %v239
    %v611 = vunpack.c.l.b16 %v240
    %v612 = vunpack.c.h.b16 %v240
    %v613 = vunpack.c.l.b16 %v241
    %v614 = vunpack.c.h.b16 %v241
    %v615 = vunpack.c.l.b16 %v242
    %v616 = vunpack.c.h.b16 %v242
    %v617 = vunpack.c.l.b16 %v243
    %v618 = vunpack.c.h.b16 %v243
    %v619 = vunpack.c.l.b16 %v244
    %v620 = vunpack.c.h.b16 %v244
    %v621 = vunpack.c.l.b16 %v245
    %v622 = vunpack.c.h.b16 %v245
    %v623 = vunpack.c.l.b16 %v246
    %v624 = vunpack.c.h.b16 %v246
    %v625 = vunpack.c.l.b16 %v247
    %v626 = vunpack.c.h.b16 %v247
    %v627 = vunpack.c.l.b16 %v248
    %v628 = vunpack.c.h.b16 %v248
    %v629 = vunpack.c.l.b16 %v249
    %v630 = vunpack.c.h.b16 %v249
    %v631 = vunpack.c.l.b16 %v250
    %v632 = vunpack.c.h.b16 %v250
    %v633 = vunpack.c.l.b16 %v251
    %v634 = vunpack.c.h.b16 %v251
    %v635 = vunpack.c.l.b16 %v252
    %v636 = vunpack.c.h.b16 %v252
    %v637 = vpack.c.b16 %v415, %v413
    %v638 = vpack.c.b16 %v416, %v414
    %v639 = vpack.c.b16 %v419, %v417
    %v640 = vpack.c.b16 %v420, %v418
    %v641 = vpack.c.b16 %v423, %v421
    %v642 = vpack.c.b16 %v424, %v422
    %v643 = vpack.c.b16 %v427, %v425
    %v644 = vpack.c.b16 %v428, %v426
    %v645 = vpack.c.b16 %v431, %v429
    %v646 = vpack.c.b16 %v432, %v430
    %v647 = vpack.c.b16 %v435, %v433
    %v648 = vpack.c.b16 %v436, %v434
    %v649 = vpack.c.b16 %v439, %v437
    %v650 = vpack.c.b16 %v440, %v438
    %v651 = vpack.c.b16 %v443, %v441
    %v652 = vpack.c.b16 %v444, %v442
    %v653 = vpack.c.b16 %v447, %v445
    %v654 = vpack.c.b16 %v448, %v446
    %v655 = vpack.c.b16 %v451, %v449
    %v656 = vpack.c.b16 %v452, %v450
    %v657 = vpack.c.b16 %v455, %v453
    %v658 = vpack.c.b16 %v456, %v454
    %v659 = vpack.c.b16 %v459, %v457
    %v660 = vpack.c.b16 %v460, %v458
    %v661 = vpack.c.b16 %v463, %v461
    %v662 = vpack.c.b16 %v464, %v462
    %v663 = vpack.c.b16 %v467, %v465
    %v664 = vpack.c.b16 %v468, %v466
    %v665 = vpack.c.b16 %v471, %v469
    %v666 = vpack.c.b16 %v472, %v470
    %v667 = vpack.c.b16 %v475, %v473
    %v668 = vpack.c.b16 %v476, %v474
    %v669 = vpack.c.b16 %v479, %v477
    %v670 = vpack.c.b16 %v480, %v478
    %v671 = vpack.c.b16 %v483, %v481
    %v672 = vpack.c.b16 %v484, %v482
    %v673 = vpack.c.b16 %v487, %v485
    %v674 = vpack.c.b16 %v488, %v486
    %v675 = vpack.c.b16 %v491, %v489
    %v676 = vpack.c.b16 %v492, %v490
    %v677 = vpack.c.b16 %v495, %v493
    %v678 = vpack.c.b16 %v496, %v494
    %v679 = vpack.c.b16 %v499, %v497
    %v680 = vpack.c.b16 %v500, %v498
    %v681 = vpack.c.b16 %v503, %v501
    %v682 = vpack.c.b16 %v504, %v502
    %v683 = vpack.c.b16 %v507, %v505
    %v684 = vpack.c.b16 %v508, %v506
    %v685 = vpack.c.b16 %v511, %v509
    %v686 = vpack.c.b16 %v512, %v510
    %v687 = vpack.c.b16 %v515, %v513
    %v688 = vpack.c.b16 %v516, %v514
    %v689 = vpack.c.b16 %v519, %v517
    %v690 = vpack.c.b16 %v520, %v518
    %v691 = vpack.c.b16 %v523, %v521
    %v692 = vpack.c.b16 %v524, %v522
    %v693 = vpack.c.b16 %v527, %v525
    %v694 = vpack.c.b16 %v528, %v526
    %v695 = vpack.c.b16 %v531, %v529
    %v696 = vpack.c.b16 %v532, %v530
    %v697 = vpack.c.b16 %v535, %v533
    %v698 = vpack.c.b16 %v536, %v534
    %v699 = vpack.c.b16 %v539, %v537
    %v700 = vpack.c.b16 %v540, %v538
    %v701 = vpack.c.b16 %v543, %v541
    %v702 = vpack.c.b16 %v544, %v542
    %v703 = vpack.c.b16 %v547, %v545
    %v704 = vpack.c.b16 %v548, %v546
    %v705 = vpack.c.b16 %v551, %v549
    %v706 = vpack.c.b16 %v552, %v550
    %v707 = vpack.c.b16 %v555, %v553
    %v708 = vpack.c.b16 %v556, %v554
    %v709 = vpack.c.b16 %v559, %v557
    %v710 = vpack.c.b16 %v560, %v558
    %v711 = vpack.c.b16 %v563, %v561
    %v712 = vpack.c.b16 %v564, %v562
    %v713 = vpack.c.b16 %v567, %v565
    %v714 = vpack.c.b16 %v568, %v566
    %v715 = vpack.c.b16 %v571, %v569
    %v716 = vpack.c.b16 %v572, %v570
    %v717 = vpack.c.b16 %v575, %v573
    %v718 = vpack.c.b16 %v576, %v574
    %v719 = vpack.c.b16 %v579, %v577
    %v720 = vpack.c.b16 %v580, %v578
    %v721 = vpack.c.b16 %v583, %v581
    %v722 = vpack.c.b16 %v584, %v582
    %v723 = vpack.c.b16 %v587, %v585
    %v724 = vpack.c.b16 %v588, %v586
    %v725 = vpack.c.b16 %v591, %v589
    %v726 = vpack.c.b16 %v592, %v590
    %v727 = vpack.c.b16 %v595, %v593
    %v728 = vpack.c.b16 %v596, %v594
    %v729 = vpack.c.b16 %v599, %v597
    %v730 = vpack.c.b16 %v600, %v598
    %v731 = vpack.c.b16 %v603, %v601
    %v732 = vpack.c.b16 %v604, %v602
    %v733 = vpack.c.b16 %v607, %v605
    %v734 = vpack.c.b16 %v608, %v606
    %v735 = vpack.c.b16 %v611, %v609
    %v736 = vpack.c.b16 %v612, %v610
    %v737 = vpack.c.b16 %v615, %v613
    %v738 = vpack.c.b16 %v616, %v614
    %v739 = vpack.c.b16 %v619, %v617
    %v740 = vpack.c.b16 %v620, %v618
    %v741 = vpack.c.b16 %v623, %v621
    %v742 = vpack.c.b16 %v624, %v622
    %v743 = vpack.c.b16 %v627, %v625
    %v744 = vpack.c.b16 %v628, %v626
    %v745 = vpack.c.b16 %v631, %v629
    %v746 = vpack.c.b16 %v632, %v630
    %v747 = vpack.c.b16 %v635, %v633
    %v748 = vpack.c.b16 %v636, %v634
    %861 = vmatprep.subr.bf16.mxu0 %v652
    %862 = vmatpush1.bf16.msra.mxu0 %v651
    %863 = vmatprep.subr.bf16.mxu0 %v650
    %864 = vmatpush1.bf16.msra.mxu0 %v649
    %865 = vmatprep.subr.bf16.mxu0 %v648
    %866 = vmatpush1.bf16.msra.mxu0 %v647
    %867 = vmatprep.subr.bf16.mxu0 %v646
    %868 = vmatpush1.bf16.msra.mxu0 %v645
    %869 = vmatprep.subr.bf16.mxu0 %v644
    %870 = vmatpush1.bf16.msra.mxu0 %v643
    %871 = vmatprep.subr.bf16.mxu0 %v642
    %872 = vmatpush1.bf16.msra.mxu0 %v641
    %873 = vmatprep.subr.bf16.mxu0 %v640
    %874 = vmatpush1.bf16.msra.mxu0 %v639
    %875 = vmatprep.subr.bf16.mxu0 %v638
    %876 = vmatpush1.bf16.msra.mxu0 %v637
    %877 = vmatprep.subr.bf16.mxu0 %v668
    %878 = vmatpush2.bf16.msra.mxu0 %v667
    %879 = vmatprep.subr.bf16.mxu0 %v666
    %880 = vmatpush2.bf16.msra.mxu0 %v665
    %881 = vmatprep.subr.bf16.mxu0 %v664
    %882 = vmatpush2.bf16.msra.mxu0 %v663
    %883 = vmatprep.subr.bf16.mxu0 %v662
    %884 = vmatpush2.bf16.msra.mxu0 %v661
    %885 = vmatprep.subr.bf16.mxu0 %v660
    %886 = vmatpush2.bf16.msra.mxu0 %v659
    %887 = vmatprep.subr.bf16.mxu0 %v658
    %888 = vmatpush2.bf16.msra.mxu0 %v657
    %889 = vmatprep.subr.bf16.mxu0 %v656
    %890 = vmatpush2.bf16.msra.mxu0 %v655
    %891 = vmatprep.subr.bf16.mxu0 %v654
    %892 = vmatpush2.bf16.msra.mxu0 %v653
    %893 = vmatprep.mubr.bf16.mxu0 %v288
    %894 = vmatmul.mubr.bf16.gmra.mxu0 %v287
    %v895 = vpop.f32.mrf.mxu0
    %v896 = vadd.f32 %v258, %v895
    %v897 = vpop.f32.mrf.mxu0
    %v898 = vadd.f32 %v262, %v897
    %v899 = vpop.f32.mrf.mxu0
    %v900 = vadd.f32 %v258, %v899
    %v901 = vpop.f32.mrf.mxu0
    %v902 = vadd.f32 %v262, %v901
    %903 = vdwg.mxu0
    %904 = vmatprep.subr.bf16.mxu0 %v684
    %905 = vmatpush1.bf16.msra.mxu0 %v683
    %906 = vmatprep.subr.bf16.mxu0 %v682
    %907 = vmatpush1.bf16.msra.mxu0 %v681
    %908 = vmatprep.subr.bf16.mxu0 %v680
    %909 = vmatpush1.bf16.msra.mxu0 %v679
    %910 = vmatprep.subr.bf16.mxu0 %v678
    %911 = vmatpush1.bf16.msra.mxu0 %v677
    %912 = vmatprep.subr.bf16.mxu0 %v676
    %913 = vmatpush1.bf16.msra.mxu0 %v675
    %914 = vmatprep.subr.bf16.mxu0 %v674
    %915 = vmatpush1.bf16.msra.mxu0 %v673
    %916 = vmatprep.subr.bf16.mxu0 %v672
    %917 = vmatpush1.bf16.msra.mxu0 %v671
    %918 = vmatprep.subr.bf16.mxu0 %v670
    %919 = vmatpush1.bf16.msra.mxu0 %v669
    %920 = vmatprep.subr.bf16.mxu0 %v700
    %921 = vmatpush2.bf16.msra.mxu0 %v699
    %922 = vmatprep.subr.bf16.mxu0 %v698
    %923 = vmatpush2.bf16.msra.mxu0 %v697
    %924 = vmatprep.subr.bf16.mxu0 %v696
    %925 = vmatpush2.bf16.msra.mxu0 %v695
    %926 = vmatprep.subr.bf16.mxu0 %v694
    %927 = vmatpush2.bf16.msra.mxu0 %v693
    %928 = vmatprep.subr.bf16.mxu0 %v692
    %929 = vmatpush2.bf16.msra.mxu0 %v691
    %930 = vmatprep.subr.bf16.mxu0 %v690
    %931 = vmatpush2.bf16.msra.mxu0 %v689
    %932 = vmatprep.subr.bf16.mxu0 %v688
    %933 = vmatpush2.bf16.msra.mxu0 %v687
    %934 = vmatprep.subr.bf16.mxu0 %v686
    %935 = vmatpush2.bf16.msra.mxu0 %v685
    %936 = vmatprep.mubr.bf16.mxu0 %v290
    %937 = vmatmul.mubr.bf16.gmra.mxu0 %v289
    %v938 = vpop.f32.mrf.mxu0
    %v939 = vadd.f32 %v896, %v938
    %v940 = vpop.f32.mrf.mxu0
    %v941 = vadd.f32 %v898, %v940
    %v942 = vpop.f32.mrf.mxu0
    %v943 = vadd.f32 %v900, %v942
    %v944 = vpop.f32.mrf.mxu0
    %v945 = vadd.f32 %v902, %v944
    %946 = vdwg.mxu0
    %947 = vmatprep.subr.bf16.mxu0 %v716
    %948 = vmatpush1.bf16.msra.mxu0 %v715
    %949 = vmatprep.subr.bf16.mxu0 %v714
    %950 = vmatpush1.bf16.msra.mxu0 %v713
    %951 = vmatprep.subr.bf16.mxu0 %v712
    %952 = vmatpush1.bf16.msra.mxu0 %v711
    %953 = vmatprep.subr.bf16.mxu0 %v710
    %954 = vmatpush1.bf16.msra.mxu0 %v709
    %955 = vmatprep.subr.bf16.mxu0 %v708
    %956 = vmatpush1.bf16.msra.mxu0 %v707
    %957 = vmatprep.subr.bf16.mxu0 %v706
    %958 = vmatpush1.bf16.msra.mxu0 %v705
    %959 = vmatprep.subr.bf16.mxu0 %v704
    %960 = vmatpush1.bf16.msra.mxu0 %v703
    %961 = vmatprep.subr.bf16.mxu0 %v702
    %962 = vmatpush1.bf16.msra.mxu0 %v701
    %963 = vmatprep.subr.bf16.mxu0 %v732
    %964 = vmatpush2.bf16.msra.mxu0 %v731
    %965 = vmatprep.subr.bf16.mxu0 %v730
    %966 = vmatpush2.bf16.msra.mxu0 %v729
    %967 = vmatprep.subr.bf16.mxu0 %v728
    %968 = vmatpush2.bf16.msra.mxu0 %v727
    %969 = vmatprep.subr.bf16.mxu0 %v726
    %970 = vmatpush2.bf16.msra.mxu0 %v725
    %971 = vmatprep.subr.bf16.mxu0 %v724
    %972 = vmatpush2.bf16.msra.mxu0 %v723
    %973 = vmatprep.subr.bf16.mxu0 %v722
    %974 = vmatpush2.bf16.msra.mxu0 %v721
    %975 = vmatprep.subr.bf16.mxu0 %v720
    %976 = vmatpush2.bf16.msra.mxu0 %v719
    %977 = vmatprep.subr.bf16.mxu0 %v718
    %978 = vmatpush2.bf16.msra.mxu0 %v717
    %979 = vmatprep.mubr.bf16.mxu0 %v292
    %980 = vmatmul.mubr.bf16.gmra.mxu0 %v291
    %v981 = vpop.f32.mrf.mxu0
    %v982 = vadd.f32 %v939, %v981
    %v983 = vpop.f32.mrf.mxu0
    %v984 = vadd.f32 %v941, %v983
    %v985 = vpop.f32.mrf.mxu0
    %v986 = vadd.f32 %v943, %v985
    %v987 = vpop.f32.mrf.mxu0
    %v988 = vadd.f32 %v945, %v987
    %989 = vdwg.mxu0
    %990 = vmatprep.subr.bf16.mxu0 %v748
    %991 = vmatpush1.bf16.msra.mxu0 %v747
    %992 = vmatprep.subr.bf16.mxu0 %v746
    %993 = vmatpush1.bf16.msra.mxu0 %v745
    %994 = vmatprep.subr.bf16.mxu0 %v744
    %995 = vmatpush1.bf16.msra.mxu0 %v743
    %996 = vmatprep.subr.bf16.mxu0 %v742
    %997 = vmatpush1.bf16.msra.mxu0 %v741
    %998 = vmatprep.subr.bf16.mxu0 %v740
    %999 = vmatpush1.bf16.msra.mxu0 %v739
    %1000 = vmatprep.subr.bf16.mxu0 %v738
    %1001 = vmatpush1.bf16.msra.mxu0 %v737
    %1002 = vmatprep.subr.bf16.mxu0 %v736
    %1003 = vmatpush1.bf16.msra.mxu0 %v735
    %1004 = vmatprep.subr.bf16.mxu0 %v734
    %1005 = vmatpush1.bf16.msra.mxu0 %v733
    %1006 = vmatprep.subr.bf16.mxu0 0
    %1007 = vmatpush2.bf16.msra.mxu0 0
    %1008 = vmatprep.subr.bf16.mxu0 0
    %1009 = vmatpush2.bf16.msra.mxu0 0
    %1010 = vmatprep.subr.bf16.mxu0 0
    %1011 = vmatpush2.bf16.msra.mxu0 0
    %1012 = vmatprep.subr.bf16.mxu0 0
    %1013 = vmatpush2.bf16.msra.mxu0 0
    %1014 = vmatprep.subr.bf16.mxu0 0
    %1015 = vmatpush2.bf16.msra.mxu0 0
    %1016 = vmatprep.subr.bf16.mxu0 0
    %1017 = vmatpush2.bf16.msra.mxu0 0
    %1018 = vmatprep.subr.bf16.mxu0 0
    %1019 = vmatpush2.bf16.msra.mxu0 0
    %1020 = vmatprep.subr.bf16.mxu0 0
    %1021 = vmatpush2.bf16.msra.mxu0 0
    %1022 = vmatprep.mubr.bf16.mxu0 0
    %1023 = vmatmul.mubr.bf16.gmra.mxu0 %v293
    %v1024 = vpop.f32.mrf.mxu0
    %v1025 = vadd.f32 %v982, %v1024
    %v1026 = vpop.f32.mrf.mxu0
    %v1027 = vadd.f32 %v984, %v1026
    %v1028 = vpop.f32.mrf.mxu0
    %v1029 = vadd.f32 %v986, %v1028
    %v1030 = vpop.f32.mrf.mxu0
    %v1031 = vadd.f32 %v988, %v1030
    %1032 = vdwg.mxu0
    %v1033 = vmax.f32 %v1025, 0.0
    %v1034 = vmax.f32 %v1027, 0.0
    %v1035 = vmax.f32 %v1029, 0.0
    %v1036 = vmax.f32 %v1031, 0.0
    %v1037 = vpack.c.bf16 %v1035, %v1033
    %v1038 = vpack.c.bf16 %v1036, %v1034
    %v1039 = vld [vmem:[#allocation7] sm:$0xff]
    %v1040 = vld [vmem:[#allocation7 + $0x8] sm:$0xff]
    %v1041 = vld [vmem:[#allocation7 + $0x10] sm:$0xff]
    %v1042 = vld [vmem:[#allocation7 + $0x18] sm:$0xff]
    %v1043 = vld [vmem:[#allocation7 + $0x20] sm:$0xff]
    %v1044 = vld [vmem:[#allocation7 + $0x28] sm:$0xff]
    %v1045 = vld [vmem:[#allocation7 + $0x30] sm:$0xff]
    %v1046 = vld [vmem:[#allocation7 + $0x38] sm:$0xff]
    %v1047 = vld [vmem:[#allocation7 + $0x40] sm:$0xff]
    %v1048 = vld [vmem:[#allocation7 + $0x48] sm:$0xff]
    %v1049 = vld [vmem:[#allocation7 + $0x50] sm:$0xff]
    %v1050 = vld [vmem:[#allocation7 + $0x58] sm:$0xff]
    %v1051 = vld [vmem:[#allocation7 + $0x60] sm:$0xff]
    %v1052 = vld [vmem:[#allocation7 + $0x68] sm:$0xff]
    %v1053 = vld [vmem:[#allocation7 + $0x70] sm:$0xff]
    %v1054 = vld [vmem:[#allocation7 + $0x78] sm:$0xff]
    %v1055 = vld [vmem:[#allocation7 + $0x80] sm:$0xff]
    %v1056 = vld [vmem:[#allocation7 + $0x88] sm:$0xff]
    %v1057 = vld [vmem:[#allocation7 + $0x90] sm:$0xff]
    %v1058 = vld [vmem:[#allocation7 + $0x98] sm:$0xff]
    %v1059 = vld [vmem:[#allocation7 + $0xa0] sm:$0xff]
    %v1060 = vld [vmem:[#allocation7 + $0xa8] sm:$0xff]
    %v1061 = vld [vmem:[#allocation7 + $0xb0] sm:$0xff]
    %v1062 = vld [vmem:[#allocation7 + $0xb8] sm:$0xff]
    %v1063 = vld [vmem:[#allocation7 + $0xc0] sm:$0xff]
    %v1064 = vld [vmem:[#allocation7 + $0xc8] sm:$0xff]
    %v1065 = vld [vmem:[#allocation7 + $0xd0] sm:$0xff]
    %v1066 = vld [vmem:[#allocation7 + $0xd8] sm:$0xff]
    %v1067 = vld [vmem:[#allocation7 + $0xe0] sm:$0xff]
    %v1068 = vld [vmem:[#allocation7 + $0xe8] sm:$0xff]
    %v1069 = vld [vmem:[#allocation7 + $0xf0] sm:$0xff]
    %v1070 = vld [vmem:[#allocation7 + $0xf8] sm:$0xff]
    %v1071 = vld [vmem:[#allocation7 + $0x100] sm:$0xff]
    %v1072 = vld [vmem:[#allocation7 + $0x108] sm:$0xff]
    %v1073 = vld [vmem:[#allocation7 + $0x110] sm:$0xff]
    %v1074 = vld [vmem:[#allocation7 + $0x118] sm:$0xff]
    %v1075 = vld [vmem:[#allocation7 + $0x120] sm:$0xff]
    %v1076 = vld [vmem:[#allocation7 + $0x128] sm:$0xff]
    %v1077 = vld [vmem:[#allocation7 + $0x130] sm:$0xff]
    %v1078 = vld [vmem:[#allocation7 + $0x138] sm:$0xff]
    %v1079 = vld [vmem:[#allocation7 + $0x140] sm:$0xff]
    %v1080 = vld [vmem:[#allocation7 + $0x148] sm:$0xff]
    %v1081 = vld [vmem:[#allocation7 + $0x150] sm:$0xff]
    %v1082 = vld [vmem:[#allocation7 + $0x158] sm:$0xff]
    %v1083 = vld [vmem:[#allocation7 + $0x160] sm:$0xff]
    %v1084 = vld [vmem:[#allocation7 + $0x168] sm:$0xff]
    %v1085 = vld [vmem:[#allocation7 + $0x170] sm:$0xff]
    %v1086 = vld [vmem:[#allocation7 + $0x178] sm:$0xff]
    %v1087 = vld [vmem:[#allocation7 + $0x180] sm:$0xff]
    %v1088 = vld [vmem:[#allocation7 + $0x188] sm:$0xff]
    %v1089 = vld [vmem:[#allocation7 + $0x190] sm:$0xff]
    %v1090 = vld [vmem:[#allocation7 + $0x198] sm:$0xff]
    %v1091 = vld [vmem:[#allocation7 + $0x1a0] sm:$0xff]
    %v1092 = vld [vmem:[#allocation7 + $0x1a8] sm:$0xff]
    %v1093 = vld [vmem:[#allocation7 + $0x1b0] sm:$0xff]
    %v1094 = vld [vmem:[#allocation7 + $0x1b8] sm:$0xff]
    %v1095 = vld [vmem:[#allocation7 + $0x1c0] sm:$0xff]
    %v1096 = vld [vmem:[#allocation7 + $0x1c8] sm:$0xff]
    %v1097 = vld [vmem:[#allocation7 + $0x1d0] sm:$0xff]
    %v1098 = vld [vmem:[#allocation7 + $0x1d8] sm:$0xff]
    %v1099 = vld [vmem:[#allocation7 + $0x1e0] sm:$0xff]
    %v1100 = vld [vmem:[#allocation7 + $0x1e8] sm:$0xff]
    %v1101 = vld [vmem:[#allocation7 + $0x1f0] sm:$0xff]
    %v1102 = vld [vmem:[#allocation7 + $0x1f8] sm:$0xff]
    %v1103 = vld [vmem:[#allocation8] sm:$0xf]
    %v1105 = vlaneseq
    %v1106 = vshrl.u32 %v1105, 7
    %v1107 = vsub.s32 0, %v1106
    %v1108 = vrot.slane %v1103, %v1107
    %v1109 = vlaneseq
    %v1110 = vshrl.u32 %v1109, 7
    %v1111 = vsub.s32 1, %v1110
    %v1112 = vrot.slane %v1103, %v1111
    %v1113 = vlaneseq
    %v1114 = vshrl.u32 %v1113, 7
    %v1115 = vsub.s32 2, %v1114
    %v1116 = vrot.slane %v1103, %v1115
    %v1117 = vlaneseq
    %v1118 = vshrl.u32 %v1117, 7
    %v1119 = vsub.s32 3, %v1118
    %v1120 = vrot.slane %v1103, %v1119
    %v1189 = vunpack.c.l.b16 %v1039
    %v1190 = vunpack.c.h.b16 %v1039
    %v1191 = vunpack.c.l.b16 %v1040
    %v1192 = vunpack.c.h.b16 %v1040
    %v1193 = vunpack.c.l.b16 %v1041
    %v1194 = vunpack.c.h.b16 %v1041
    %v1195 = vunpack.c.l.b16 %v1042
    %v1196 = vunpack.c.h.b16 %v1042
    %v1197 = vunpack.c.l.b16 %v1043
    %v1198 = vunpack.c.h.b16 %v1043
    %v1199 = vunpack.c.l.b16 %v1044
    %v1200 = vunpack.c.h.b16 %v1044
    %v1201 = vunpack.c.l.b16 %v1045
    %v1202 = vunpack.c.h.b16 %v1045
    %v1203 = vunpack.c.l.b16 %v1046
    %v1204 = vunpack.c.h.b16 %v1046
    %v1205 = vunpack.c.l.b16 %v1047
    %v1206 = vunpack.c.h.b16 %v1047
    %v1207 = vunpack.c.l.b16 %v1048
    %v1208 = vunpack.c.h.b16 %v1048
    %v1209 = vunpack.c.l.b16 %v1049
    %v1210 = vunpack.c.h.b16 %v1049
    %v1211 = vunpack.c.l.b16 %v1050
    %v1212 = vunpack.c.h.b16 %v1050
    %v1213 = vunpack.c.l.b16 %v1051
    %v1214 = vunpack.c.h.b16 %v1051
    %v1215 = vunpack.c.l.b16 %v1052
    %v1216 = vunpack.c.h.b16 %v1052
    %v1217 = vunpack.c.l.b16 %v1053
    %v1218 = vunpack.c.h.b16 %v1053
    %v1219 = vunpack.c.l.b16 %v1054
    %v1220 = vunpack.c.h.b16 %v1054
    %v1221 = vunpack.c.l.b16 %v1055
    %v1222 = vunpack.c.h.b16 %v1055
    %v1223 = vunpack.c.l.b16 %v1056
    %v1224 = vunpack.c.h.b16 %v1056
    %v1225 = vunpack.c.l.b16 %v1057
    %v1226 = vunpack.c.h.b16 %v1057
    %v1227 = vunpack.c.l.b16 %v1058
    %v1228 = vunpack.c.h.b16 %v1058
    %v1229 = vunpack.c.l.b16 %v1059
    %v1230 = vunpack.c.h.b16 %v1059
    %v1231 = vunpack.c.l.b16 %v1060
    %v1232 = vunpack.c.h.b16 %v1060
    %v1233 = vunpack.c.l.b16 %v1061
    %v1234 = vunpack.c.h.b16 %v1061
    %v1235 = vunpack.c.l.b16 %v1062
    %v1236 = vunpack.c.h.b16 %v1062
    %v1237 = vunpack.c.l.b16 %v1063
    %v1238 = vunpack.c.h.b16 %v1063
    %v1239 = vunpack.c.l.b16 %v1064
    %v1240 = vunpack.c.h.b16 %v1064
    %v1241 = vunpack.c.l.b16 %v1065
    %v1242 = vunpack.c.h.b16 %v1065
    %v1243 = vunpack.c.l.b16 %v1066
    %v1244 = vunpack.c.h.b16 %v1066
    %v1245 = vunpack.c.l.b16 %v1067
    %v1246 = vunpack.c.h.b16 %v1067
    %v1247 = vunpack.c.l.b16 %v1068
    %v1248 = vunpack.c.h.b16 %v1068
    %v1249 = vunpack.c.l.b16 %v1069
    %v1250 = vunpack.c.h.b16 %v1069
    %v1251 = vunpack.c.l.b16 %v1070
    %v1252 = vunpack.c.h.b16 %v1070
    %v1253 = vunpack.c.l.b16 %v1071
    %v1254 = vunpack.c.h.b16 %v1071
    %v1255 = vunpack.c.l.b16 %v1072
    %v1256 = vunpack.c.h.b16 %v1072
    %v1257 = vunpack.c.l.b16 %v1073
    %v1258 = vunpack.c.h.b16 %v1073
    %v1259 = vunpack.c.l.b16 %v1074
    %v1260 = vunpack.c.h.b16 %v1074
    %v1261 = vunpack.c.l.b16 %v1075
    %v1262 = vunpack.c.h.b16 %v1075
    %v1263 = vunpack.c.l.b16 %v1076
    %v1264 = vunpack.c.h.b16 %v1076
    %v1265 = vunpack.c.l.b16 %v1077
    %v1266 = vunpack.c.h.b16 %v1077
    %v1267 = vunpack.c.l.b16 %v1078
    %v1268 = vunpack.c.h.b16 %v1078
    %v1269 = vunpack.c.l.b16 %v1079
    %v1270 = vunpack.c.h.b16 %v1079
    %v1271 = vunpack.c.l.b16 %v1080
    %v1272 = vunpack.c.h.b16 %v1080
    %v1273 = vunpack.c.l.b16 %v1081
    %v1274 = vunpack.c.h.b16 %v1081
    %v1275 = vunpack.c.l.b16 %v1082
    %v1276 = vunpack.c.h.b16 %v1082
    %v1277 = vunpack.c.l.b16 %v1083
    %v1278 = vunpack.c.h.b16 %v1083
    %v1279 = vunpack.c.l.b16 %v1084
    %v1280 = vunpack.c.h.b16 %v1084
    %v1281 = vunpack.c.l.b16 %v1085
    %v1282 = vunpack.c.h.b16 %v1085
    %v1283 = vunpack.c.l.b16 %v1086
    %v1284 = vunpack.c.h.b16 %v1086
    %v1285 = vunpack.c.l.b16 %v1087
    %v1286 = vunpack.c.h.b16 %v1087
    %v1287 = vunpack.c.l.b16 %v1088
    %v1288 = vunpack.c.h.b16 %v1088
    %v1289 = vunpack.c.l.b16 %v1089
    %v1290 = vunpack.c.h.b16 %v1089
    %v1291 = vunpack.c.l.b16 %v1090
    %v1292 = vunpack.c.h.b16 %v1090
    %v1293 = vunpack.c.l.b16 %v1091
    %v1294 = vunpack.c.h.b16 %v1091
    %v1295 = vunpack.c.l.b16 %v1092
    %v1296 = vunpack.c.h.b16 %v1092
    %v1297 = vunpack.c.l.b16 %v1093
    %v1298 = vunpack.c.h.b16 %v1093
    %v1299 = vunpack.c.l.b16 %v1094
    %v1300 = vunpack.c.h.b16 %v1094
    %v1301 = vunpack.c.l.b16 %v1095
    %v1302 = vunpack.c.h.b16 %v1095
    %v1303 = vunpack.c.l.b16 %v1096
    %v1304 = vunpack.c.h.b16 %v1096
    %v1305 = vunpack.c.l.b16 %v1097
    %v1306 = vunpack.c.h.b16 %v1097
    %v1307 = vunpack.c.l.b16 %v1098
    %v1308 = vunpack.c.h.b16 %v1098
    %v1309 = vunpack.c.l.b16 %v1099
    %v1310 = vunpack.c.h.b16 %v1099
    %v1311 = vunpack.c.l.b16 %v1100
    %v1312 = vunpack.c.h.b16 %v1100
    %v1313 = vunpack.c.l.b16 %v1101
    %v1314 = vunpack.c.h.b16 %v1101
    %v1315 = vunpack.c.l.b16 %v1102
    %v1316 = vunpack.c.h.b16 %v1102
    %v1317 = vpack.c.b16 %v1193, %v1189
    %v1318 = vpack.c.b16 %v1194, %v1190
    %v1319 = vpack.c.b16 %v1195, %v1191
    %v1320 = vpack.c.b16 %v1196, %v1192
    %v1321 = vpack.c.b16 %v1201, %v1197
    %v1322 = vpack.c.b16 %v1202, %v1198
    %v1323 = vpack.c.b16 %v1203, %v1199
    %v1324 = vpack.c.b16 %v1204, %v1200
    %v1325 = vpack.c.b16 %v1209, %v1205
    %v1326 = vpack.c.b16 %v1210, %v1206
    %v1327 = vpack.c.b16 %v1211, %v1207
    %v1328 = vpack.c.b16 %v1212, %v1208
    %v1329 = vpack.c.b16 %v1217, %v1213
    %v1330 = vpack.c.b16 %v1218, %v1214
    %v1331 = vpack.c.b16 %v1219, %v1215
    %v1332 = vpack.c.b16 %v1220, %v1216
    %v1333 = vpack.c.b16 %v1225, %v1221
    %v1334 = vpack.c.b16 %v1226, %v1222
    %v1335 = vpack.c.b16 %v1227, %v1223
    %v1336 = vpack.c.b16 %v1228, %v1224
    %v1337 = vpack.c.b16 %v1233, %v1229
    %v1338 = vpack.c.b16 %v1234, %v1230
    %v1339 = vpack.c.b16 %v1235, %v1231
    %v1340 = vpack.c.b16 %v1236, %v1232
    %v1341 = vpack.c.b16 %v1241, %v1237
    %v1342 = vpack.c.b16 %v1242, %v1238
    %v1343 = vpack.c.b16 %v1243, %v1239
    %v1344 = vpack.c.b16 %v1244, %v1240
    %v1345 = vpack.c.b16 %v1249, %v1245
    %v1346 = vpack.c.b16 %v1250, %v1246
    %v1347 = vpack.c.b16 %v1251, %v1247
    %v1348 = vpack.c.b16 %v1252, %v1248
    %v1349 = vpack.c.b16 %v1257, %v1253
    %v1350 = vpack.c.b16 %v1258, %v1254
    %v1351 = vpack.c.b16 %v1259, %v1255
    %v1352 = vpack.c.b16 %v1260, %v1256
    %v1353 = vpack.c.b16 %v1265, %v1261
    %v1354 = vpack.c.b16 %v1266, %v1262
    %v1355 = vpack.c.b16 %v1267, %v1263
    %v1356 = vpack.c.b16 %v1268, %v1264
    %v1357 = vpack.c.b16 %v1273, %v1269
    %v1358 = vpack.c.b16 %v1274, %v1270
    %v1359 = vpack.c.b16 %v1275, %v1271
    %v1360 = vpack.c.b16 %v1276, %v1272
    %v1361 = vpack.c.b16 %v1281, %v1277
    %v1362 = vpack.c.b16 %v1282, %v1278
    %v1363 = vpack.c.b16 %v1283, %v1279
    %v1364 = vpack.c.b16 %v1284, %v1280
    %v1365 = vpack.c.b16 %v1289, %v1285
    %v1366 = vpack.c.b16 %v1290, %v1286
    %v1367 = vpack.c.b16 %v1291, %v1287
    %v1368 = vpack.c.b16 %v1292, %v1288
    %v1369 = vpack.c.b16 %v1297, %v1293
    %v1370 = vpack.c.b16 %v1298, %v1294
    %v1371 = vpack.c.b16 %v1299, %v1295
    %v1372 = vpack.c.b16 %v1300, %v1296
    %v1373 = vpack.c.b16 %v1305, %v1301
    %v1374 = vpack.c.b16 %v1306, %v1302
    %v1375 = vpack.c.b16 %v1307, %v1303
    %v1376 = vpack.c.b16 %v1308, %v1304
    %v1377 = vpack.c.b16 %v1313, %v1309
    %v1378 = vpack.c.b16 %v1314, %v1310
    %v1379 = vpack.c.b16 %v1315, %v1311
    %v1380 = vpack.c.b16 %v1316, %v1312
    %1445 = vmatprep.subr.bf16.mxu0 %v1346
    %1446 = vmatpush1.bf16.msra.mxu0 %v1345
    %1447 = vmatprep.subr.bf16.mxu0 %v1342
    %1448 = vmatpush1.bf16.msra.mxu0 %v1341
    %1449 = vmatprep.subr.bf16.mxu0 %v1338
    %1450 = vmatpush1.bf16.msra.mxu0 %v1337
    %1451 = vmatprep.subr.bf16.mxu0 %v1334
    %1452 = vmatpush1.bf16.msra.mxu0 %v1333
    %1453 = vmatprep.subr.bf16.mxu0 %v1330
    %1454 = vmatpush1.bf16.msra.mxu0 %v1329
    %1455 = vmatprep.subr.bf16.mxu0 %v1326
    %1456 = vmatpush1.bf16.msra.mxu0 %v1325
    %1457 = vmatprep.subr.bf16.mxu0 %v1322
    %1458 = vmatpush1.bf16.msra.mxu0 %v1321
    %1459 = vmatprep.subr.bf16.mxu0 %v1318
    %1460 = vmatpush1.bf16.msra.mxu0 %v1317
    %1461 = vmatprep.subr.bf16.mxu0 %v1378
    %1462 = vmatpush2.bf16.msra.mxu0 %v1377
    %1463 = vmatprep.subr.bf16.mxu0 %v1374
    %1464 = vmatpush2.bf16.msra.mxu0 %v1373
    %1465 = vmatprep.subr.bf16.mxu0 %v1370
    %1466 = vmatpush2.bf16.msra.mxu0 %v1369
    %1467 = vmatprep.subr.bf16.mxu0 %v1366
    %1468 = vmatpush2.bf16.msra.mxu0 %v1365
    %1469 = vmatprep.subr.bf16.mxu0 %v1362
    %1470 = vmatpush2.bf16.msra.mxu0 %v1361
    %1471 = vmatprep.subr.bf16.mxu0 %v1358
    %1472 = vmatpush2.bf16.msra.mxu0 %v1357
    %1473 = vmatprep.subr.bf16.mxu0 %v1354
    %1474 = vmatpush2.bf16.msra.mxu0 %v1353
    %1475 = vmatprep.subr.bf16.mxu0 %v1350
    %1476 = vmatpush2.bf16.msra.mxu0 %v1349
    %1477 = vmatprep.mubr.bf16.mxu0 %v1038
    %1478 = vmatmul.mubr.bf16.gmra.mxu0 %v1037
    %v1479 = vpop.f32.mrf.mxu0
    %v1480 = vadd.f32 %v1108, %v1479
    %v1481 = vpop.f32.mrf.mxu0
    %v1482 = vadd.f32 %v1112, %v1481
    %v1483 = vpop.f32.mrf.mxu0
    %v1484 = vadd.f32 %v1108, %v1483
    %v1485 = vpop.f32.mrf.mxu0
    %v1486 = vadd.f32 %v1112, %v1485
    %1487 = vdwg.mxu0
    %1488 = vmatprep.subr.bf16.mxu0 %v1348
    %1489 = vmatpush1.bf16.msra.mxu0 %v1347
    %1490 = vmatprep.subr.bf16.mxu0 %v1344
    %1491 = vmatpush1.bf16.msra.mxu0 %v1343
    %1492 = vmatprep.subr.bf16.mxu0 %v1340
    %1493 = vmatpush1.bf16.msra.mxu0 %v1339
    %1494 = vmatprep.subr.bf16.mxu0 %v1336
    %1495 = vmatpush1.bf16.msra.mxu0 %v1335
    %1496 = vmatprep.subr.bf16.mxu0 %v1332
    %1497 = vmatpush1.bf16.msra.mxu0 %v1331
    %1498 = vmatprep.subr.bf16.mxu0 %v1328
    %1499 = vmatpush1.bf16.msra.mxu0 %v1327
    %1500 = vmatprep.subr.bf16.mxu0 %v1324
    %1501 = vmatpush1.bf16.msra.mxu0 %v1323
    %1502 = vmatprep.subr.bf16.mxu0 %v1320
    %1503 = vmatpush1.bf16.msra.mxu0 %v1319
    %1504 = vmatprep.subr.bf16.mxu0 %v1380
    %1505 = vmatpush2.bf16.msra.mxu0 %v1379
    %1506 = vmatprep.subr.bf16.mxu0 %v1376
    %1507 = vmatpush2.bf16.msra.mxu0 %v1375
    %1508 = vmatprep.subr.bf16.mxu0 %v1372
    %1509 = vmatpush2.bf16.msra.mxu0 %v1371
    %1510 = vmatprep.subr.bf16.mxu0 %v1368
    %1511 = vmatpush2.bf16.msra.mxu0 %v1367
    %1512 = vmatprep.subr.bf16.mxu0 %v1364
    %1513 = vmatpush2.bf16.msra.mxu0 %v1363
    %1514 = vmatprep.subr.bf16.mxu0 %v1360
    %1515 = vmatpush2.bf16.msra.mxu0 %v1359
    %1516 = vmatprep.subr.bf16.mxu0 %v1356
    %1517 = vmatpush2.bf16.msra.mxu0 %v1355
    %1518 = vmatprep.subr.bf16.mxu0 %v1352
    %1519 = vmatpush2.bf16.msra.mxu0 %v1351
    %1520 = vmatprep.mubr.bf16.mxu0 %v1038
    %1521 = vmatmul.mubr.bf16.gmra.mxu0 %v1037
    %v1522 = vpop.f32.mrf.mxu0
    %v1523 = vadd.f32 %v1116, %v1522
    %v1524 = vpop.f32.mrf.mxu0
    %v1525 = vadd.f32 %v1120, %v1524
    %v1526 = vpop.f32.mrf.mxu0
    %v1527 = vadd.f32 %v1116, %v1526
    %v1528 = vpop.f32.mrf.mxu0
    %v1529 = vadd.f32 %v1120, %v1528
    %1530 = vdwg.mxu0
    %v1531 = vmax.f32 %v1480, 0.0
    %v1532 = vmax.f32 %v1482, 0.0
    %v1533 = vmax.f32 %v1523, 0.0
    %v1534 = vmax.f32 %v1525, 0.0
    %v1535 = vmax.f32 %v1484, 0.0
    %v1536 = vmax.f32 %v1486, 0.0
    %v1537 = vmax.f32 %v1527, 0.0
    %v1538 = vmax.f32 %v1529, 0.0
    %v1539 = vpack.c.bf16 %v1535, %v1531
    %v1540 = vpack.c.bf16 %v1536, %v1532
    %v1541 = vpack.c.bf16 %v1537, %v1533
    %v1542 = vpack.c.bf16 %v1538, %v1534
    %v1543 = vld [vmem:[#allocation10] sm:$0xff]
    %v1544 = vld [vmem:[#allocation10 + $0x8] sm:$0xff]
    %v1545 = vld [vmem:[#allocation10 + $0x10] sm:$0xff]
    %v1546 = vld [vmem:[#allocation10 + $0x18] sm:$0xff]
    %v1547 = vld [vmem:[#allocation10 + $0x20] sm:$0xff]
    %v1548 = vld [vmem:[#allocation10 + $0x28] sm:$0xff]
    %v1549 = vld [vmem:[#allocation10 + $0x30] sm:$0xff]
    %v1550 = vld [vmem:[#allocation10 + $0x38] sm:$0xff]
    %v1551 = vld [vmem:[#allocation10 + $0x40] sm:$0xff]
    %v1552 = vld [vmem:[#allocation10 + $0x48] sm:$0xff]
    %v1553 = vld [vmem:[#allocation10 + $0x50] sm:$0xff]
    %v1554 = vld [vmem:[#allocation10 + $0x58] sm:$0xff]
    %v1555 = vld [vmem:[#allocation10 + $0x60] sm:$0xff]
    %v1556 = vld [vmem:[#allocation10 + $0x68] sm:$0xff]
    %v1557 = vld [vmem:[#allocation10 + $0x70] sm:$0xff]
    %v1558 = vld [vmem:[#allocation10 + $0x78] sm:$0xff]
    %v1559 = vld [vmem:[#allocation10 + $0x80] sm:$0xff]
    %v1560 = vld [vmem:[#allocation10 + $0x88] sm:$0xff]
    %v1561 = vld [vmem:[#allocation10 + $0x90] sm:$0xff]
    %v1562 = vld [vmem:[#allocation10 + $0x98] sm:$0xff]
    %v1563 = vld [vmem:[#allocation10 + $0xa0] sm:$0xff]
    %v1564 = vld [vmem:[#allocation10 + $0xa8] sm:$0xff]
    %v1565 = vld [vmem:[#allocation10 + $0xb0] sm:$0xff]
    %v1566 = vld [vmem:[#allocation10 + $0xb8] sm:$0xff]
    %v1567 = vld [vmem:[#allocation10 + $0xc0] sm:$0xff]
    %v1568 = vld [vmem:[#allocation10 + $0xc8] sm:$0xff]
    %v1569 = vld [vmem:[#allocation10 + $0xd0] sm:$0xff]
    %v1570 = vld [vmem:[#allocation10 + $0xd8] sm:$0xff]
    %v1571 = vld [vmem:[#allocation10 + $0xe0] sm:$0xff]
    %v1572 = vld [vmem:[#allocation10 + $0xe8] sm:$0xff]
    %v1573 = vld [vmem:[#allocation10 + $0xf0] sm:$0xff]
    %v1574 = vld [vmem:[#allocation10 + $0xf8] sm:$0xff]
    %v1575 = vld [vmem:[#allocation10 + $0x100] sm:$0xff]
    %v1576 = vld [vmem:[#allocation10 + $0x108] sm:$0xff]
    %v1577 = vld [vmem:[#allocation10 + $0x110] sm:$0xff]
    %v1578 = vld [vmem:[#allocation10 + $0x118] sm:$0xff]
    %v1579 = vld [vmem:[#allocation10 + $0x120] sm:$0xff]
    %v1580 = vld [vmem:[#allocation10 + $0x128] sm:$0xff]
    %v1581 = vld [vmem:[#allocation10 + $0x130] sm:$0xff]
    %v1582 = vld [vmem:[#allocation10 + $0x138] sm:$0xff]
    %v1583 = vld [vmem:[#allocation10 + $0x140] sm:$0xff]
    %v1584 = vld [vmem:[#allocation10 + $0x148] sm:$0xff]
    %v1585 = vld [vmem:[#allocation10 + $0x150] sm:$0xff]
    %v1586 = vld [vmem:[#allocation10 + $0x158] sm:$0xff]
    %v1587 = vld [vmem:[#allocation10 + $0x160] sm:$0xff]
    %v1588 = vld [vmem:[#allocation10 + $0x168] sm:$0xff]
    %v1589 = vld [vmem:[#allocation10 + $0x170] sm:$0xff]
    %v1590 = vld [vmem:[#allocation10 + $0x178] sm:$0xff]
    %v1591 = vld [vmem:[#allocation10 + $0x180] sm:$0xff]
    %v1592 = vld [vmem:[#allocation10 + $0x188] sm:$0xff]
    %v1593 = vld [vmem:[#allocation10 + $0x190] sm:$0xff]
    %v1594 = vld [vmem:[#allocation10 + $0x198] sm:$0xff]
    %v1595 = vld [vmem:[#allocation10 + $0x1a0] sm:$0xff]
    %v1596 = vld [vmem:[#allocation10 + $0x1a8] sm:$0xff]
    %v1597 = vld [vmem:[#allocation10 + $0x1b0] sm:$0xff]
    %v1598 = vld [vmem:[#allocation10 + $0x1b8] sm:$0xff]
    %v1599 = vld [vmem:[#allocation10 + $0x1c0] sm:$0xff]
    %v1600 = vld [vmem:[#allocation10 + $0x1c8] sm:$0xff]
    %v1601 = vld [vmem:[#allocation10 + $0x1d0] sm:$0xff]
    %v1602 = vld [vmem:[#allocation10 + $0x1d8] sm:$0xff]
    %v1603 = vld [vmem:[#allocation10 + $0x1e0] sm:$0xff]
    %v1604 = vld [vmem:[#allocation10 + $0x1e8] sm:$0xff]
    %v1605 = vld [vmem:[#allocation10 + $0x1f0] sm:$0xff]
    %v1606 = vld [vmem:[#allocation10 + $0x1f8] sm:$0xff]
    %v1607 = vld [vmem:[#allocation10 + $0x200] sm:$0xff]
    %v1608 = vld [vmem:[#allocation10 + $0x208] sm:$0xff]
    %v1609 = vld [vmem:[#allocation10 + $0x210] sm:$0xff]
    %v1610 = vld [vmem:[#allocation10 + $0x218] sm:$0xff]
    %v1611 = vld [vmem:[#allocation10 + $0x220] sm:$0xff]
    %v1612 = vld [vmem:[#allocation10 + $0x228] sm:$0xff]
    %v1613 = vld [vmem:[#allocation10 + $0x230] sm:$0xff]
    %v1614 = vld [vmem:[#allocation10 + $0x238] sm:$0xff]
    %v1615 = vld [vmem:[#allocation10 + $0x240] sm:$0xff]
    %v1616 = vld [vmem:[#allocation10 + $0x248] sm:$0xff]
    %v1617 = vld [vmem:[#allocation10 + $0x250] sm:$0xff]
    %v1618 = vld [vmem:[#allocation10 + $0x258] sm:$0xff]
    %v1619 = vld [vmem:[#allocation10 + $0x260] sm:$0xff]
    %v1620 = vld [vmem:[#allocation10 + $0x268] sm:$0xff]
    %v1621 = vld [vmem:[#allocation10 + $0x270] sm:$0xff]
    %v1622 = vld [vmem:[#allocation10 + $0x278] sm:$0xff]
    %v1623 = vld [vmem:[#allocation10 + $0x280] sm:$0xff]
    %v1624 = vld [vmem:[#allocation10 + $0x288] sm:$0xff]
    %v1625 = vld [vmem:[#allocation10 + $0x290] sm:$0xff]
    %v1626 = vld [vmem:[#allocation10 + $0x298] sm:$0xff]
    %v1627 = vld [vmem:[#allocation10 + $0x2a0] sm:$0xff]
    %v1628 = vld [vmem:[#allocation10 + $0x2a8] sm:$0xff]
    %v1629 = vld [vmem:[#allocation10 + $0x2b0] sm:$0xff]
    %v1630 = vld [vmem:[#allocation10 + $0x2b8] sm:$0xff]
    %v1631 = vld [vmem:[#allocation10 + $0x2c0] sm:$0xff]
    %v1632 = vld [vmem:[#allocation10 + $0x2c8] sm:$0xff]
    %v1633 = vld [vmem:[#allocation10 + $0x2d0] sm:$0xff]
    %v1634 = vld [vmem:[#allocation10 + $0x2d8] sm:$0xff]
    %v1635 = vld [vmem:[#allocation10 + $0x2e0] sm:$0xff]
    %v1636 = vld [vmem:[#allocation10 + $0x2e8] sm:$0xff]
    %v1637 = vld [vmem:[#allocation10 + $0x2f0] sm:$0xff]
    %v1638 = vld [vmem:[#allocation10 + $0x2f8] sm:$0xff]
    %v1639 = vld [vmem:[#allocation10 + $0x300] sm:$0xff]
    %v1640 = vld [vmem:[#allocation10 + $0x308] sm:$0xff]
    %v1641 = vld [vmem:[#allocation10 + $0x310] sm:$0xff]
    %v1642 = vld [vmem:[#allocation10 + $0x318] sm:$0xff]
    %v1643 = vld [vmem:[#allocation10 + $0x320] sm:$0xff]
    %v1644 = vld [vmem:[#allocation10 + $0x328] sm:$0xff]
    %v1645 = vld [vmem:[#allocation10 + $0x330] sm:$0xff]
    %v1646 = vld [vmem:[#allocation10 + $0x338] sm:$0xff]
    %v1647 = vld [vmem:[#allocation10 + $0x340] sm:$0xff]
    %v1648 = vld [vmem:[#allocation10 + $0x348] sm:$0xff]
    %v1649 = vld [vmem:[#allocation10 + $0x350] sm:$0xff]
    %v1650 = vld [vmem:[#allocation10 + $0x358] sm:$0xff]
    %v1651 = vld [vmem:[#allocation10 + $0x360] sm:$0xff]
    %v1652 = vld [vmem:[#allocation10 + $0x368] sm:$0xff]
    %v1653 = vld [vmem:[#allocation10 + $0x370] sm:$0xff]
    %v1654 = vld [vmem:[#allocation10 + $0x378] sm:$0xff]
    %v1655 = vld [vmem:[#allocation10 + $0x380] sm:$0xff]
    %v1656 = vld [vmem:[#allocation10 + $0x388] sm:$0xff]
    %v1657 = vld [vmem:[#allocation10 + $0x390] sm:$0xff]
    %v1658 = vld [vmem:[#allocation10 + $0x398] sm:$0xff]
    %v1659 = vld [vmem:[#allocation10 + $0x3a0] sm:$0xff]
    %v1660 = vld [vmem:[#allocation10 + $0x3a8] sm:$0xff]
    %v1661 = vld [vmem:[#allocation10 + $0x3b0] sm:$0xff]
    %v1662 = vld [vmem:[#allocation10 + $0x3b8] sm:$0xff]
    %v1663 = vld [vmem:[#allocation10 + $0x3c0] sm:$0xff]
    %v1664 = vld [vmem:[#allocation10 + $0x3c8] sm:$0xff]
    %v1665 = vld [vmem:[#allocation10 + $0x3d0] sm:$0xff]
    %v1666 = vld [vmem:[#allocation10 + $0x3d8] sm:$0xff]
    %v1667 = vld [vmem:[#allocation10 + $0x3e0] sm:$0xff]
    %v1668 = vld [vmem:[#allocation10 + $0x3e8] sm:$0xff]
    %v1669 = vld [vmem:[#allocation10 + $0x3f0] sm:$0xff]
    %v1670 = vld [vmem:[#allocation10 + $0x3f8] sm:$0xff]
    %v1671 = vld [vmem:[#allocation10 + $0x400] sm:$0xff]
    %v1672 = vld [vmem:[#allocation10 + $0x408] sm:$0xff]
    %v1673 = vld [vmem:[#allocation10 + $0x410] sm:$0xff]
    %v1674 = vld [vmem:[#allocation10 + $0x418] sm:$0xff]
    %v1675 = vld [vmem:[#allocation10 + $0x420] sm:$0xff]
    %v1676 = vld [vmem:[#allocation10 + $0x428] sm:$0xff]
    %v1677 = vld [vmem:[#allocation10 + $0x430] sm:$0xff]
    %v1678 = vld [vmem:[#allocation10 + $0x438] sm:$0xff]
    %v1679 = vld [vmem:[#allocation10 + $0x440] sm:$0xff]
    %v1680 = vld [vmem:[#allocation10 + $0x448] sm:$0xff]
    %v1681 = vld [vmem:[#allocation10 + $0x450] sm:$0xff]
    %v1682 = vld [vmem:[#allocation10 + $0x458] sm:$0xff]
    %v1683 = vld [vmem:[#allocation10 + $0x460] sm:$0xff]
    %v1684 = vld [vmem:[#allocation10 + $0x468] sm:$0xff]
    %v1685 = vld [vmem:[#allocation10 + $0x470] sm:$0xff]
    %v1686 = vld [vmem:[#allocation10 + $0x478] sm:$0xff]
    %v1687 = vld [vmem:[#allocation10 + $0x480] sm:$0xff]
    %v1688 = vld [vmem:[#allocation10 + $0x488] sm:$0xff]
    %v1689 = vld [vmem:[#allocation10 + $0x490] sm:$0xff]
    %v1690 = vld [vmem:[#allocation10 + $0x498] sm:$0xff]
    %v1691 = vld [vmem:[#allocation10 + $0x4a0] sm:$0xff]
    %v1692 = vld [vmem:[#allocation10 + $0x4a8] sm:$0xff]
    %v1693 = vld [vmem:[#allocation10 + $0x4b0] sm:$0xff]
    %v1694 = vld [vmem:[#allocation10 + $0x4b8] sm:$0xff]
    %v1695 = vld [vmem:[#allocation10 + $0x4c0] sm:$0xff]
    %v1696 = vld [vmem:[#allocation10 + $0x4c8] sm:$0xff]
    %v1697 = vld [vmem:[#allocation10 + $0x4d0] sm:$0xff]
    %v1698 = vld [vmem:[#allocation10 + $0x4d8] sm:$0xff]
    %v1699 = vld [vmem:[#allocation10 + $0x4e0] sm:$0xff]
    %v1700 = vld [vmem:[#allocation10 + $0x4e8] sm:$0xff]
    %v1701 = vld [vmem:[#allocation10 + $0x4f0] sm:$0xff]
    %v1702 = vld [vmem:[#allocation10 + $0x4f8] sm:$0xff]
    %v1703 = vld [vmem:[#allocation10 + $0x500] sm:$0xff]
    %v1704 = vld [vmem:[#allocation10 + $0x508] sm:$0xff]
    %v1705 = vld [vmem:[#allocation10 + $0x510] sm:$0xff]
    %v1706 = vld [vmem:[#allocation10 + $0x518] sm:$0xff]
    %v1707 = vld [vmem:[#allocation10 + $0x520] sm:$0xff]
    %v1708 = vld [vmem:[#allocation10 + $0x528] sm:$0xff]
    %v1709 = vld [vmem:[#allocation10 + $0x530] sm:$0xff]
    %v1710 = vld [vmem:[#allocation10 + $0x538] sm:$0xff]
    %v1711 = vld [vmem:[#allocation10 + $0x540] sm:$0xff]
    %v1712 = vld [vmem:[#allocation10 + $0x548] sm:$0xff]
    %v1713 = vld [vmem:[#allocation10 + $0x550] sm:$0xff]
    %v1714 = vld [vmem:[#allocation10 + $0x558] sm:$0xff]
    %v1715 = vld [vmem:[#allocation10 + $0x560] sm:$0xff]
    %v1716 = vld [vmem:[#allocation10 + $0x568] sm:$0xff]
    %v1717 = vld [vmem:[#allocation10 + $0x570] sm:$0xff]
    %v1718 = vld [vmem:[#allocation10 + $0x578] sm:$0xff]
    %v1719 = vld [vmem:[#allocation10 + $0x580] sm:$0xff]
    %v1720 = vld [vmem:[#allocation10 + $0x588] sm:$0xff]
    %v1721 = vld [vmem:[#allocation10 + $0x590] sm:$0xff]
    %v1722 = vld [vmem:[#allocation10 + $0x598] sm:$0xff]
    %v1723 = vld [vmem:[#allocation10 + $0x5a0] sm:$0xff]
    %v1724 = vld [vmem:[#allocation10 + $0x5a8] sm:$0xff]
    %v1725 = vld [vmem:[#allocation10 + $0x5b0] sm:$0xff]
    %v1726 = vld [vmem:[#allocation10 + $0x5b8] sm:$0xff]
    %v1727 = vld [vmem:[#allocation10 + $0x5c0] sm:$0xff]
    %v1728 = vld [vmem:[#allocation10 + $0x5c8] sm:$0xff]
    %v1729 = vld [vmem:[#allocation10 + $0x5d0] sm:$0xff]
    %v1730 = vld [vmem:[#allocation10 + $0x5d8] sm:$0xff]
    %v1731 = vld [vmem:[#allocation10 + $0x5e0] sm:$0xff]
    %v1732 = vld [vmem:[#allocation10 + $0x5e8] sm:$0xff]
    %v1733 = vld [vmem:[#allocation10 + $0x5f0] sm:$0xff]
    %v1734 = vld [vmem:[#allocation10 + $0x5f8] sm:$0xff]
    %v1735 = vld [vmem:[#allocation10 + $0x600] sm:$0xff]
    %v1736 = vld [vmem:[#allocation10 + $0x608] sm:$0xff]
    %v1737 = vld [vmem:[#allocation10 + $0x610] sm:$0xff]
    %v1738 = vld [vmem:[#allocation10 + $0x618] sm:$0xff]
    %v1739 = vld [vmem:[#allocation10 + $0x620] sm:$0xff]
    %v1740 = vld [vmem:[#allocation10 + $0x628] sm:$0xff]
    %v1741 = vld [vmem:[#allocation10 + $0x630] sm:$0xff]
    %v1742 = vld [vmem:[#allocation10 + $0x638] sm:$0xff]
    %v1743 = vld [vmem:[#allocation10 + $0x640] sm:$0xff]
    %v1744 = vld [vmem:[#allocation10 + $0x648] sm:$0xff]
    %v1745 = vld [vmem:[#allocation10 + $0x650] sm:$0xff]
    %v1746 = vld [vmem:[#allocation10 + $0x658] sm:$0xff]
    %v1747 = vld [vmem:[#allocation10 + $0x660] sm:$0xff]
    %v1748 = vld [vmem:[#allocation10 + $0x668] sm:$0xff]
    %v1749 = vld [vmem:[#allocation10 + $0x670] sm:$0xff]
    %v1750 = vld [vmem:[#allocation10 + $0x678] sm:$0xff]
    %v1751 = vld [vmem:[#allocation10 + $0x680] sm:$0xff]
    %v1752 = vld [vmem:[#allocation10 + $0x688] sm:$0xff]
    %v1753 = vld [vmem:[#allocation10 + $0x690] sm:$0xff]
    %v1754 = vld [vmem:[#allocation10 + $0x698] sm:$0xff]
    %v1755 = vld [vmem:[#allocation10 + $0x6a0] sm:$0xff]
    %v1756 = vld [vmem:[#allocation10 + $0x6a8] sm:$0xff]
    %v1757 = vld [vmem:[#allocation10 + $0x6b0] sm:$0xff]
    %v1758 = vld [vmem:[#allocation10 + $0x6b8] sm:$0xff]
    %v1759 = vld [vmem:[#allocation10 + $0x6c0] sm:$0xff]
    %v1760 = vld [vmem:[#allocation10 + $0x6c8] sm:$0xff]
    %v1761 = vld [vmem:[#allocation10 + $0x6d0] sm:$0xff]
    %v1762 = vld [vmem:[#allocation10 + $0x6d8] sm:$0xff]
    %v1763 = vld [vmem:[#allocation10 + $0x6e0] sm:$0xff]
    %v1764 = vld [vmem:[#allocation10 + $0x6e8] sm:$0xff]
    %v1765 = vld [vmem:[#allocation10 + $0x6f0] sm:$0xff]
    %v1766 = vld [vmem:[#allocation10 + $0x6f8] sm:$0xff]
    %v1767 = vld [vmem:[#allocation10 + $0x700] sm:$0xff]
    %v1768 = vld [vmem:[#allocation10 + $0x708] sm:$0xff]
    %v1769 = vld [vmem:[#allocation10 + $0x710] sm:$0xff]
    %v1770 = vld [vmem:[#allocation10 + $0x718] sm:$0xff]
    %v1771 = vld [vmem:[#allocation10 + $0x720] sm:$0xff]
    %v1772 = vld [vmem:[#allocation10 + $0x728] sm:$0xff]
    %v1773 = vld [vmem:[#allocation10 + $0x730] sm:$0xff]
    %v1774 = vld [vmem:[#allocation10 + $0x738] sm:$0xff]
    %v1775 = vld [vmem:[#allocation10 + $0x740] sm:$0xff]
    %v1776 = vld [vmem:[#allocation10 + $0x748] sm:$0xff]
    %v1777 = vld [vmem:[#allocation10 + $0x750] sm:$0xff]
    %v1778 = vld [vmem:[#allocation10 + $0x758] sm:$0xff]
    %v1779 = vld [vmem:[#allocation10 + $0x760] sm:$0xff]
    %v1780 = vld [vmem:[#allocation10 + $0x768] sm:$0xff]
    %v1781 = vld [vmem:[#allocation10 + $0x770] sm:$0xff]
    %v1782 = vld [vmem:[#allocation10 + $0x778] sm:$0xff]
    %v1783 = vld [vmem:[#allocation10 + $0x780] sm:$0xff]
    %v1784 = vld [vmem:[#allocation10 + $0x788] sm:$0xff]
    %v1785 = vld [vmem:[#allocation10 + $0x790] sm:$0xff]
    %v1786 = vld [vmem:[#allocation10 + $0x798] sm:$0xff]
    %v1787 = vld [vmem:[#allocation10 + $0x7a0] sm:$0xff]
    %v1788 = vld [vmem:[#allocation10 + $0x7a8] sm:$0xff]
    %v1789 = vld [vmem:[#allocation10 + $0x7b0] sm:$0xff]
    %v1790 = vld [vmem:[#allocation10 + $0x7b8] sm:$0xff]
    %v1791 = vld [vmem:[#allocation10 + $0x7c0] sm:$0xff]
    %v1792 = vld [vmem:[#allocation10 + $0x7c8] sm:$0xff]
    %v1793 = vld [vmem:[#allocation10 + $0x7d0] sm:$0xff]
    %v1794 = vld [vmem:[#allocation10 + $0x7d8] sm:$0xff]
    %v1795 = vld [vmem:[#allocation10 + $0x7e0] sm:$0xff]
    %v1796 = vld [vmem:[#allocation10 + $0x7e8] sm:$0xff]
    %v1797 = vld [vmem:[#allocation10 + $0x7f0] sm:$0xff]
    %v1798 = vld [vmem:[#allocation10 + $0x7f8] sm:$0xff]
    %v1799 = vld [vmem:[%s6] sm:$0xff]
    %v1801 = vlaneseq
    %v1802 = vshrl.u32 %v1801, 7
    %v1803 = vsub.s32 0, %v1802
    %v1804 = vrot.slane %v1799, %v1803
    %v1805 = vlaneseq
    %v1806 = vshrl.u32 %v1805, 7
    %v1807 = vsub.s32 1, %v1806
    %v1808 = vrot.slane %v1799, %v1807
    %v1809 = vlaneseq
    %v1810 = vshrl.u32 %v1809, 7
    %v1811 = vsub.s32 2, %v1810
    %v1812 = vrot.slane %v1799, %v1811
    %v1813 = vlaneseq
    %v1814 = vshrl.u32 %v1813, 7
    %v1815 = vsub.s32 3, %v1814
    %v1816 = vrot.slane %v1799, %v1815
    %v1817 = vlaneseq
    %v1818 = vshrl.u32 %v1817, 7
    %v1819 = vsub.s32 4, %v1818
    %v1820 = vrot.slane %v1799, %v1819
    %v1821 = vlaneseq
    %v1822 = vshrl.u32 %v1821, 7
    %v1823 = vsub.s32 5, %v1822
    %v1824 = vrot.slane %v1799, %v1823
    %v1825 = vlaneseq
    %v1826 = vshrl.u32 %v1825, 7
    %v1827 = vsub.s32 6, %v1826
    %v1828 = vrot.slane %v1799, %v1827
    %v1829 = vlaneseq
    %v1830 = vshrl.u32 %v1829, 7
    %v1831 = vsub.s32 7, %v1830
    %v1832 = vrot.slane %v1799, %v1831
    %v2097 = vunpack.c.l.b16 %v1543
    %v2098 = vunpack.c.h.b16 %v1543
    %v2099 = vunpack.c.l.b16 %v1544
    %v2100 = vunpack.c.h.b16 %v1544
    %v2101 = vunpack.c.l.b16 %v1545
    %v2102 = vunpack.c.h.b16 %v1545
    %v2103 = vunpack.c.l.b16 %v1546
    %v2104 = vunpack.c.h.b16 %v1546
    %v2105 = vunpack.c.l.b16 %v1547
    %v2106 = vunpack.c.h.b16 %v1547
    %v2107 = vunpack.c.l.b16 %v1548
    %v2108 = vunpack.c.h.b16 %v1548
    %v2109 = vunpack.c.l.b16 %v1549
    %v2110 = vunpack.c.h.b16 %v1549
    %v2111 = vunpack.c.l.b16 %v1550
    %v2112 = vunpack.c.h.b16 %v1550
    %v2113 = vunpack.c.l.b16 %v1551
    %v2114 = vunpack.c.h.b16 %v1551
    %v2115 = vunpack.c.l.b16 %v1552
    %v2116 = vunpack.c.h.b16 %v1552
    %v2117 = vunpack.c.l.b16 %v1553
    %v2118 = vunpack.c.h.b16 %v1553
    %v2119 = vunpack.c.l.b16 %v1554
    %v2120 = vunpack.c.h.b16 %v1554
    %v2121 = vunpack.c.l.b16 %v1555
    %v2122 = vunpack.c.h.b16 %v1555
    %v2123 = vunpack.c.l.b16 %v1556
    %v2124 = vunpack.c.h.b16 %v1556
    %v2125 = vunpack.c.l.b16 %v1557
    %v2126 = vunpack.c.h.b16 %v1557
    %v2127 = vunpack.c.l.b16 %v1558
    %v2128 = vunpack.c.h.b16 %v1558
    %v2129 = vunpack.c.l.b16 %v1559
    %v2130 = vunpack.c.h.b16 %v1559
    %v2131 = vunpack.c.l.b16 %v1560
    %v2132 = vunpack.c.h.b16 %v1560
    %v2133 = vunpack.c.l.b16 %v1561
    %v2134 = vunpack.c.h.b16 %v1561
    %v2135 = vunpack.c.l.b16 %v1562
    %v2136 = vunpack.c.h.b16 %v1562
    %v2137 = vunpack.c.l.b16 %v1563
    %v2138 = vunpack.c.h.b16 %v1563
    %v2139 = vunpack.c.l.b16 %v1564
    %v2140 = vunpack.c.h.b16 %v1564
    %v2141 = vunpack.c.l.b16 %v1565
    %v2142 = vunpack.c.h.b16 %v1565
    %v2143 = vunpack.c.l.b16 %v1566
    %v2144 = vunpack.c.h.b16 %v1566
    %v2145 = vunpack.c.l.b16 %v1567
    %v2146 = vunpack.c.h.b16 %v1567
    %v2147 = vunpack.c.l.b16 %v1568
    %v2148 = vunpack.c.h.b16 %v1568
    %v2149 = vunpack.c.l.b16 %v1569
    %v2150 = vunpack.c.h.b16 %v1569
    %v2151 = vunpack.c.l.b16 %v1570
    %v2152 = vunpack.c.h.b16 %v1570
    %v2153 = vunpack.c.l.b16 %v1571
    %v2154 = vunpack.c.h.b16 %v1571
    %v2155 = vunpack.c.l.b16 %v1572
    %v2156 = vunpack.c.h.b16 %v1572
    %v2157 = vunpack.c.l.b16 %v1573
    %v2158 = vunpack.c.h.b16 %v1573
    %v2159 = vunpack.c.l.b16 %v1574
    %v2160 = vunpack.c.h.b16 %v1574
    %v2161 = vunpack.c.l.b16 %v1575
    %v2162 = vunpack.c.h.b16 %v1575
    %v2163 = vunpack.c.l.b16 %v1576
    %v2164 = vunpack.c.h.b16 %v1576
    %v2165 = vunpack.c.l.b16 %v1577
    %v2166 = vunpack.c.h.b16 %v1577
    %v2167 = vunpack.c.l.b16 %v1578
    %v2168 = vunpack.c.h.b16 %v1578
    %v2169 = vunpack.c.l.b16 %v1579
    %v2170 = vunpack.c.h.b16 %v1579
    %v2171 = vunpack.c.l.b16 %v1580
    %v2172 = vunpack.c.h.b16 %v1580
    %v2173 = vunpack.c.l.b16 %v1581
    %v2174 = vunpack.c.h.b16 %v1581
    %v2175 = vunpack.c.l.b16 %v1582
    %v2176 = vunpack.c.h.b16 %v1582
    %v2177 = vunpack.c.l.b16 %v1583
    %v2178 = vunpack.c.h.b16 %v1583
    %v2179 = vunpack.c.l.b16 %v1584
    %v2180 = vunpack.c.h.b16 %v1584
    %v2181 = vunpack.c.l.b16 %v1585
    %v2182 = vunpack.c.h.b16 %v1585
    %v2183 = vunpack.c.l.b16 %v1586
    %v2184 = vunpack.c.h.b16 %v1586
    %v2185 = vunpack.c.l.b16 %v1587
    %v2186 = vunpack.c.h.b16 %v1587
    %v2187 = vunpack.c.l.b16 %v1588
    %v2188 = vunpack.c.h.b16 %v1588
    %v2189 = vunpack.c.l.b16 %v1589
    %v2190 = vunpack.c.h.b16 %v1589
    %v2191 = vunpack.c.l.b16 %v1590
    %v2192 = vunpack.c.h.b16 %v1590
    %v2193 = vunpack.c.l.b16 %v1591
    %v2194 = vunpack.c.h.b16 %v1591
    %v2195 = vunpack.c.l.b16 %v1592
    %v2196 = vunpack.c.h.b16 %v1592
    %v2197 = vunpack.c.l.b16 %v1593
    %v2198 = vunpack.c.h.b16 %v1593
    %v2199 = vunpack.c.l.b16 %v1594
    %v2200 = vunpack.c.h.b16 %v1594
    %v2201 = vunpack.c.l.b16 %v1595
    %v2202 = vunpack.c.h.b16 %v1595
    %v2203 = vunpack.c.l.b16 %v1596
    %v2204 = vunpack.c.h.b16 %v1596
    %v2205 = vunpack.c.l.b16 %v1597
    %v2206 = vunpack.c.h.b16 %v1597
    %v2207 = vunpack.c.l.b16 %v1598
    %v2208 = vunpack.c.h.b16 %v1598
    %v2209 = vunpack.c.l.b16 %v1599
    %v2210 = vunpack.c.h.b16 %v1599
    %v2211 = vunpack.c.l.b16 %v1600
    %v2212 = vunpack.c.h.b16 %v1600
    %v2213 = vunpack.c.l.b16 %v1601
    %v2214 = vunpack.c.h.b16 %v1601
    %v2215 = vunpack.c.l.b16 %v1602
    %v2216 = vunpack.c.h.b16 %v1602
    %v2217 = vunpack.c.l.b16 %v1603
    %v2218 = vunpack.c.h.b16 %v1603
    %v2219 = vunpack.c.l.b16 %v1604
    %v2220 = vunpack.c.h.b16 %v1604
    %v2221 = vunpack.c.l.b16 %v1605
    %v2222 = vunpack.c.h.b16 %v1605
    %v2223 = vunpack.c.l.b16 %v1606
    %v2224 = vunpack.c.h.b16 %v1606
    %v2225 = vunpack.c.l.b16 %v1607
    %v2226 = vunpack.c.h.b16 %v1607
    %v2227 = vunpack.c.l.b16 %v1608
    %v2228 = vunpack.c.h.b16 %v1608
    %v2229 = vunpack.c.l.b16 %v1609
    %v2230 = vunpack.c.h.b16 %v1609
    %v2231 = vunpack.c.l.b16 %v1610
    %v2232 = vunpack.c.h.b16 %v1610
    %v2233 = vunpack.c.l.b16 %v1611
    %v2234 = vunpack.c.h.b16 %v1611
    %v2235 = vunpack.c.l.b16 %v1612
    %v2236 = vunpack.c.h.b16 %v1612
    %v2237 = vunpack.c.l.b16 %v1613
    %v2238 = vunpack.c.h.b16 %v1613
    %v2239 = vunpack.c.l.b16 %v1614
    %v2240 = vunpack.c.h.b16 %v1614
    %v2241 = vunpack.c.l.b16 %v1615
    %v2242 = vunpack.c.h.b16 %v1615
    %v2243 = vunpack.c.l.b16 %v1616
    %v2244 = vunpack.c.h.b16 %v1616
    %v2245 = vunpack.c.l.b16 %v1617
    %v2246 = vunpack.c.h.b16 %v1617
    %v2247 = vunpack.c.l.b16 %v1618
    %v2248 = vunpack.c.h.b16 %v1618
    %v2249 = vunpack.c.l.b16 %v1619
    %v2250 = vunpack.c.h.b16 %v1619
    %v2251 = vunpack.c.l.b16 %v1620
    %v2252 = vunpack.c.h.b16 %v1620
    %v2253 = vunpack.c.l.b16 %v1621
    %v2254 = vunpack.c.h.b16 %v1621
    %v2255 = vunpack.c.l.b16 %v1622
    %v2256 = vunpack.c.h.b16 %v1622
    %v2257 = vunpack.c.l.b16 %v1623
    %v2258 = vunpack.c.h.b16 %v1623
    %v2259 = vunpack.c.l.b16 %v1624
    %v2260 = vunpack.c.h.b16 %v1624
    %v2261 = vunpack.c.l.b16 %v1625
    %v2262 = vunpack.c.h.b16 %v1625
    %v2263 = vunpack.c.l.b16 %v1626
    %v2264 = vunpack.c.h.b16 %v1626
    %v2265 = vunpack.c.l.b16 %v1627
    %v2266 = vunpack.c.h.b16 %v1627
    %v2267 = vunpack.c.l.b16 %v1628
    %v2268 = vunpack.c.h.b16 %v1628
    %v2269 = vunpack.c.l.b16 %v1629
    %v2270 = vunpack.c.h.b16 %v1629
    %v2271 = vunpack.c.l.b16 %v1630
    %v2272 = vunpack.c.h.b16 %v1630
    %v2273 = vunpack.c.l.b16 %v1631
    %v2274 = vunpack.c.h.b16 %v1631
    %v2275 = vunpack.c.l.b16 %v1632
    %v2276 = vunpack.c.h.b16 %v1632
    %v2277 = vunpack.c.l.b16 %v1633
    %v2278 = vunpack.c.h.b16 %v1633
    %v2279 = vunpack.c.l.b16 %v1634
    %v2280 = vunpack.c.h.b16 %v1634
    %v2281 = vunpack.c.l.b16 %v1635
    %v2282 = vunpack.c.h.b16 %v1635
    %v2283 = vunpack.c.l.b16 %v1636
    %v2284 = vunpack.c.h.b16 %v1636
    %v2285 = vunpack.c.l.b16 %v1637
    %v2286 = vunpack.c.h.b16 %v1637
    %v2287 = vunpack.c.l.b16 %v1638
    %v2288 = vunpack.c.h.b16 %v1638
    %v2289 = vunpack.c.l.b16 %v1639
    %v2290 = vunpack.c.h.b16 %v1639
    %v2291 = vunpack.c.l.b16 %v1640
    %v2292 = vunpack.c.h.b16 %v1640
    %v2293 = vunpack.c.l.b16 %v1641
    %v2294 = vunpack.c.h.b16 %v1641
    %v2295 = vunpack.c.l.b16 %v1642
    %v2296 = vunpack.c.h.b16 %v1642
    %v2297 = vunpack.c.l.b16 %v1643
    %v2298 = vunpack.c.h.b16 %v1643
    %v2299 = vunpack.c.l.b16 %v1644
    %v2300 = vunpack.c.h.b16 %v1644
    %v2301 = vunpack.c.l.b16 %v1645
    %v2302 = vunpack.c.h.b16 %v1645
    %v2303 = vunpack.c.l.b16 %v1646
    %v2304 = vunpack.c.h.b16 %v1646
    %v2305 = vunpack.c.l.b16 %v1647
    %v2306 = vunpack.c.h.b16 %v1647
    %v2307 = vunpack.c.l.b16 %v1648
    %v2308 = vunpack.c.h.b16 %v1648
    %v2309 = vunpack.c.l.b16 %v1649
    %v2310 = vunpack.c.h.b16 %v1649
    %v2311 = vunpack.c.l.b16 %v1650
    %v2312 = vunpack.c.h.b16 %v1650
    %v2313 = vunpack.c.l.b16 %v1651
    %v2314 = vunpack.c.h.b16 %v1651
    %v2315 = vunpack.c.l.b16 %v1652
    %v2316 = vunpack.c.h.b16 %v1652
    %v2317 = vunpack.c.l.b16 %v1653
    %v2318 = vunpack.c.h.b16 %v1653
    %v2319 = vunpack.c.l.b16 %v1654
    %v2320 = vunpack.c.h.b16 %v1654
    %v2321 = vunpack.c.l.b16 %v1655
    %v2322 = vunpack.c.h.b16 %v1655
    %v2323 = vunpack.c.l.b16 %v1656
    %v2324 = vunpack.c.h.b16 %v1656
    %v2325 = vunpack.c.l.b16 %v1657
    %v2326 = vunpack.c.h.b16 %v1657
    %v2327 = vunpack.c.l.b16 %v1658
    %v2328 = vunpack.c.h.b16 %v1658
    %v2329 = vunpack.c.l.b16 %v1659
    %v2330 = vunpack.c.h.b16 %v1659
    %v2331 = vunpack.c.l.b16 %v1660
    %v2332 = vunpack.c.h.b16 %v1660
    %v2333 = vunpack.c.l.b16 %v1661
    %v2334 = vunpack.c.h.b16 %v1661
    %v2335 = vunpack.c.l.b16 %v1662
    %v2336 = vunpack.c.h.b16 %v1662
    %v2337 = vunpack.c.l.b16 %v1663
    %v2338 = vunpack.c.h.b16 %v1663
    %v2339 = vunpack.c.l.b16 %v1664
    %v2340 = vunpack.c.h.b16 %v1664
    %v2341 = vunpack.c.l.b16 %v1665
    %v2342 = vunpack.c.h.b16 %v1665
    %v2343 = vunpack.c.l.b16 %v1666
    %v2344 = vunpack.c.h.b16 %v1666
    %v2345 = vunpack.c.l.b16 %v1667
    %v2346 = vunpack.c.h.b16 %v1667
    %v2347 = vunpack.c.l.b16 %v1668
    %v2348 = vunpack.c.h.b16 %v1668
    %v2349 = vunpack.c.l.b16 %v1669
    %v2350 = vunpack.c.h.b16 %v1669
    %v2351 = vunpack.c.l.b16 %v1670
    %v2352 = vunpack.c.h.b16 %v1670
    %v2353 = vunpack.c.l.b16 %v1671
    %v2354 = vunpack.c.h.b16 %v1671
    %v2355 = vunpack.c.l.b16 %v1672
    %v2356 = vunpack.c.h.b16 %v1672
    %v2357 = vunpack.c.l.b16 %v1673
    %v2358 = vunpack.c.h.b16 %v1673
    %v2359 = vunpack.c.l.b16 %v1674
    %v2360 = vunpack.c.h.b16 %v1674
    %v2361 = vunpack.c.l.b16 %v1675
    %v2362 = vunpack.c.h.b16 %v1675
    %v2363 = vunpack.c.l.b16 %v1676
    %v2364 = vunpack.c.h.b16 %v1676
    %v2365 = vunpack.c.l.b16 %v1677
    %v2366 = vunpack.c.h.b16 %v1677
    %v2367 = vunpack.c.l.b16 %v1678
    %v2368 = vunpack.c.h.b16 %v1678
    %v2369 = vunpack.c.l.b16 %v1679
    %v2370 = vunpack.c.h.b16 %v1679
    %v2371 = vunpack.c.l.b16 %v1680
    %v2372 = vunpack.c.h.b16 %v1680
    %v2373 = vunpack.c.l.b16 %v1681
    %v2374 = vunpack.c.h.b16 %v1681
    %v2375 = vunpack.c.l.b16 %v1682
    %v2376 = vunpack.c.h.b16 %v1682
    %v2377 = vunpack.c.l.b16 %v1683
    %v2378 = vunpack.c.h.b16 %v1683
    %v2379 = vunpack.c.l.b16 %v1684
    %v2380 = vunpack.c.h.b16 %v1684
    %v2381 = vunpack.c.l.b16 %v1685
    %v2382 = vunpack.c.h.b16 %v1685
    %v2383 = vunpack.c.l.b16 %v1686
    %v2384 = vunpack.c.h.b16 %v1686
    %v2385 = vunpack.c.l.b16 %v1687
    %v2386 = vunpack.c.h.b16 %v1687
    %v2387 = vunpack.c.l.b16 %v1688
    %v2388 = vunpack.c.h.b16 %v1688
    %v2389 = vunpack.c.l.b16 %v1689
    %v2390 = vunpack.c.h.b16 %v1689
    %v2391 = vunpack.c.l.b16 %v1690
    %v2392 = vunpack.c.h.b16 %v1690
    %v2393 = vunpack.c.l.b16 %v1691
    %v2394 = vunpack.c.h.b16 %v1691
    %v2395 = vunpack.c.l.b16 %v1692
    %v2396 = vunpack.c.h.b16 %v1692
    %v2397 = vunpack.c.l.b16 %v1693
    %v2398 = vunpack.c.h.b16 %v1693
    %v2399 = vunpack.c.l.b16 %v1694
    %v2400 = vunpack.c.h.b16 %v1694
    %v2401 = vunpack.c.l.b16 %v1695
    %v2402 = vunpack.c.h.b16 %v1695
    %v2403 = vunpack.c.l.b16 %v1696
    %v2404 = vunpack.c.h.b16 %v1696
    %v2405 = vunpack.c.l.b16 %v1697
    %v2406 = vunpack.c.h.b16 %v1697
    %v2407 = vunpack.c.l.b16 %v1698
    %v2408 = vunpack.c.h.b16 %v1698
    %v2409 = vunpack.c.l.b16 %v1699
    %v2410 = vunpack.c.h.b16 %v1699
    %v2411 = vunpack.c.l.b16 %v1700
    %v2412 = vunpack.c.h.b16 %v1700
    %v2413 = vunpack.c.l.b16 %v1701
    %v2414 = vunpack.c.h.b16 %v1701
    %v2415 = vunpack.c.l.b16 %v1702
    %v2416 = vunpack.c.h.b16 %v1702
    %v2417 = vunpack.c.l.b16 %v1703
    %v2418 = vunpack.c.h.b16 %v1703
    %v2419 = vunpack.c.l.b16 %v1704
    %v2420 = vunpack.c.h.b16 %v1704
    %v2421 = vunpack.c.l.b16 %v1705
    %v2422 = vunpack.c.h.b16 %v1705
    %v2423 = vunpack.c.l.b16 %v1706
    %v2424 = vunpack.c.h.b16 %v1706
    %v2425 = vunpack.c.l.b16 %v1707
    %v2426 = vunpack.c.h.b16 %v1707
    %v2427 = vunpack.c.l.b16 %v1708
    %v2428 = vunpack.c.h.b16 %v1708
    %v2429 = vunpack.c.l.b16 %v1709
    %v2430 = vunpack.c.h.b16 %v1709
    %v2431 = vunpack.c.l.b16 %v1710
    %v2432 = vunpack.c.h.b16 %v1710
    %v2433 = vunpack.c.l.b16 %v1711
    %v2434 = vunpack.c.h.b16 %v1711
    %v2435 = vunpack.c.l.b16 %v1712
    %v2436 = vunpack.c.h.b16 %v1712
    %v2437 = vunpack.c.l.b16 %v1713
    %v2438 = vunpack.c.h.b16 %v1713
    %v2439 = vunpack.c.l.b16 %v1714
    %v2440 = vunpack.c.h.b16 %v1714
    %v2441 = vunpack.c.l.b16 %v1715
    %v2442 = vunpack.c.h.b16 %v1715
    %v2443 = vunpack.c.l.b16 %v1716
    %v2444 = vunpack.c.h.b16 %v1716
    %v2445 = vunpack.c.l.b16 %v1717
    %v2446 = vunpack.c.h.b16 %v1717
    %v2447 = vunpack.c.l.b16 %v1718
    %v2448 = vunpack.c.h.b16 %v1718
    %v2449 = vunpack.c.l.b16 %v1719
    %v2450 = vunpack.c.h.b16 %v1719
    %v2451 = vunpack.c.l.b16 %v1720
    %v2452 = vunpack.c.h.b16 %v1720
    %v2453 = vunpack.c.l.b16 %v1721
    %v2454 = vunpack.c.h.b16 %v1721
    %v2455 = vunpack.c.l.b16 %v1722
    %v2456 = vunpack.c.h.b16 %v1722
    %v2457 = vunpack.c.l.b16 %v1723
    %v2458 = vunpack.c.h.b16 %v1723
    %v2459 = vunpack.c.l.b16 %v1724
    %v2460 = vunpack.c.h.b16 %v1724
    %v2461 = vunpack.c.l.b16 %v1725
    %v2462 = vunpack.c.h.b16 %v1725
    %v2463 = vunpack.c.l.b16 %v1726
    %v2464 = vunpack.c.h.b16 %v1726
    %v2465 = vunpack.c.l.b16 %v1727
    %v2466 = vunpack.c.h.b16 %v1727
    %v2467 = vunpack.c.l.b16 %v1728
    %v2468 = vunpack.c.h.b16 %v1728
    %v2469 = vunpack.c.l.b16 %v1729
    %v2470 = vunpack.c.h.b16 %v1729
    %v2471 = vunpack.c.l.b16 %v1730
    %v2472 = vunpack.c.h.b16 %v1730
    %v2473 = vunpack.c.l.b16 %v1731
    %v2474 = vunpack.c.h.b16 %v1731
    %v2475 = vunpack.c.l.b16 %v1732
    %v2476 = vunpack.c.h.b16 %v1732
    %v2477 = vunpack.c.l.b16 %v1733
    %v2478 = vunpack.c.h.b16 %v1733
    %v2479 = vunpack.c.l.b16 %v1734
    %v2480 = vunpack.c.h.b16 %v1734
    %v2481 = vunpack.c.l.b16 %v1735
    %v2482 = vunpack.c.h.b16 %v1735
    %v2483 = vunpack.c.l.b16 %v1736
    %v2484 = vunpack.c.h.b16 %v1736
    %v2485 = vunpack.c.l.b16 %v1737
    %v2486 = vunpack.c.h.b16 %v1737
    %v2487 = vunpack.c.l.b16 %v1738
    %v2488 = vunpack.c.h.b16 %v1738
    %v2489 = vunpack.c.l.b16 %v1739
    %v2490 = vunpack.c.h.b16 %v1739
    %v2491 = vunpack.c.l.b16 %v1740
    %v2492 = vunpack.c.h.b16 %v1740
    %v2493 = vunpack.c.l.b16 %v1741
    %v2494 = vunpack.c.h.b16 %v1741
    %v2495 = vunpack.c.l.b16 %v1742
    %v2496 = vunpack.c.h.b16 %v1742
    %v2497 = vunpack.c.l.b16 %v1743
    %v2498 = vunpack.c.h.b16 %v1743
    %v2499 = vunpack.c.l.b16 %v1744
    %v2500 = vunpack.c.h.b16 %v1744
    %v2501 = vunpack.c.l.b16 %v1745
    %v2502 = vunpack.c.h.b16 %v1745
    %v2503 = vunpack.c.l.b16 %v1746
    %v2504 = vunpack.c.h.b16 %v1746
    %v2505 = vunpack.c.l.b16 %v1747
    %v2506 = vunpack.c.h.b16 %v1747
    %v2507 = vunpack.c.l.b16 %v1748
    %v2508 = vunpack.c.h.b16 %v1748
    %v2509 = vunpack.c.l.b16 %v1749
    %v2510 = vunpack.c.h.b16 %v1749
    %v2511 = vunpack.c.l.b16 %v1750
    %v2512 = vunpack.c.h.b16 %v1750
    %v2513 = vunpack.c.l.b16 %v1751
    %v2514 = vunpack.c.h.b16 %v1751
    %v2515 = vunpack.c.l.b16 %v1752
    %v2516 = vunpack.c.h.b16 %v1752
    %v2517 = vunpack.c.l.b16 %v1753
    %v2518 = vunpack.c.h.b16 %v1753
    %v2519 = vunpack.c.l.b16 %v1754
    %v2520 = vunpack.c.h.b16 %v1754
    %v2521 = vunpack.c.l.b16 %v1755
    %v2522 = vunpack.c.h.b16 %v1755
    %v2523 = vunpack.c.l.b16 %v1756
    %v2524 = vunpack.c.h.b16 %v1756
    %v2525 = vunpack.c.l.b16 %v1757
    %v2526 = vunpack.c.h.b16 %v1757
    %v2527 = vunpack.c.l.b16 %v1758
    %v2528 = vunpack.c.h.b16 %v1758
    %v2529 = vunpack.c.l.b16 %v1759
    %v2530 = vunpack.c.h.b16 %v1759
    %v2531 = vunpack.c.l.b16 %v1760
    %v2532 = vunpack.c.h.b16 %v1760
    %v2533 = vunpack.c.l.b16 %v1761
    %v2534 = vunpack.c.h.b16 %v1761
    %v2535 = vunpack.c.l.b16 %v1762
    %v2536 = vunpack.c.h.b16 %v1762
    %v2537 = vunpack.c.l.b16 %v1763
    %v2538 = vunpack.c.h.b16 %v1763
    %v2539 = vunpack.c.l.b16 %v1764
    %v2540 = vunpack.c.h.b16 %v1764
    %v2541 = vunpack.c.l.b16 %v1765
    %v2542 = vunpack.c.h.b16 %v1765
    %v2543 = vunpack.c.l.b16 %v1766
    %v2544 = vunpack.c.h.b16 %v1766
    %v2545 = vunpack.c.l.b16 %v1767
    %v2546 = vunpack.c.h.b16 %v1767
    %v2547 = vunpack.c.l.b16 %v1768
    %v2548 = vunpack.c.h.b16 %v1768
    %v2549 = vunpack.c.l.b16 %v1769
    %v2550 = vunpack.c.h.b16 %v1769
    %v2551 = vunpack.c.l.b16 %v1770
    %v2552 = vunpack.c.h.b16 %v1770
    %v2553 = vunpack.c.l.b16 %v1771
    %v2554 = vunpack.c.h.b16 %v1771
    %v2555 = vunpack.c.l.b16 %v1772
    %v2556 = vunpack.c.h.b16 %v1772
    %v2557 = vunpack.c.l.b16 %v1773
    %v2558 = vunpack.c.h.b16 %v1773
    %v2559 = vunpack.c.l.b16 %v1774
    %v2560 = vunpack.c.h.b16 %v1774
    %v2561 = vunpack.c.l.b16 %v1775
    %v2562 = vunpack.c.h.b16 %v1775
    %v2563 = vunpack.c.l.b16 %v1776
    %v2564 = vunpack.c.h.b16 %v1776
    %v2565 = vunpack.c.l.b16 %v1777
    %v2566 = vunpack.c.h.b16 %v1777
    %v2567 = vunpack.c.l.b16 %v1778
    %v2568 = vunpack.c.h.b16 %v1778
    %v2569 = vunpack.c.l.b16 %v1779
    %v2570 = vunpack.c.h.b16 %v1779
    %v2571 = vunpack.c.l.b16 %v1780
    %v2572 = vunpack.c.h.b16 %v1780
    %v2573 = vunpack.c.l.b16 %v1781
    %v2574 = vunpack.c.h.b16 %v1781
    %v2575 = vunpack.c.l.b16 %v1782
    %v2576 = vunpack.c.h.b16 %v1782
    %v2577 = vunpack.c.l.b16 %v1783
    %v2578 = vunpack.c.h.b16 %v1783
    %v2579 = vunpack.c.l.b16 %v1784
    %v2580 = vunpack.c.h.b16 %v1784
    %v2581 = vunpack.c.l.b16 %v1785
    %v2582 = vunpack.c.h.b16 %v1785
    %v2583 = vunpack.c.l.b16 %v1786
    %v2584 = vunpack.c.h.b16 %v1786
    %v2585 = vunpack.c.l.b16 %v1787
    %v2586 = vunpack.c.h.b16 %v1787
    %v2587 = vunpack.c.l.b16 %v1788
    %v2588 = vunpack.c.h.b16 %v1788
    %v2589 = vunpack.c.l.b16 %v1789
    %v2590 = vunpack.c.h.b16 %v1789
    %v2591 = vunpack.c.l.b16 %v1790
    %v2592 = vunpack.c.h.b16 %v1790
    %v2593 = vunpack.c.l.b16 %v1791
    %v2594 = vunpack.c.h.b16 %v1791
    %v2595 = vunpack.c.l.b16 %v1792
    %v2596 = vunpack.c.h.b16 %v1792
    %v2597 = vunpack.c.l.b16 %v1793
    %v2598 = vunpack.c.h.b16 %v1793
    %v2599 = vunpack.c.l.b16 %v1794
    %v2600 = vunpack.c.h.b16 %v1794
    %v2601 = vunpack.c.l.b16 %v1795
    %v2602 = vunpack.c.h.b16 %v1795
    %v2603 = vunpack.c.l.b16 %v1796
    %v2604 = vunpack.c.h.b16 %v1796
    %v2605 = vunpack.c.l.b16 %v1797
    %v2606 = vunpack.c.h.b16 %v1797
    %v2607 = vunpack.c.l.b16 %v1798
    %v2608 = vunpack.c.h.b16 %v1798
    %v2609 = vpack.c.b16 %v2105, %v2097
    %v2610 = vpack.c.b16 %v2106, %v2098
    %v2611 = vpack.c.b16 %v2107, %v2099
    %v2612 = vpack.c.b16 %v2108, %v2100
    %v2613 = vpack.c.b16 %v2109, %v2101
    %v2614 = vpack.c.b16 %v2110, %v2102
    %v2615 = vpack.c.b16 %v2111, %v2103
    %v2616 = vpack.c.b16 %v2112, %v2104
    %v2617 = vpack.c.b16 %v2121, %v2113
    %v2618 = vpack.c.b16 %v2122, %v2114
    %v2619 = vpack.c.b16 %v2123, %v2115
    %v2620 = vpack.c.b16 %v2124, %v2116
    %v2621 = vpack.c.b16 %v2125, %v2117
    %v2622 = vpack.c.b16 %v2126, %v2118
    %v2623 = vpack.c.b16 %v2127, %v2119
    %v2624 = vpack.c.b16 %v2128, %v2120
    %v2625 = vpack.c.b16 %v2137, %v2129
    %v2626 = vpack.c.b16 %v2138, %v2130
    %v2627 = vpack.c.b16 %v2139, %v2131
    %v2628 = vpack.c.b16 %v2140, %v2132
    %v2629 = vpack.c.b16 %v2141, %v2133
    %v2630 = vpack.c.b16 %v2142, %v2134
    %v2631 = vpack.c.b16 %v2143, %v2135
    %v2632 = vpack.c.b16 %v2144, %v2136
    %v2633 = vpack.c.b16 %v2153, %v2145
    %v2634 = vpack.c.b16 %v2154, %v2146
    %v2635 = vpack.c.b16 %v2155, %v2147
    %v2636 = vpack.c.b16 %v2156, %v2148
    %v2637 = vpack.c.b16 %v2157, %v2149
    %v2638 = vpack.c.b16 %v2158, %v2150
    %v2639 = vpack.c.b16 %v2159, %v2151
    %v2640 = vpack.c.b16 %v2160, %v2152
    %v2641 = vpack.c.b16 %v2169, %v2161
    %v2642 = vpack.c.b16 %v2170, %v2162
    %v2643 = vpack.c.b16 %v2171, %v2163
    %v2644 = vpack.c.b16 %v2172, %v2164
    %v2645 = vpack.c.b16 %v2173, %v2165
    %v2646 = vpack.c.b16 %v2174, %v2166
    %v2647 = vpack.c.b16 %v2175, %v2167
    %v2648 = vpack.c.b16 %v2176, %v2168
    %v2649 = vpack.c.b16 %v2185, %v2177
    %v2650 = vpack.c.b16 %v2186, %v2178
    %v2651 = vpack.c.b16 %v2187, %v2179
    %v2652 = vpack.c.b16 %v2188, %v2180
    %v2653 = vpack.c.b16 %v2189, %v2181
    %v2654 = vpack.c.b16 %v2190, %v2182
    %v2655 = vpack.c.b16 %v2191, %v2183
    %v2656 = vpack.c.b16 %v2192, %v2184
    %v2657 = vpack.c.b16 %v2201, %v2193
    %v2658 = vpack.c.b16 %v2202, %v2194
    %v2659 = vpack.c.b16 %v2203, %v2195
    %v2660 = vpack.c.b16 %v2204, %v2196
    %v2661 = vpack.c.b16 %v2205, %v2197
    %v2662 = vpack.c.b16 %v2206, %v2198
    %v2663 = vpack.c.b16 %v2207, %v2199
    %v2664 = vpack.c.b16 %v2208, %v2200
    %v2665 = vpack.c.b16 %v2217, %v2209
    %v2666 = vpack.c.b16 %v2218, %v2210
    %v2667 = vpack.c.b16 %v2219, %v2211
    %v2668 = vpack.c.b16 %v2220, %v2212
    %v2669 = vpack.c.b16 %v2221, %v2213
    %v2670 = vpack.c.b16 %v2222, %v2214
    %v2671 = vpack.c.b16 %v2223, %v2215
    %v2672 = vpack.c.b16 %v2224, %v2216
    %v2673 = vpack.c.b16 %v2233, %v2225
    %v2674 = vpack.c.b16 %v2234, %v2226
    %v2675 = vpack.c.b16 %v2235, %v2227
    %v2676 = vpack.c.b16 %v2236, %v2228
    %v2677 = vpack.c.b16 %v2237, %v2229
    %v2678 = vpack.c.b16 %v2238, %v2230
    %v2679 = vpack.c.b16 %v2239, %v2231
    %v2680 = vpack.c.b16 %v2240, %v2232
    %v2681 = vpack.c.b16 %v2249, %v2241
    %v2682 = vpack.c.b16 %v2250, %v2242
    %v2683 = vpack.c.b16 %v2251, %v2243
    %v2684 = vpack.c.b16 %v2252, %v2244
    %v2685 = vpack.c.b16 %v2253, %v2245
    %v2686 = vpack.c.b16 %v2254, %v2246
    %v2687 = vpack.c.b16 %v2255, %v2247
    %v2688 = vpack.c.b16 %v2256, %v2248
    %v2689 = vpack.c.b16 %v2265, %v2257
    %v2690 = vpack.c.b16 %v2266, %v2258
    %v2691 = vpack.c.b16 %v2267, %v2259
    %v2692 = vpack.c.b16 %v2268, %v2260
    %v2693 = vpack.c.b16 %v2269, %v2261
    %v2694 = vpack.c.b16 %v2270, %v2262
    %v2695 = vpack.c.b16 %v2271, %v2263
    %v2696 = vpack.c.b16 %v2272, %v2264
    %v2697 = vpack.c.b16 %v2281, %v2273
    %v2698 = vpack.c.b16 %v2282, %v2274
    %v2699 = vpack.c.b16 %v2283, %v2275
    %v2700 = vpack.c.b16 %v2284, %v2276
    %v2701 = vpack.c.b16 %v2285, %v2277
    %v2702 = vpack.c.b16 %v2286, %v2278
    %v2703 = vpack.c.b16 %v2287, %v2279
    %v2704 = vpack.c.b16 %v2288, %v2280
    %v2705 = vpack.c.b16 %v2297, %v2289
    %v2706 = vpack.c.b16 %v2298, %v2290
    %v2707 = vpack.c.b16 %v2299, %v2291
    %v2708 = vpack.c.b16 %v2300, %v2292
    %v2709 = vpack.c.b16 %v2301, %v2293
    %v2710 = vpack.c.b16 %v2302, %v2294
    %v2711 = vpack.c.b16 %v2303, %v2295
    %v2712 = vpack.c.b16 %v2304, %v2296
    %v2713 = vpack.c.b16 %v2313, %v2305
    %v2714 = vpack.c.b16 %v2314, %v2306
    %v2715 = vpack.c.b16 %v2315, %v2307
    %v2716 = vpack.c.b16 %v2316, %v2308
    %v2717 = vpack.c.b16 %v2317, %v2309
    %v2718 = vpack.c.b16 %v2318, %v2310
    %v2719 = vpack.c.b16 %v2319, %v2311
    %v2720 = vpack.c.b16 %v2320, %v2312
    %v2721 = vpack.c.b16 %v2329, %v2321
    %v2722 = vpack.c.b16 %v2330, %v2322
    %v2723 = vpack.c.b16 %v2331, %v2323
    %v2724 = vpack.c.b16 %v2332, %v2324
    %v2725 = vpack.c.b16 %v2333, %v2325
    %v2726 = vpack.c.b16 %v2334, %v2326
    %v2727 = vpack.c.b16 %v2335, %v2327
    %v2728 = vpack.c.b16 %v2336, %v2328
    %v2729 = vpack.c.b16 %v2345, %v2337
    %v2730 = vpack.c.b16 %v2346, %v2338
    %v2731 = vpack.c.b16 %v2347, %v2339
    %v2732 = vpack.c.b16 %v2348, %v2340
    %v2733 = vpack.c.b16 %v2349, %v2341
    %v2734 = vpack.c.b16 %v2350, %v2342
    %v2735 = vpack.c.b16 %v2351, %v2343
    %v2736 = vpack.c.b16 %v2352, %v2344
    %v2737 = vpack.c.b16 %v2361, %v2353
    %v2738 = vpack.c.b16 %v2362, %v2354
    %v2739 = vpack.c.b16 %v2363, %v2355
    %v2740 = vpack.c.b16 %v2364, %v2356
    %v2741 = vpack.c.b16 %v2365, %v2357
    %v2742 = vpack.c.b16 %v2366, %v2358
    %v2743 = vpack.c.b16 %v2367, %v2359
    %v2744 = vpack.c.b16 %v2368, %v2360
    %v2745 = vpack.c.b16 %v2377, %v2369
    %v2746 = vpack.c.b16 %v2378, %v2370
    %v2747 = vpack.c.b16 %v2379, %v2371
    %v2748 = vpack.c.b16 %v2380, %v2372
    %v2749 = vpack.c.b16 %v2381, %v2373
    %v2750 = vpack.c.b16 %v2382, %v2374
    %v2751 = vpack.c.b16 %v2383, %v2375
    %v2752 = vpack.c.b16 %v2384, %v2376
    %v2753 = vpack.c.b16 %v2393, %v2385
    %v2754 = vpack.c.b16 %v2394, %v2386
    %v2755 = vpack.c.b16 %v2395, %v2387
    %v2756 = vpack.c.b16 %v2396, %v2388
    %v2757 = vpack.c.b16 %v2397, %v2389
    %v2758 = vpack.c.b16 %v2398, %v2390
    %v2759 = vpack.c.b16 %v2399, %v2391
    %v2760 = vpack.c.b16 %v2400, %v2392
    %v2761 = vpack.c.b16 %v2409, %v2401
    %v2762 = vpack.c.b16 %v2410, %v2402
    %v2763 = vpack.c.b16 %v2411, %v2403
    %v2764 = vpack.c.b16 %v2412, %v2404
    %v2765 = vpack.c.b16 %v2413, %v2405
    %v2766 = vpack.c.b16 %v2414, %v2406
    %v2767 = vpack.c.b16 %v2415, %v2407
    %v2768 = vpack.c.b16 %v2416, %v2408
    %v2769 = vpack.c.b16 %v2425, %v2417
    %v2770 = vpack.c.b16 %v2426, %v2418
    %v2771 = vpack.c.b16 %v2427, %v2419
    %v2772 = vpack.c.b16 %v2428, %v2420
    %v2773 = vpack.c.b16 %v2429, %v2421
    %v2774 = vpack.c.b16 %v2430, %v2422
    %v2775 = vpack.c.b16 %v2431, %v2423
    %v2776 = vpack.c.b16 %v2432, %v2424
    %v2777 = vpack.c.b16 %v2441, %v2433
    %v2778 = vpack.c.b16 %v2442, %v2434
    %v2779 = vpack.c.b16 %v2443, %v2435
    %v2780 = vpack.c.b16 %v2444, %v2436
    %v2781 = vpack.c.b16 %v2445, %v2437
    %v2782 = vpack.c.b16 %v2446, %v2438
    %v2783 = vpack.c.b16 %v2447, %v2439
    %v2784 = vpack.c.b16 %v2448, %v2440
    %v2785 = vpack.c.b16 %v2457, %v2449
    %v2786 = vpack.c.b16 %v2458, %v2450
    %v2787 = vpack.c.b16 %v2459, %v2451
    %v2788 = vpack.c.b16 %v2460, %v2452
    %v2789 = vpack.c.b16 %v2461, %v2453
    %v2790 = vpack.c.b16 %v2462, %v2454
    %v2791 = vpack.c.b16 %v2463, %v2455
    %v2792 = vpack.c.b16 %v2464, %v2456
    %v2793 = vpack.c.b16 %v2473, %v2465
    %v2794 = vpack.c.b16 %v2474, %v2466
    %v2795 = vpack.c.b16 %v2475, %v2467
    %v2796 = vpack.c.b16 %v2476, %v2468
    %v2797 = vpack.c.b16 %v2477, %v2469
    %v2798 = vpack.c.b16 %v2478, %v2470
    %v2799 = vpack.c.b16 %v2479, %v2471
    %v2800 = vpack.c.b16 %v2480, %v2472
    %v2801 = vpack.c.b16 %v2489, %v2481
    %v2802 = vpack.c.b16 %v2490, %v2482
    %v2803 = vpack.c.b16 %v2491, %v2483
    %v2804 = vpack.c.b16 %v2492, %v2484
    %v2805 = vpack.c.b16 %v2493, %v2485
    %v2806 = vpack.c.b16 %v2494, %v2486
    %v2807 = vpack.c.b16 %v2495, %v2487
    %v2808 = vpack.c.b16 %v2496, %v2488
    %v2809 = vpack.c.b16 %v2505, %v2497
    %v2810 = vpack.c.b16 %v2506, %v2498
    %v2811 = vpack.c.b16 %v2507, %v2499
    %v2812 = vpack.c.b16 %v2508, %v2500
    %v2813 = vpack.c.b16 %v2509, %v2501
    %v2814 = vpack.c.b16 %v2510, %v2502
    %v2815 = vpack.c.b16 %v2511, %v2503
    %v2816 = vpack.c.b16 %v2512, %v2504
    %v2817 = vpack.c.b16 %v2521, %v2513
    %v2818 = vpack.c.b16 %v2522, %v2514
    %v2819 = vpack.c.b16 %v2523, %v2515
    %v2820 = vpack.c.b16 %v2524, %v2516
    %v2821 = vpack.c.b16 %v2525, %v2517
    %v2822 = vpack.c.b16 %v2526, %v2518
    %v2823 = vpack.c.b16 %v2527, %v2519
    %v2824 = vpack.c.b16 %v2528, %v2520
    %v2825 = vpack.c.b16 %v2537, %v2529
    %v2826 = vpack.c.b16 %v2538, %v2530
    %v2827 = vpack.c.b16 %v2539, %v2531
    %v2828 = vpack.c.b16 %v2540, %v2532
    %v2829 = vpack.c.b16 %v2541, %v2533
    %v2830 = vpack.c.b16 %v2542, %v2534
    %v2831 = vpack.c.b16 %v2543, %v2535
    %v2832 = vpack.c.b16 %v2544, %v2536
    %v2833 = vpack.c.b16 %v2553, %v2545
    %v2834 = vpack.c.b16 %v2554, %v2546
    %v2835 = vpack.c.b16 %v2555, %v2547
    %v2836 = vpack.c.b16 %v2556, %v2548
    %v2837 = vpack.c.b16 %v2557, %v2549
    %v2838 = vpack.c.b16 %v2558, %v2550
    %v2839 = vpack.c.b16 %v2559, %v2551
    %v2840 = vpack.c.b16 %v2560, %v2552
    %v2841 = vpack.c.b16 %v2569, %v2561
    %v2842 = vpack.c.b16 %v2570, %v2562
    %v2843 = vpack.c.b16 %v2571, %v2563
    %v2844 = vpack.c.b16 %v2572, %v2564
    %v2845 = vpack.c.b16 %v2573, %v2565
    %v2846 = vpack.c.b16 %v2574, %v2566
    %v2847 = vpack.c.b16 %v2575, %v2567
    %v2848 = vpack.c.b16 %v2576, %v2568
    %v2849 = vpack.c.b16 %v2585, %v2577
    %v2850 = vpack.c.b16 %v2586, %v2578
    %v2851 = vpack.c.b16 %v2587, %v2579
    %v2852 = vpack.c.b16 %v2588, %v2580
    %v2853 = vpack.c.b16 %v2589, %v2581
    %v2854 = vpack.c.b16 %v2590, %v2582
    %v2855 = vpack.c.b16 %v2591, %v2583
    %v2856 = vpack.c.b16 %v2592, %v2584
    %v2857 = vpack.c.b16 %v2601, %v2593
    %v2858 = vpack.c.b16 %v2602, %v2594
    %v2859 = vpack.c.b16 %v2603, %v2595
    %v2860 = vpack.c.b16 %v2604, %v2596
    %v2861 = vpack.c.b16 %v2605, %v2597
    %v2862 = vpack.c.b16 %v2606, %v2598
    %v2863 = vpack.c.b16 %v2607, %v2599
    %v2864 = vpack.c.b16 %v2608, %v2600
    %3121 = vmatprep.subr.bf16.mxu0 %v2666
    %3122 = vmatpush1.bf16.msra.mxu0 %v2665
    %3123 = vmatprep.subr.bf16.mxu0 %v2658
    %3124 = vmatpush1.bf16.msra.mxu0 %v2657
    %3125 = vmatprep.subr.bf16.mxu0 %v2650
    %3126 = vmatpush1.bf16.msra.mxu0 %v2649
    %3127 = vmatprep.subr.bf16.mxu0 %v2642
    %3128 = vmatpush1.bf16.msra.mxu0 %v2641
    %3129 = vmatprep.subr.bf16.mxu0 %v2634
    %3130 = vmatpush1.bf16.msra.mxu0 %v2633
    %3131 = vmatprep.subr.bf16.mxu0 %v2626
    %3132 = vmatpush1.bf16.msra.mxu0 %v2625
    %3133 = vmatprep.subr.bf16.mxu0 %v2618
    %3134 = vmatpush1.bf16.msra.mxu0 %v2617
    %3135 = vmatprep.subr.bf16.mxu0 %v2610
    %3136 = vmatpush1.bf16.msra.mxu0 %v2609
    %3137 = vmatprep.subr.bf16.mxu0 %v2730
    %3138 = vmatpush2.bf16.msra.mxu0 %v2729
    %3139 = vmatprep.subr.bf16.mxu0 %v2722
    %3140 = vmatpush2.bf16.msra.mxu0 %v2721
    %3141 = vmatprep.subr.bf16.mxu0 %v2714
    %3142 = vmatpush2.bf16.msra.mxu0 %v2713
    %3143 = vmatprep.subr.bf16.mxu0 %v2706
    %3144 = vmatpush2.bf16.msra.mxu0 %v2705
    %3145 = vmatprep.subr.bf16.mxu0 %v2698
    %3146 = vmatpush2.bf16.msra.mxu0 %v2697
    %3147 = vmatprep.subr.bf16.mxu0 %v2690
    %3148 = vmatpush2.bf16.msra.mxu0 %v2689
    %3149 = vmatprep.subr.bf16.mxu0 %v2682
    %3150 = vmatpush2.bf16.msra.mxu0 %v2681
    %3151 = vmatprep.subr.bf16.mxu0 %v2674
    %3152 = vmatpush2.bf16.msra.mxu0 %v2673
    %3153 = vmatprep.mubr.bf16.mxu0 %v1540
    %3154 = vmatmul.mubr.bf16.gmra.mxu0 %v1539
    %v3155 = vpop.f32.mrf.mxu0
    %v3156 = vadd.f32 %v1804, %v3155
    %v3157 = vpop.f32.mrf.mxu0
    %v3158 = vadd.f32 %v1808, %v3157
    %v3159 = vpop.f32.mrf.mxu0
    %v3160 = vadd.f32 %v1804, %v3159
    %v3161 = vpop.f32.mrf.mxu0
    %v3162 = vadd.f32 %v1808, %v3161
    %3163 = vdwg.mxu0
    %3164 = vmatprep.subr.bf16.mxu0 %v2794
    %3165 = vmatpush1.bf16.msra.mxu0 %v2793
    %3166 = vmatprep.subr.bf16.mxu0 %v2786
    %3167 = vmatpush1.bf16.msra.mxu0 %v2785
    %3168 = vmatprep.subr.bf16.mxu0 %v2778
    %3169 = vmatpush1.bf16.msra.mxu0 %v2777
    %3170 = vmatprep.subr.bf16.mxu0 %v2770
    %3171 = vmatpush1.bf16.msra.mxu0 %v2769
    %3172 = vmatprep.subr.bf16.mxu0 %v2762
    %3173 = vmatpush1.bf16.msra.mxu0 %v2761
    %3174 = vmatprep.subr.bf16.mxu0 %v2754
    %3175 = vmatpush1.bf16.msra.mxu0 %v2753
    %3176 = vmatprep.subr.bf16.mxu0 %v2746
    %3177 = vmatpush1.bf16.msra.mxu0 %v2745
    %3178 = vmatprep.subr.bf16.mxu0 %v2738
    %3179 = vmatpush1.bf16.msra.mxu0 %v2737
    %3180 = vmatprep.subr.bf16.mxu0 %v2858
    %3181 = vmatpush2.bf16.msra.mxu0 %v2857
    %3182 = vmatprep.subr.bf16.mxu0 %v2850
    %3183 = vmatpush2.bf16.msra.mxu0 %v2849
    %3184 = vmatprep.subr.bf16.mxu0 %v2842
    %3185 = vmatpush2.bf16.msra.mxu0 %v2841
    %3186 = vmatprep.subr.bf16.mxu0 %v2834
    %3187 = vmatpush2.bf16.msra.mxu0 %v2833
    %3188 = vmatprep.subr.bf16.mxu0 %v2826
    %3189 = vmatpush2.bf16.msra.mxu0 %v2825
    %3190 = vmatprep.subr.bf16.mxu0 %v2818
    %3191 = vmatpush2.bf16.msra.mxu0 %v2817
    %3192 = vmatprep.subr.bf16.mxu0 %v2810
    %3193 = vmatpush2.bf16.msra.mxu0 %v2809
    %3194 = vmatprep.subr.bf16.mxu0 %v2802
    %3195 = vmatpush2.bf16.msra.mxu0 %v2801
    %3196 = vmatprep.mubr.bf16.mxu0 %v1542
    %3197 = vmatmul.mubr.bf16.gmra.mxu0 %v1541
    %v3198 = vpop.f32.mrf.mxu0
    %v3199 = vadd.f32 %v3156, %v3198
    %v3200 = vpop.f32.mrf.mxu0
    %v3201 = vadd.f32 %v3158, %v3200
    %v3202 = vpop.f32.mrf.mxu0
    %v3203 = vadd.f32 %v3160, %v3202
    %v3204 = vpop.f32.mrf.mxu0
    %v3205 = vadd.f32 %v3162, %v3204
    %3206 = vdwg.mxu0
    %3207 = vmatprep.subr.bf16.mxu0 %v2668
    %3208 = vmatpush1.bf16.msra.mxu0 %v2667
    %3209 = vmatprep.subr.bf16.mxu0 %v2660
    %3210 = vmatpush1.bf16.msra.mxu0 %v2659
    %3211 = vmatprep.subr.bf16.mxu0 %v2652
    %3212 = vmatpush1.bf16.msra.mxu0 %v2651
    %3213 = vmatprep.subr.bf16.mxu0 %v2644
    %3214 = vmatpush1.bf16.msra.mxu0 %v2643
    %3215 = vmatprep.subr.bf16.mxu0 %v2636
    %3216 = vmatpush1.bf16.msra.mxu0 %v2635
    %3217 = vmatprep.subr.bf16.mxu0 %v2628
    %3218 = vmatpush1.bf16.msra.mxu0 %v2627
    %3219 = vmatprep.subr.bf16.mxu0 %v2620
    %3220 = vmatpush1.bf16.msra.mxu0 %v2619
    %3221 = vmatprep.subr.bf16.mxu0 %v2612
    %3222 = vmatpush1.bf16.msra.mxu0 %v2611
    %3223 = vmatprep.subr.bf16.mxu0 %v2732
    %3224 = vmatpush2.bf16.msra.mxu0 %v2731
    %3225 = vmatprep.subr.bf16.mxu0 %v2724
    %3226 = vmatpush2.bf16.msra.mxu0 %v2723
    %3227 = vmatprep.subr.bf16.mxu0 %v2716
    %3228 = vmatpush2.bf16.msra.mxu0 %v2715
    %3229 = vmatprep.subr.bf16.mxu0 %v2708
    %3230 = vmatpush2.bf16.msra.mxu0 %v2707
    %3231 = vmatprep.subr.bf16.mxu0 %v2700
    %3232 = vmatpush2.bf16.msra.mxu0 %v2699
    %3233 = vmatprep.subr.bf16.mxu0 %v2692
    %3234 = vmatpush2.bf16.msra.mxu0 %v2691
    %3235 = vmatprep.subr.bf16.mxu0 %v2684
    %3236 = vmatpush2.bf16.msra.mxu0 %v2683
    %3237 = vmatprep.subr.bf16.mxu0 %v2676
    %3238 = vmatpush2.bf16.msra.mxu0 %v2675
    %3239 = vmatprep.mubr.bf16.mxu0 %v1540
    %3240 = vmatmul.mubr.bf16.gmra.mxu0 %v1539
    %v3241 = vpop.f32.mrf.mxu0
    %v3242 = vadd.f32 %v1812, %v3241
    %v3243 = vpop.f32.mrf.mxu0
    %v3244 = vadd.f32 %v1816, %v3243
    %v3245 = vpop.f32.mrf.mxu0
    %v3246 = vadd.f32 %v1812, %v3245
    %v3247 = vpop.f32.mrf.mxu0
    %v3248 = vadd.f32 %v1816, %v3247
    %3249 = vdwg.mxu0
    %3250 = vmatprep.subr.bf16.mxu0 %v2796
    %3251 = vmatpush1.bf16.msra.mxu0 %v2795
    %3252 = vmatprep.subr.bf16.mxu0 %v2788
    %3253 = vmatpush1.bf16.msra.mxu0 %v2787
    %3254 = vmatprep.subr.bf16.mxu0 %v2780
    %3255 = vmatpush1.bf16.msra.mxu0 %v2779
    %3256 = vmatprep.subr.bf16.mxu0 %v2772
    %3257 = vmatpush1.bf16.msra.mxu0 %v2771
    %3258 = vmatprep.subr.bf16.mxu0 %v2764
    %3259 = vmatpush1.bf16.msra.mxu0 %v2763
    %3260 = vmatprep.subr.bf16.mxu0 %v2756
    %3261 = vmatpush1.bf16.msra.mxu0 %v2755
    %3262 = vmatprep.subr.bf16.mxu0 %v2748
    %3263 = vmatpush1.bf16.msra.mxu0 %v2747
    %3264 = vmatprep.subr.bf16.mxu0 %v2740
    %3265 = vmatpush1.bf16.msra.mxu0 %v2739
    %3266 = vmatprep.subr.bf16.mxu0 %v2860
    %3267 = vmatpush2.bf16.msra.mxu0 %v2859
    %3268 = vmatprep.subr.bf16.mxu0 %v2852
    %3269 = vmatpush2.bf16.msra.mxu0 %v2851
    %3270 = vmatprep.subr.bf16.mxu0 %v2844
    %3271 = vmatpush2.bf16.msra.mxu0 %v2843
    %3272 = vmatprep.subr.bf16.mxu0 %v2836
    %3273 = vmatpush2.bf16.msra.mxu0 %v2835
    %3274 = vmatprep.subr.bf16.mxu0 %v2828
    %3275 = vmatpush2.bf16.msra.mxu0 %v2827
    %3276 = vmatprep.subr.bf16.mxu0 %v2820
    %3277 = vmatpush2.bf16.msra.mxu0 %v2819
    %3278 = vmatprep.subr.bf16.mxu0 %v2812
    %3279 = vmatpush2.bf16.msra.mxu0 %v2811
    %3280 = vmatprep.subr.bf16.mxu0 %v2804
    %3281 = vmatpush2.bf16.msra.mxu0 %v2803
    %3282 = vmatprep.mubr.bf16.mxu0 %v1542
    %3283 = vmatmul.mubr.bf16.gmra.mxu0 %v1541
    %v3284 = vpop.f32.mrf.mxu0
    %v3285 = vadd.f32 %v3242, %v3284
    %v3286 = vpop.f32.mrf.mxu0
    %v3287 = vadd.f32 %v3244, %v3286
    %v3288 = vpop.f32.mrf.mxu0
    %v3289 = vadd.f32 %v3246, %v3288
    %v3290 = vpop.f32.mrf.mxu0
    %v3291 = vadd.f32 %v3248, %v3290
    %3292 = vdwg.mxu0
    %3293 = vmatprep.subr.bf16.mxu0 %v2670
    %3294 = vmatpush1.bf16.msra.mxu0 %v2669
    %3295 = vmatprep.subr.bf16.mxu0 %v2662
    %3296 = vmatpush1.bf16.msra.mxu0 %v2661
    %3297 = vmatprep.subr.bf16.mxu0 %v2654
    %3298 = vmatpush1.bf16.msra.mxu0 %v2653
    %3299 = vmatprep.subr.bf16.mxu0 %v2646
    %3300 = vmatpush1.bf16.msra.mxu0 %v2645
    %3301 = vmatprep.subr.bf16.mxu0 %v2638
    %3302 = vmatpush1.bf16.msra.mxu0 %v2637
    %3303 = vmatprep.subr.bf16.mxu0 %v2630
    %3304 = vmatpush1.bf16.msra.mxu0 %v2629
    %3305 = vmatprep.subr.bf16.mxu0 %v2622
    %3306 = vmatpush1.bf16.msra.mxu0 %v2621
    %3307 = vmatprep.subr.bf16.mxu0 %v2614
    %3308 = vmatpush1.bf16.msra.mxu0 %v2613
    %3309 = vmatprep.subr.bf16.mxu0 %v2734
    %3310 = vmatpush2.bf16.msra.mxu0 %v2733
    %3311 = vmatprep.subr.bf16.mxu0 %v2726
    %3312 = vmatpush2.bf16.msra.mxu0 %v2725
    %3313 = vmatprep.subr.bf16.mxu0 %v2718
    %3314 = vmatpush2.bf16.msra.mxu0 %v2717
    %3315 = vmatprep.subr.bf16.mxu0 %v2710
    %3316 = vmatpush2.bf16.msra.mxu0 %v2709
    %3317 = vmatprep.subr.bf16.mxu0 %v2702
    %3318 = vmatpush2.bf16.msra.mxu0 %v2701
    %3319 = vmatprep.subr.bf16.mxu0 %v2694
    %3320 = vmatpush2.bf16.msra.mxu0 %v2693
    %3321 = vmatprep.subr.bf16.mxu0 %v2686
    %3322 = vmatpush2.bf16.msra.mxu0 %v2685
    %3323 = vmatprep.subr.bf16.mxu0 %v2678
    %3324 = vmatpush2.bf16.msra.mxu0 %v2677
    %3325 = vmatprep.mubr.bf16.mxu0 %v1540
    %3326 = vmatmul.mubr.bf16.gmra.mxu0 %v1539
    %v3327 = vpop.f32.mrf.mxu0
    %v3328 = vadd.f32 %v1820, %v3327
    %v3329 = vpop.f32.mrf.mxu0
    %v3330 = vadd.f32 %v1824, %v3329
    %v3331 = vpop.f32.mrf.mxu0
    %v3332 = vadd.f32 %v1820, %v3331
    %v3333 = vpop.f32.mrf.mxu0
    %v3334 = vadd.f32 %v1824, %v3333
    %3335 = vdwg.mxu0
    %3336 = vmatprep.subr.bf16.mxu0 %v2798
    %3337 = vmatpush1.bf16.msra.mxu0 %v2797
    %3338 = vmatprep.subr.bf16.mxu0 %v2790
    %3339 = vmatpush1.bf16.msra.mxu0 %v2789
    %3340 = vmatprep.subr.bf16.mxu0 %v2782
    %3341 = vmatpush1.bf16.msra.mxu0 %v2781
    %3342 = vmatprep.subr.bf16.mxu0 %v2774
    %3343 = vmatpush1.bf16.msra.mxu0 %v2773
    %3344 = vmatprep.subr.bf16.mxu0 %v2766
    %3345 = vmatpush1.bf16.msra.mxu0 %v2765
    %3346 = vmatprep.subr.bf16.mxu0 %v2758
    %3347 = vmatpush1.bf16.msra.mxu0 %v2757
    %3348 = vmatprep.subr.bf16.mxu0 %v2750
    %3349 = vmatpush1.bf16.msra.mxu0 %v2749
    %3350 = vmatprep.subr.bf16.mxu0 %v2742
    %3351 = vmatpush1.bf16.msra.mxu0 %v2741
    %3352 = vmatprep.subr.bf16.mxu0 %v2862
    %3353 = vmatpush2.bf16.msra.mxu0 %v2861
    %3354 = vmatprep.subr.bf16.mxu0 %v2854
    %3355 = vmatpush2.bf16.msra.mxu0 %v2853
    %3356 = vmatprep.subr.bf16.mxu0 %v2846
    %3357 = vmatpush2.bf16.msra.mxu0 %v2845
    %3358 = vmatprep.subr.bf16.mxu0 %v2838
    %3359 = vmatpush2.bf16.msra.mxu0 %v2837
    %3360 = vmatprep.subr.bf16.mxu0 %v2830
    %3361 = vmatpush2.bf16.msra.mxu0 %v2829
    %3362 = vmatprep.subr.bf16.mxu0 %v2822
    %3363 = vmatpush2.bf16.msra.mxu0 %v2821
    %3364 = vmatprep.subr.bf16.mxu0 %v2814
    %3365 = vmatpush2.bf16.msra.mxu0 %v2813
    %3366 = vmatprep.subr.bf16.mxu0 %v2806
    %3367 = vmatpush2.bf16.msra.mxu0 %v2805
    %3368 = vmatprep.mubr.bf16.mxu0 %v1542
    %3369 = vmatmul.mubr.bf16.gmra.mxu0 %v1541
    %v3370 = vpop.f32.mrf.mxu0
    %v3371 = vadd.f32 %v3328, %v3370
    %v3372 = vpop.f32.mrf.mxu0
    %v3373 = vadd.f32 %v3330, %v3372
    %v3374 = vpop.f32.mrf.mxu0
    %v3375 = vadd.f32 %v3332, %v3374
    %v3376 = vpop.f32.mrf.mxu0
    %v3377 = vadd.f32 %v3334, %v3376
    %3378 = vdwg.mxu0
    %3379 = vmatprep.subr.bf16.mxu0 %v2672
    %3380 = vmatpush1.bf16.msra.mxu0 %v2671
    %3381 = vmatprep.subr.bf16.mxu0 %v2664
    %3382 = vmatpush1.bf16.msra.mxu0 %v2663
    %3383 = vmatprep.subr.bf16.mxu0 %v2656
    %3384 = vmatpush1.bf16.msra.mxu0 %v2655
    %3385 = vmatprep.subr.bf16.mxu0 %v2648
    %3386 = vmatpush1.bf16.msra.mxu0 %v2647
    %3387 = vmatprep.subr.bf16.mxu0 %v2640
    %3388 = vmatpush1.bf16.msra.mxu0 %v2639
    %3389 = vmatprep.subr.bf16.mxu0 %v2632
    %3390 = vmatpush1.bf16.msra.mxu0 %v2631
    %3391 = vmatprep.subr.bf16.mxu0 %v2624
    %3392 = vmatpush1.bf16.msra.mxu0 %v2623
    %3393 = vmatprep.subr.bf16.mxu0 %v2616
    %3394 = vmatpush1.bf16.msra.mxu0 %v2615
    %3395 = vmatprep.subr.bf16.mxu0 %v2736
    %3396 = vmatpush2.bf16.msra.mxu0 %v2735
    %3397 = vmatprep.subr.bf16.mxu0 %v2728
    %3398 = vmatpush2.bf16.msra.mxu0 %v2727
    %3399 = vmatprep.subr.bf16.mxu0 %v2720
    %3400 = vmatpush2.bf16.msra.mxu0 %v2719
    %3401 = vmatprep.subr.bf16.mxu0 %v2712
    %3402 = vmatpush2.bf16.msra.mxu0 %v2711
    %3403 = vmatprep.subr.bf16.mxu0 %v2704
    %3404 = vmatpush2.bf16.msra.mxu0 %v2703
    %3405 = vmatprep.subr.bf16.mxu0 %v2696
    %3406 = vmatpush2.bf16.msra.mxu0 %v2695
    %3407 = vmatprep.subr.bf16.mxu0 %v2688
    %3408 = vmatpush2.bf16.msra.mxu0 %v2687
    %3409 = vmatprep.subr.bf16.mxu0 %v2680
    %3410 = vmatpush2.bf16.msra.mxu0 %v2679
    %3411 = vmatprep.mubr.bf16.mxu0 %v1540
    %3412 = vmatmul.mubr.bf16.gmra.mxu0 %v1539
    %v3413 = vpop.f32.mrf.mxu0
    %v3414 = vadd.f32 %v1828, %v3413
    %v3415 = vpop.f32.mrf.mxu0
    %v3416 = vadd.f32 %v1832, %v3415
    %v3417 = vpop.f32.mrf.mxu0
    %v3418 = vadd.f32 %v1828, %v3417
    %v3419 = vpop.f32.mrf.mxu0
    %v3420 = vadd.f32 %v1832, %v3419
    %3421 = vdwg.mxu0
    %3422 = vmatprep.subr.bf16.mxu0 %v2800
    %3423 = vmatpush1.bf16.msra.mxu0 %v2799
    %3424 = vmatprep.subr.bf16.mxu0 %v2792
    %3425 = vmatpush1.bf16.msra.mxu0 %v2791
    %3426 = vmatprep.subr.bf16.mxu0 %v2784
    %3427 = vmatpush1.bf16.msra.mxu0 %v2783
    %3428 = vmatprep.subr.bf16.mxu0 %v2776
    %3429 = vmatpush1.bf16.msra.mxu0 %v2775
    %3430 = vmatprep.subr.bf16.mxu0 %v2768
    %3431 = vmatpush1.bf16.msra.mxu0 %v2767
    %3432 = vmatprep.subr.bf16.mxu0 %v2760
    %3433 = vmatpush1.bf16.msra.mxu0 %v2759
    %3434 = vmatprep.subr.bf16.mxu0 %v2752
    %3435 = vmatpush1.bf16.msra.mxu0 %v2751
    %3436 = vmatprep.subr.bf16.mxu0 %v2744
    %3437 = vmatpush1.bf16.msra.mxu0 %v2743
    %3438 = vmatprep.subr.bf16.mxu0 %v2864
    %3439 = vmatpush2.bf16.msra.mxu0 %v2863
    %3440 = vmatprep.subr.bf16.mxu0 %v2856
    %3441 = vmatpush2.bf16.msra.mxu0 %v2855
    %3442 = vmatprep.subr.bf16.mxu0 %v2848
    %3443 = vmatpush2.bf16.msra.mxu0 %v2847
    %3444 = vmatprep.subr.bf16.mxu0 %v2840
    %3445 = vmatpush2.bf16.msra.mxu0 %v2839
    %3446 = vmatprep.subr.bf16.mxu0 %v2832
    %3447 = vmatpush2.bf16.msra.mxu0 %v2831
    %3448 = vmatprep.subr.bf16.mxu0 %v2824
    %3449 = vmatpush2.bf16.msra.mxu0 %v2823
    %3450 = vmatprep.subr.bf16.mxu0 %v2816
    %3451 = vmatpush2.bf16.msra.mxu0 %v2815
    %3452 = vmatprep.subr.bf16.mxu0 %v2808
    %3453 = vmatpush2.bf16.msra.mxu0 %v2807
    %3454 = vmatprep.mubr.bf16.mxu0 %v1542
    %3455 = vmatmul.mubr.bf16.gmra.mxu0 %v1541
    %v3456 = vpop.f32.mrf.mxu0
    %v3457 = vadd.f32 %v3414, %v3456
    %v3458 = vpop.f32.mrf.mxu0
    %v3459 = vadd.f32 %v3416, %v3458
    %v3460 = vpop.f32.mrf.mxu0
    %v3461 = vadd.f32 %v3418, %v3460
    %v3462 = vpop.f32.mrf.mxu0
    %v3463 = vadd.f32 %v3420, %v3462
    %3464 = vdwg.mxu0
    %v3465 = vmax.f32 %v3199, 0.0
    %v3466 = vmax.f32 %v3201, 0.0
    %v3467 = vmax.f32 %v3285, 0.0
    %v3468 = vmax.f32 %v3287, 0.0
    %v3469 = vmax.f32 %v3371, 0.0
    %v3470 = vmax.f32 %v3373, 0.0
    %v3471 = vmax.f32 %v3457, 0.0
    %v3472 = vmax.f32 %v3459, 0.0
    %v3473 = vmax.f32 %v3203, 0.0
    %v3474 = vmax.f32 %v3205, 0.0
    %v3475 = vmax.f32 %v3289, 0.0
    %v3476 = vmax.f32 %v3291, 0.0
    %v3477 = vmax.f32 %v3375, 0.0
    %v3478 = vmax.f32 %v3377, 0.0
    %v3479 = vmax.f32 %v3461, 0.0
    %v3480 = vmax.f32 %v3463, 0.0
    %v3481 = vpack.c.bf16 %v3473, %v3465
    %v3482 = vpack.c.bf16 %v3474, %v3466
    %v3483 = vpack.c.bf16 %v3475, %v3467
    %v3484 = vpack.c.bf16 %v3476, %v3468
    %v3485 = vpack.c.bf16 %v3477, %v3469
    %v3486 = vpack.c.bf16 %v3478, %v3470
    %v3487 = vpack.c.bf16 %v3479, %v3471
    %v3488 = vpack.c.bf16 %v3480, %v3472
    %v3489 = vld [vmem:[#allocation11] sm:$0xff]
    %v3490 = vld [vmem:[#allocation11 + $0x8] sm:$0xff]
    %v3491 = vld [vmem:[#allocation11 + $0x10] sm:$0xff]
    %v3492 = vld [vmem:[#allocation11 + $0x18] sm:$0xff]
    %v3493 = vld [vmem:[#allocation11 + $0x20] sm:$0xff]
    %v3494 = vld [vmem:[#allocation11 + $0x28] sm:$0xff]
    %v3495 = vld [vmem:[#allocation11 + $0x30] sm:$0xff]
    %v3496 = vld [vmem:[#allocation11 + $0x38] sm:$0xff]
    %v3497 = vld [vmem:[#allocation11 + $0x40] sm:$0xff]
    %v3498 = vld [vmem:[#allocation11 + $0x48] sm:$0xff]
    %v3499 = vld [vmem:[#allocation11 + $0x50] sm:$0xff]
    %v3500 = vld [vmem:[#allocation11 + $0x58] sm:$0xff]
    %v3501 = vld [vmem:[#allocation11 + $0x60] sm:$0xff]
    %v3502 = vld [vmem:[#allocation11 + $0x68] sm:$0xff]
    %v3503 = vld [vmem:[#allocation11 + $0x70] sm:$0xff]
    %v3504 = vld [vmem:[#allocation11 + $0x78] sm:$0xff]
    %v3505 = vld [vmem:[#allocation11 + $0x80] sm:$0xff]
    %v3506 = vld [vmem:[#allocation11 + $0x88] sm:$0xff]
    %v3507 = vld [vmem:[#allocation11 + $0x90] sm:$0xff]
    %v3508 = vld [vmem:[#allocation11 + $0x98] sm:$0xff]
    %v3509 = vld [vmem:[#allocation11 + $0xa0] sm:$0xff]
    %v3510 = vld [vmem:[#allocation11 + $0xa8] sm:$0xff]
    %v3511 = vld [vmem:[#allocation11 + $0xb0] sm:$0xff]
    %v3512 = vld [vmem:[#allocation11 + $0xb8] sm:$0xff]
    %v3513 = vld [vmem:[#allocation11 + $0xc0] sm:$0xff]
    %v3514 = vld [vmem:[#allocation11 + $0xc8] sm:$0xff]
    %v3515 = vld [vmem:[#allocation11 + $0xd0] sm:$0xff]
    %v3516 = vld [vmem:[#allocation11 + $0xd8] sm:$0xff]
    %v3517 = vld [vmem:[#allocation11 + $0xe0] sm:$0xff]
    %v3518 = vld [vmem:[#allocation11 + $0xe8] sm:$0xff]
    %v3519 = vld [vmem:[#allocation11 + $0xf0] sm:$0xff]
    %v3520 = vld [vmem:[#allocation11 + $0xf8] sm:$0xff]
    %v3521 = vld [vmem:[#allocation11 + $0x100] sm:$0xff]
    %v3522 = vld [vmem:[#allocation11 + $0x108] sm:$0xff]
    %v3523 = vld [vmem:[#allocation11 + $0x110] sm:$0xff]
    %v3524 = vld [vmem:[#allocation11 + $0x118] sm:$0xff]
    %v3525 = vld [vmem:[#allocation11 + $0x120] sm:$0xff]
    %v3526 = vld [vmem:[#allocation11 + $0x128] sm:$0xff]
    %v3527 = vld [vmem:[#allocation11 + $0x130] sm:$0xff]
    %v3528 = vld [vmem:[#allocation11 + $0x138] sm:$0xff]
    %v3529 = vld [vmem:[#allocation11 + $0x140] sm:$0xff]
    %v3530 = vld [vmem:[#allocation11 + $0x148] sm:$0xff]
    %v3531 = vld [vmem:[#allocation11 + $0x150] sm:$0xff]
    %v3532 = vld [vmem:[#allocation11 + $0x158] sm:$0xff]
    %v3533 = vld [vmem:[#allocation11 + $0x160] sm:$0xff]
    %v3534 = vld [vmem:[#allocation11 + $0x168] sm:$0xff]
    %v3535 = vld [vmem:[#allocation11 + $0x170] sm:$0xff]
    %v3536 = vld [vmem:[#allocation11 + $0x178] sm:$0xff]
    %v3537 = vld [vmem:[#allocation11 + $0x180] sm:$0xff]
    %v3538 = vld [vmem:[#allocation11 + $0x188] sm:$0xff]
    %v3539 = vld [vmem:[#allocation11 + $0x190] sm:$0xff]
    %v3540 = vld [vmem:[#allocation11 + $0x198] sm:$0xff]
    %v3541 = vld [vmem:[#allocation11 + $0x1a0] sm:$0xff]
    %v3542 = vld [vmem:[#allocation11 + $0x1a8] sm:$0xff]
    %v3543 = vld [vmem:[#allocation11 + $0x1b0] sm:$0xff]
    %v3544 = vld [vmem:[#allocation11 + $0x1b8] sm:$0xff]
    %v3545 = vld [vmem:[#allocation11 + $0x1c0] sm:$0xff]
    %v3546 = vld [vmem:[#allocation11 + $0x1c8] sm:$0xff]
    %v3547 = vld [vmem:[#allocation11 + $0x1d0] sm:$0xff]
    %v3548 = vld [vmem:[#allocation11 + $0x1d8] sm:$0xff]
    %v3549 = vld [vmem:[#allocation11 + $0x1e0] sm:$0xff]
    %v3550 = vld [vmem:[#allocation11 + $0x1e8] sm:$0xff]
    %v3551 = vld [vmem:[#allocation11 + $0x1f0] sm:$0xff]
    %v3552 = vld [vmem:[#allocation11 + $0x1f8] sm:$0xff]
    %v3553 = vld [vmem:[#allocation11 + $0x200] sm:$0xff]
    %v3554 = vld [vmem:[#allocation11 + $0x208] sm:$0xff]
    %v3555 = vld [vmem:[#allocation11 + $0x210] sm:$0xff]
    %v3556 = vld [vmem:[#allocation11 + $0x218] sm:$0xff]
    %v3557 = vld [vmem:[#allocation11 + $0x220] sm:$0xff]
    %v3558 = vld [vmem:[#allocation11 + $0x228] sm:$0xff]
    %v3559 = vld [vmem:[#allocation11 + $0x230] sm:$0xff]
    %v3560 = vld [vmem:[#allocation11 + $0x238] sm:$0xff]
    %v3561 = vld [vmem:[#allocation11 + $0x240] sm:$0xff]
    %v3562 = vld [vmem:[#allocation11 + $0x248] sm:$0xff]
    %v3563 = vld [vmem:[#allocation11 + $0x250] sm:$0xff]
    %v3564 = vld [vmem:[#allocation11 + $0x258] sm:$0xff]
    %v3565 = vld [vmem:[#allocation11 + $0x260] sm:$0xff]
    %v3566 = vld [vmem:[#allocation11 + $0x268] sm:$0xff]
    %v3567 = vld [vmem:[#allocation11 + $0x270] sm:$0xff]
    %v3568 = vld [vmem:[#allocation11 + $0x278] sm:$0xff]
    %v3569 = vld [vmem:[#allocation11 + $0x280] sm:$0xff]
    %v3570 = vld [vmem:[#allocation11 + $0x288] sm:$0xff]
    %v3571 = vld [vmem:[#allocation11 + $0x290] sm:$0xff]
    %v3572 = vld [vmem:[#allocation11 + $0x298] sm:$0xff]
    %v3573 = vld [vmem:[#allocation11 + $0x2a0] sm:$0xff]
    %v3574 = vld [vmem:[#allocation11 + $0x2a8] sm:$0xff]
    %v3575 = vld [vmem:[#allocation11 + $0x2b0] sm:$0xff]
    %v3576 = vld [vmem:[#allocation11 + $0x2b8] sm:$0xff]
    %v3577 = vld [vmem:[#allocation11 + $0x2c0] sm:$0xff]
    %v3578 = vld [vmem:[#allocation11 + $0x2c8] sm:$0xff]
    %v3579 = vld [vmem:[#allocation11 + $0x2d0] sm:$0xff]
    %v3580 = vld [vmem:[#allocation11 + $0x2d8] sm:$0xff]
    %v3581 = vld [vmem:[#allocation11 + $0x2e0] sm:$0xff]
    %v3582 = vld [vmem:[#allocation11 + $0x2e8] sm:$0xff]
    %v3583 = vld [vmem:[#allocation11 + $0x2f0] sm:$0xff]
    %v3584 = vld [vmem:[#allocation11 + $0x2f8] sm:$0xff]
    %v3585 = vld [vmem:[#allocation11 + $0x300] sm:$0xff]
    %v3586 = vld [vmem:[#allocation11 + $0x308] sm:$0xff]
    %v3587 = vld [vmem:[#allocation11 + $0x310] sm:$0xff]
    %v3588 = vld [vmem:[#allocation11 + $0x318] sm:$0xff]
    %v3589 = vld [vmem:[#allocation11 + $0x320] sm:$0xff]
    %v3590 = vld [vmem:[#allocation11 + $0x328] sm:$0xff]
    %v3591 = vld [vmem:[#allocation11 + $0x330] sm:$0xff]
    %v3592 = vld [vmem:[#allocation11 + $0x338] sm:$0xff]
    %v3593 = vld [vmem:[#allocation11 + $0x340] sm:$0xff]
    %v3594 = vld [vmem:[#allocation11 + $0x348] sm:$0xff]
    %v3595 = vld [vmem:[#allocation11 + $0x350] sm:$0xff]
    %v3596 = vld [vmem:[#allocation11 + $0x358] sm:$0xff]
    %v3597 = vld [vmem:[#allocation11 + $0x360] sm:$0xff]
    %v3598 = vld [vmem:[#allocation11 + $0x368] sm:$0xff]
    %v3599 = vld [vmem:[#allocation11 + $0x370] sm:$0xff]
    %v3600 = vld [vmem:[#allocation11 + $0x378] sm:$0xff]
    %v3601 = vld [vmem:[#allocation11 + $0x380] sm:$0xff]
    %v3602 = vld [vmem:[#allocation11 + $0x388] sm:$0xff]
    %v3603 = vld [vmem:[#allocation11 + $0x390] sm:$0xff]
    %v3604 = vld [vmem:[#allocation11 + $0x398] sm:$0xff]
    %v3605 = vld [vmem:[#allocation11 + $0x3a0] sm:$0xff]
    %v3606 = vld [vmem:[#allocation11 + $0x3a8] sm:$0xff]
    %v3607 = vld [vmem:[#allocation11 + $0x3b0] sm:$0xff]
    %v3608 = vld [vmem:[#allocation11 + $0x3b8] sm:$0xff]
    %v3609 = vld [vmem:[#allocation11 + $0x3c0] sm:$0xff]
    %v3610 = vld [vmem:[#allocation11 + $0x3c8] sm:$0xff]
    %v3611 = vld [vmem:[#allocation11 + $0x3d0] sm:$0xff]
    %v3612 = vld [vmem:[#allocation11 + $0x3d8] sm:$0xff]
    %v3613 = vld [vmem:[#allocation11 + $0x3e0] sm:$0xff]
    %v3614 = vld [vmem:[#allocation11 + $0x3e8] sm:$0xff]
    %v3615 = vld [vmem:[#allocation11 + $0x3f0] sm:$0xff]
    %v3616 = vld [vmem:[#allocation11 + $0x3f8] sm:$0xff]
    %v3617 = vld [vmem:[%s8] sm:$0x3]
    %v3619 = vlaneseq
    %v3620 = vshrl.u32 %v3619, 7
    %v3621 = vsub.s32 0, %v3620
    %v3622 = vrot.slane %v3617, %v3621
    %v3623 = vlaneseq
    %v3624 = vshrl.u32 %v3623, 7
    %v3625 = vsub.s32 1, %v3624
    %v3626 = vrot.slane %v3617, %v3625
    %v3757 = vunpack.c.l.b16 %v3489
    %v3758 = vunpack.c.h.b16 %v3489
    %v3759 = vunpack.c.l.b16 %v3490
    %v3760 = vunpack.c.h.b16 %v3490
    %v3761 = vunpack.c.l.b16 %v3491
    %v3762 = vunpack.c.h.b16 %v3491
    %v3763 = vunpack.c.l.b16 %v3492
    %v3764 = vunpack.c.h.b16 %v3492
    %v3765 = vunpack.c.l.b16 %v3493
    %v3766 = vunpack.c.h.b16 %v3493
    %v3767 = vunpack.c.l.b16 %v3494
    %v3768 = vunpack.c.h.b16 %v3494
    %v3769 = vunpack.c.l.b16 %v3495
    %v3770 = vunpack.c.h.b16 %v3495
    %v3771 = vunpack.c.l.b16 %v3496
    %v3772 = vunpack.c.h.b16 %v3496
    %v3773 = vunpack.c.l.b16 %v3497
    %v3774 = vunpack.c.h.b16 %v3497
    %v3775 = vunpack.c.l.b16 %v3498
    %v3776 = vunpack.c.h.b16 %v3498
    %v3777 = vunpack.c.l.b16 %v3499
    %v3778 = vunpack.c.h.b16 %v3499
    %v3779 = vunpack.c.l.b16 %v3500
    %v3780 = vunpack.c.h.b16 %v3500
    %v3781 = vunpack.c.l.b16 %v3501
    %v3782 = vunpack.c.h.b16 %v3501
    %v3783 = vunpack.c.l.b16 %v3502
    %v3784 = vunpack.c.h.b16 %v3502
    %v3785 = vunpack.c.l.b16 %v3503
    %v3786 = vunpack.c.h.b16 %v3503
    %v3787 = vunpack.c.l.b16 %v3504
    %v3788 = vunpack.c.h.b16 %v3504
    %v3789 = vunpack.c.l.b16 %v3505
    %v3790 = vunpack.c.h.b16 %v3505
    %v3791 = vunpack.c.l.b16 %v3506
    %v3792 = vunpack.c.h.b16 %v3506
    %v3793 = vunpack.c.l.b16 %v3507
    %v3794 = vunpack.c.h.b16 %v3507
    %v3795 = vunpack.c.l.b16 %v3508
    %v3796 = vunpack.c.h.b16 %v3508
    %v3797 = vunpack.c.l.b16 %v3509
    %v3798 = vunpack.c.h.b16 %v3509
    %v3799 = vunpack.c.l.b16 %v3510
    %v3800 = vunpack.c.h.b16 %v3510
    %v3801 = vunpack.c.l.b16 %v3511
    %v3802 = vunpack.c.h.b16 %v3511
    %v3803 = vunpack.c.l.b16 %v3512
    %v3804 = vunpack.c.h.b16 %v3512
    %v3805 = vunpack.c.l.b16 %v3513
    %v3806 = vunpack.c.h.b16 %v3513
    %v3807 = vunpack.c.l.b16 %v3514
    %v3808 = vunpack.c.h.b16 %v3514
    %v3809 = vunpack.c.l.b16 %v3515
    %v3810 = vunpack.c.h.b16 %v3515
    %v3811 = vunpack.c.l.b16 %v3516
    %v3812 = vunpack.c.h.b16 %v3516
    %v3813 = vunpack.c.l.b16 %v3517
    %v3814 = vunpack.c.h.b16 %v3517
    %v3815 = vunpack.c.l.b16 %v3518
    %v3816 = vunpack.c.h.b16 %v3518
    %v3817 = vunpack.c.l.b16 %v3519
    %v3818 = vunpack.c.h.b16 %v3519
    %v3819 = vunpack.c.l.b16 %v3520
    %v3820 = vunpack.c.h.b16 %v3520
    %v3821 = vunpack.c.l.b16 %v3521
    %v3822 = vunpack.c.h.b16 %v3521
    %v3823 = vunpack.c.l.b16 %v3522
    %v3824 = vunpack.c.h.b16 %v3522
    %v3825 = vunpack.c.l.b16 %v3523
    %v3826 = vunpack.c.h.b16 %v3523
    %v3827 = vunpack.c.l.b16 %v3524
    %v3828 = vunpack.c.h.b16 %v3524
    %v3829 = vunpack.c.l.b16 %v3525
    %v3830 = vunpack.c.h.b16 %v3525
    %v3831 = vunpack.c.l.b16 %v3526
    %v3832 = vunpack.c.h.b16 %v3526
    %v3833 = vunpack.c.l.b16 %v3527
    %v3834 = vunpack.c.h.b16 %v3527
    %v3835 = vunpack.c.l.b16 %v3528
    %v3836 = vunpack.c.h.b16 %v3528
    %v3837 = vunpack.c.l.b16 %v3529
    %v3838 = vunpack.c.h.b16 %v3529
    %v3839 = vunpack.c.l.b16 %v3530
    %v3840 = vunpack.c.h.b16 %v3530
    %v3841 = vunpack.c.l.b16 %v3531
    %v3842 = vunpack.c.h.b16 %v3531
    %v3843 = vunpack.c.l.b16 %v3532
    %v3844 = vunpack.c.h.b16 %v3532
    %v3845 = vunpack.c.l.b16 %v3533
    %v3846 = vunpack.c.h.b16 %v3533
    %v3847 = vunpack.c.l.b16 %v3534
    %v3848 = vunpack.c.h.b16 %v3534
    %v3849 = vunpack.c.l.b16 %v3535
    %v3850 = vunpack.c.h.b16 %v3535
    %v3851 = vunpack.c.l.b16 %v3536
    %v3852 = vunpack.c.h.b16 %v3536
    %v3853 = vunpack.c.l.b16 %v3537
    %v3854 = vunpack.c.h.b16 %v3537
    %v3855 = vunpack.c.l.b16 %v3538
    %v3856 = vunpack.c.h.b16 %v3538
    %v3857 = vunpack.c.l.b16 %v3539
    %v3858 = vunpack.c.h.b16 %v3539
    %v3859 = vunpack.c.l.b16 %v3540
    %v3860 = vunpack.c.h.b16 %v3540
    %v3861 = vunpack.c.l.b16 %v3541
    %v3862 = vunpack.c.h.b16 %v3541
    %v3863 = vunpack.c.l.b16 %v3542
    %v3864 = vunpack.c.h.b16 %v3542
    %v3865 = vunpack.c.l.b16 %v3543
    %v3866 = vunpack.c.h.b16 %v3543
    %v3867 = vunpack.c.l.b16 %v3544
    %v3868 = vunpack.c.h.b16 %v3544
    %v3869 = vunpack.c.l.b16 %v3545
    %v3870 = vunpack.c.h.b16 %v3545
    %v3871 = vunpack.c.l.b16 %v3546
    %v3872 = vunpack.c.h.b16 %v3546
    %v3873 = vunpack.c.l.b16 %v3547
    %v3874 = vunpack.c.h.b16 %v3547
    %v3875 = vunpack.c.l.b16 %v3548
    %v3876 = vunpack.c.h.b16 %v3548
    %v3877 = vunpack.c.l.b16 %v3549
    %v3878 = vunpack.c.h.b16 %v3549
    %v3879 = vunpack.c.l.b16 %v3550
    %v3880 = vunpack.c.h.b16 %v3550
    %v3881 = vunpack.c.l.b16 %v3551
    %v3882 = vunpack.c.h.b16 %v3551
    %v3883 = vunpack.c.l.b16 %v3552
    %v3884 = vunpack.c.h.b16 %v3552
    %v3885 = vunpack.c.l.b16 %v3553
    %v3886 = vunpack.c.h.b16 %v3553
    %v3887 = vunpack.c.l.b16 %v3554
    %v3888 = vunpack.c.h.b16 %v3554
    %v3889 = vunpack.c.l.b16 %v3555
    %v3890 = vunpack.c.h.b16 %v3555
    %v3891 = vunpack.c.l.b16 %v3556
    %v3892 = vunpack.c.h.b16 %v3556
    %v3893 = vunpack.c.l.b16 %v3557
    %v3894 = vunpack.c.h.b16 %v3557
    %v3895 = vunpack.c.l.b16 %v3558
    %v3896 = vunpack.c.h.b16 %v3558
    %v3897 = vunpack.c.l.b16 %v3559
    %v3898 = vunpack.c.h.b16 %v3559
    %v3899 = vunpack.c.l.b16 %v3560
    %v3900 = vunpack.c.h.b16 %v3560
    %v3901 = vunpack.c.l.b16 %v3561
    %v3902 = vunpack.c.h.b16 %v3561
    %v3903 = vunpack.c.l.b16 %v3562
    %v3904 = vunpack.c.h.b16 %v3562
    %v3905 = vunpack.c.l.b16 %v3563
    %v3906 = vunpack.c.h.b16 %v3563
    %v3907 = vunpack.c.l.b16 %v3564
    %v3908 = vunpack.c.h.b16 %v3564
    %v3909 = vunpack.c.l.b16 %v3565
    %v3910 = vunpack.c.h.b16 %v3565
    %v3911 = vunpack.c.l.b16 %v3566
    %v3912 = vunpack.c.h.b16 %v3566
    %v3913 = vunpack.c.l.b16 %v3567
    %v3914 = vunpack.c.h.b16 %v3567
    %v3915 = vunpack.c.l.b16 %v3568
    %v3916 = vunpack.c.h.b16 %v3568
    %v3917 = vunpack.c.l.b16 %v3569
    %v3918 = vunpack.c.h.b16 %v3569
    %v3919 = vunpack.c.l.b16 %v3570
    %v3920 = vunpack.c.h.b16 %v3570
    %v3921 = vunpack.c.l.b16 %v3571
    %v3922 = vunpack.c.h.b16 %v3571
    %v3923 = vunpack.c.l.b16 %v3572
    %v3924 = vunpack.c.h.b16 %v3572
    %v3925 = vunpack.c.l.b16 %v3573
    %v3926 = vunpack.c.h.b16 %v3573
    %v3927 = vunpack.c.l.b16 %v3574
    %v3928 = vunpack.c.h.b16 %v3574
    %v3929 = vunpack.c.l.b16 %v3575
    %v3930 = vunpack.c.h.b16 %v3575
    %v3931 = vunpack.c.l.b16 %v3576
    %v3932 = vunpack.c.h.b16 %v3576
    %v3933 = vunpack.c.l.b16 %v3577
    %v3934 = vunpack.c.h.b16 %v3577
    %v3935 = vunpack.c.l.b16 %v3578
    %v3936 = vunpack.c.h.b16 %v3578
    %v3937 = vunpack.c.l.b16 %v3579
    %v3938 = vunpack.c.h.b16 %v3579
    %v3939 = vunpack.c.l.b16 %v3580
    %v3940 = vunpack.c.h.b16 %v3580
    %v3941 = vunpack.c.l.b16 %v3581
    %v3942 = vunpack.c.h.b16 %v3581
    %v3943 = vunpack.c.l.b16 %v3582
    %v3944 = vunpack.c.h.b16 %v3582
    %v3945 = vunpack.c.l.b16 %v3583
    %v3946 = vunpack.c.h.b16 %v3583
    %v3947 = vunpack.c.l.b16 %v3584
    %v3948 = vunpack.c.h.b16 %v3584
    %v3949 = vunpack.c.l.b16 %v3585
    %v3950 = vunpack.c.h.b16 %v3585
    %v3951 = vunpack.c.l.b16 %v3586
    %v3952 = vunpack.c.h.b16 %v3586
    %v3953 = vunpack.c.l.b16 %v3587
    %v3954 = vunpack.c.h.b16 %v3587
    %v3955 = vunpack.c.l.b16 %v3588
    %v3956 = vunpack.c.h.b16 %v3588
    %v3957 = vunpack.c.l.b16 %v3589
    %v3958 = vunpack.c.h.b16 %v3589
    %v3959 = vunpack.c.l.b16 %v3590
    %v3960 = vunpack.c.h.b16 %v3590
    %v3961 = vunpack.c.l.b16 %v3591
    %v3962 = vunpack.c.h.b16 %v3591
    %v3963 = vunpack.c.l.b16 %v3592
    %v3964 = vunpack.c.h.b16 %v3592
    %v3965 = vunpack.c.l.b16 %v3593
    %v3966 = vunpack.c.h.b16 %v3593
    %v3967 = vunpack.c.l.b16 %v3594
    %v3968 = vunpack.c.h.b16 %v3594
    %v3969 = vunpack.c.l.b16 %v3595
    %v3970 = vunpack.c.h.b16 %v3595
    %v3971 = vunpack.c.l.b16 %v3596
    %v3972 = vunpack.c.h.b16 %v3596
    %v3973 = vunpack.c.l.b16 %v3597
    %v3974 = vunpack.c.h.b16 %v3597
    %v3975 = vunpack.c.l.b16 %v3598
    %v3976 = vunpack.c.h.b16 %v3598
    %v3977 = vunpack.c.l.b16 %v3599
    %v3978 = vunpack.c.h.b16 %v3599
    %v3979 = vunpack.c.l.b16 %v3600
    %v3980 = vunpack.c.h.b16 %v3600
    %v3981 = vunpack.c.l.b16 %v3601
    %v3982 = vunpack.c.h.b16 %v3601
    %v3983 = vunpack.c.l.b16 %v3602
    %v3984 = vunpack.c.h.b16 %v3602
    %v3985 = vunpack.c.l.b16 %v3603
    %v3986 = vunpack.c.h.b16 %v3603
    %v3987 = vunpack.c.l.b16 %v3604
    %v3988 = vunpack.c.h.b16 %v3604
    %v3989 = vunpack.c.l.b16 %v3605
    %v3990 = vunpack.c.h.b16 %v3605
    %v3991 = vunpack.c.l.b16 %v3606
    %v3992 = vunpack.c.h.b16 %v3606
    %v3993 = vunpack.c.l.b16 %v3607
    %v3994 = vunpack.c.h.b16 %v3607
    %v3995 = vunpack.c.l.b16 %v3608
    %v3996 = vunpack.c.h.b16 %v3608
    %v3997 = vunpack.c.l.b16 %v3609
    %v3998 = vunpack.c.h.b16 %v3609
    %v3999 = vunpack.c.l.b16 %v3610
    %v4000 = vunpack.c.h.b16 %v3610
    %v4001 = vunpack.c.l.b16 %v3611
    %v4002 = vunpack.c.h.b16 %v3611
    %v4003 = vunpack.c.l.b16 %v3612
    %v4004 = vunpack.c.h.b16 %v3612
    %v4005 = vunpack.c.l.b16 %v3613
    %v4006 = vunpack.c.h.b16 %v3613
    %v4007 = vunpack.c.l.b16 %v3614
    %v4008 = vunpack.c.h.b16 %v3614
    %v4009 = vunpack.c.l.b16 %v3615
    %v4010 = vunpack.c.h.b16 %v3615
    %v4011 = vunpack.c.l.b16 %v3616
    %v4012 = vunpack.c.h.b16 %v3616
    %v4013 = vpack.c.b16 %v3759, %v3757
    %v4014 = vpack.c.b16 %v3760, %v3758
    %v4015 = vpack.c.b16 %v3763, %v3761
    %v4016 = vpack.c.b16 %v3764, %v3762
    %v4017 = vpack.c.b16 %v3767, %v3765
    %v4018 = vpack.c.b16 %v3768, %v3766
    %v4019 = vpack.c.b16 %v3771, %v3769
    %v4020 = vpack.c.b16 %v3772, %v3770
    %v4021 = vpack.c.b16 %v3775, %v3773
    %v4022 = vpack.c.b16 %v3776, %v3774
    %v4023 = vpack.c.b16 %v3779, %v3777
    %v4024 = vpack.c.b16 %v3780, %v3778
    %v4025 = vpack.c.b16 %v3783, %v3781
    %v4026 = vpack.c.b16 %v3784, %v3782
    %v4027 = vpack.c.b16 %v3787, %v3785
    %v4028 = vpack.c.b16 %v3788, %v3786
    %v4029 = vpack.c.b16 %v3791, %v3789
    %v4030 = vpack.c.b16 %v3792, %v3790
    %v4031 = vpack.c.b16 %v3795, %v3793
    %v4032 = vpack.c.b16 %v3796, %v3794
    %v4033 = vpack.c.b16 %v3799, %v3797
    %v4034 = vpack.c.b16 %v3800, %v3798
    %v4035 = vpack.c.b16 %v3803, %v3801
    %v4036 = vpack.c.b16 %v3804, %v3802
    %v4037 = vpack.c.b16 %v3807, %v3805
    %v4038 = vpack.c.b16 %v3808, %v3806
    %v4039 = vpack.c.b16 %v3811, %v3809
    %v4040 = vpack.c.b16 %v3812, %v3810
    %v4041 = vpack.c.b16 %v3815, %v3813
    %v4042 = vpack.c.b16 %v3816, %v3814
    %v4043 = vpack.c.b16 %v3819, %v3817
    %v4044 = vpack.c.b16 %v3820, %v3818
    %v4045 = vpack.c.b16 %v3823, %v3821
    %v4046 = vpack.c.b16 %v3824, %v3822
    %v4047 = vpack.c.b16 %v3827, %v3825
    %v4048 = vpack.c.b16 %v3828, %v3826
    %v4049 = vpack.c.b16 %v3831, %v3829
    %v4050 = vpack.c.b16 %v3832, %v3830
    %v4051 = vpack.c.b16 %v3835, %v3833
    %v4052 = vpack.c.b16 %v3836, %v3834
    %v4053 = vpack.c.b16 %v3839, %v3837
    %v4054 = vpack.c.b16 %v3840, %v3838
    %v4055 = vpack.c.b16 %v3843, %v3841
    %v4056 = vpack.c.b16 %v3844, %v3842
    %v4057 = vpack.c.b16 %v3847, %v3845
    %v4058 = vpack.c.b16 %v3848, %v3846
    %v4059 = vpack.c.b16 %v3851, %v3849
    %v4060 = vpack.c.b16 %v3852, %v3850
    %v4061 = vpack.c.b16 %v3855, %v3853
    %v4062 = vpack.c.b16 %v3856, %v3854
    %v4063 = vpack.c.b16 %v3859, %v3857
    %v4064 = vpack.c.b16 %v3860, %v3858
    %v4065 = vpack.c.b16 %v3863, %v3861
    %v4066 = vpack.c.b16 %v3864, %v3862
    %v4067 = vpack.c.b16 %v3867, %v3865
    %v4068 = vpack.c.b16 %v3868, %v3866
    %v4069 = vpack.c.b16 %v3871, %v3869
    %v4070 = vpack.c.b16 %v3872, %v3870
    %v4071 = vpack.c.b16 %v3875, %v3873
    %v4072 = vpack.c.b16 %v3876, %v3874
    %v4073 = vpack.c.b16 %v3879, %v3877
    %v4074 = vpack.c.b16 %v3880, %v3878
    %v4075 = vpack.c.b16 %v3883, %v3881
    %v4076 = vpack.c.b16 %v3884, %v3882
    %v4077 = vpack.c.b16 %v3887, %v3885
    %v4078 = vpack.c.b16 %v3888, %v3886
    %v4079 = vpack.c.b16 %v3891, %v3889
    %v4080 = vpack.c.b16 %v3892, %v3890
    %v4081 = vpack.c.b16 %v3895, %v3893
    %v4082 = vpack.c.b16 %v3896, %v3894
    %v4083 = vpack.c.b16 %v3899, %v3897
    %v4084 = vpack.c.b16 %v3900, %v3898
    %v4085 = vpack.c.b16 %v3903, %v3901
    %v4086 = vpack.c.b16 %v3904, %v3902
    %v4087 = vpack.c.b16 %v3907, %v3905
    %v4088 = vpack.c.b16 %v3908, %v3906
    %v4089 = vpack.c.b16 %v3911, %v3909
    %v4090 = vpack.c.b16 %v3912, %v3910
    %v4091 = vpack.c.b16 %v3915, %v3913
    %v4092 = vpack.c.b16 %v3916, %v3914
    %v4093 = vpack.c.b16 %v3919, %v3917
    %v4094 = vpack.c.b16 %v3920, %v3918
    %v4095 = vpack.c.b16 %v3923, %v3921
    %v4096 = vpack.c.b16 %v3924, %v3922
    %v4097 = vpack.c.b16 %v3927, %v3925
    %v4098 = vpack.c.b16 %v3928, %v3926
    %v4099 = vpack.c.b16 %v3931, %v3929
    %v4100 = vpack.c.b16 %v3932, %v3930
    %v4101 = vpack.c.b16 %v3935, %v3933
    %v4102 = vpack.c.b16 %v3936, %v3934
    %v4103 = vpack.c.b16 %v3939, %v3937
    %v4104 = vpack.c.b16 %v3940, %v3938
    %v4105 = vpack.c.b16 %v3943, %v3941
    %v4106 = vpack.c.b16 %v3944, %v3942
    %v4107 = vpack.c.b16 %v3947, %v3945
    %v4108 = vpack.c.b16 %v3948, %v3946
    %v4109 = vpack.c.b16 %v3951, %v3949
    %v4110 = vpack.c.b16 %v3952, %v3950
    %v4111 = vpack.c.b16 %v3955, %v3953
    %v4112 = vpack.c.b16 %v3956, %v3954
    %v4113 = vpack.c.b16 %v3959, %v3957
    %v4114 = vpack.c.b16 %v3960, %v3958
    %v4115 = vpack.c.b16 %v3963, %v3961
    %v4116 = vpack.c.b16 %v3964, %v3962
    %v4117 = vpack.c.b16 %v3967, %v3965
    %v4118 = vpack.c.b16 %v3968, %v3966
    %v4119 = vpack.c.b16 %v3971, %v3969
    %v4120 = vpack.c.b16 %v3972, %v3970
    %v4121 = vpack.c.b16 %v3975, %v3973
    %v4122 = vpack.c.b16 %v3976, %v3974
    %v4123 = vpack.c.b16 %v3979, %v3977
    %v4124 = vpack.c.b16 %v3980, %v3978
    %v4125 = vpack.c.b16 %v3983, %v3981
    %v4126 = vpack.c.b16 %v3984, %v3982
    %v4127 = vpack.c.b16 %v3987, %v3985
    %v4128 = vpack.c.b16 %v3988, %v3986
    %v4129 = vpack.c.b16 %v3991, %v3989
    %v4130 = vpack.c.b16 %v3992, %v3990
    %v4131 = vpack.c.b16 %v3995, %v3993
    %v4132 = vpack.c.b16 %v3996, %v3994
    %v4133 = vpack.c.b16 %v3999, %v3997
    %v4134 = vpack.c.b16 %v4000, %v3998
    %v4135 = vpack.c.b16 %v4003, %v4001
    %v4136 = vpack.c.b16 %v4004, %v4002
    %v4137 = vpack.c.b16 %v4007, %v4005
    %v4138 = vpack.c.b16 %v4008, %v4006
    %v4139 = vpack.c.b16 %v4011, %v4009
    %v4140 = vpack.c.b16 %v4012, %v4010
    %4269 = vmatprep.subr.bf16.mxu0 %v4028
    %4270 = vmatpush1.bf16.msra.mxu0 %v4027
    %4271 = vmatprep.subr.bf16.mxu0 %v4026
    %4272 = vmatpush1.bf16.msra.mxu0 %v4025
    %4273 = vmatprep.subr.bf16.mxu0 %v4024
    %4274 = vmatpush1.bf16.msra.mxu0 %v4023
    %4275 = vmatprep.subr.bf16.mxu0 %v4022
    %4276 = vmatpush1.bf16.msra.mxu0 %v4021
    %4277 = vmatprep.subr.bf16.mxu0 %v4020
    %4278 = vmatpush1.bf16.msra.mxu0 %v4019
    %4279 = vmatprep.subr.bf16.mxu0 %v4018
    %4280 = vmatpush1.bf16.msra.mxu0 %v4017
    %4281 = vmatprep.subr.bf16.mxu0 %v4016
    %4282 = vmatpush1.bf16.msra.mxu0 %v4015
    %4283 = vmatprep.subr.bf16.mxu0 %v4014
    %4284 = vmatpush1.bf16.msra.mxu0 %v4013
    %4285 = vmatprep.subr.bf16.mxu0 %v4044
    %4286 = vmatpush2.bf16.msra.mxu0 %v4043
    %4287 = vmatprep.subr.bf16.mxu0 %v4042
    %4288 = vmatpush2.bf16.msra.mxu0 %v4041
    %4289 = vmatprep.subr.bf16.mxu0 %v4040
    %4290 = vmatpush2.bf16.msra.mxu0 %v4039
    %4291 = vmatprep.subr.bf16.mxu0 %v4038
    %4292 = vmatpush2.bf16.msra.mxu0 %v4037
    %4293 = vmatprep.subr.bf16.mxu0 %v4036
    %4294 = vmatpush2.bf16.msra.mxu0 %v4035
    %4295 = vmatprep.subr.bf16.mxu0 %v4034
    %4296 = vmatpush2.bf16.msra.mxu0 %v4033
    %4297 = vmatprep.subr.bf16.mxu0 %v4032
    %4298 = vmatpush2.bf16.msra.mxu0 %v4031
    %4299 = vmatprep.subr.bf16.mxu0 %v4030
    %4300 = vmatpush2.bf16.msra.mxu0 %v4029
    %4301 = vmatprep.mubr.bf16.mxu0 %v3482
    %4302 = vmatmul.mubr.bf16.gmra.mxu0 %v3481
    %v4303 = vpop.f32.mrf.mxu0
    %v4304 = vadd.f32 %v3622, %v4303
    %v4305 = vpop.f32.mrf.mxu0
    %v4306 = vadd.f32 %v3626, %v4305
    %v4307 = vpop.f32.mrf.mxu0
    %v4308 = vadd.f32 %v3622, %v4307
    %v4309 = vpop.f32.mrf.mxu0
    %v4310 = vadd.f32 %v3626, %v4309
    %4311 = vdwg.mxu0
    %4312 = vmatprep.subr.bf16.mxu0 %v4060
    %4313 = vmatpush1.bf16.msra.mxu0 %v4059
    %4314 = vmatprep.subr.bf16.mxu0 %v4058
    %4315 = vmatpush1.bf16.msra.mxu0 %v4057
    %4316 = vmatprep.subr.bf16.mxu0 %v4056
    %4317 = vmatpush1.bf16.msra.mxu0 %v4055
    %4318 = vmatprep.subr.bf16.mxu0 %v4054
    %4319 = vmatpush1.bf16.msra.mxu0 %v4053
    %4320 = vmatprep.subr.bf16.mxu0 %v4052
    %4321 = vmatpush1.bf16.msra.mxu0 %v4051
    %4322 = vmatprep.subr.bf16.mxu0 %v4050
    %4323 = vmatpush1.bf16.msra.mxu0 %v4049
    %4324 = vmatprep.subr.bf16.mxu0 %v4048
    %4325 = vmatpush1.bf16.msra.mxu0 %v4047
    %4326 = vmatprep.subr.bf16.mxu0 %v4046
    %4327 = vmatpush1.bf16.msra.mxu0 %v4045
    %4328 = vmatprep.subr.bf16.mxu0 %v4076
    %4329 = vmatpush2.bf16.msra.mxu0 %v4075
    %4330 = vmatprep.subr.bf16.mxu0 %v4074
    %4331 = vmatpush2.bf16.msra.mxu0 %v4073
    %4332 = vmatprep.subr.bf16.mxu0 %v4072
    %4333 = vmatpush2.bf16.msra.mxu0 %v4071
    %4334 = vmatprep.subr.bf16.mxu0 %v4070
    %4335 = vmatpush2.bf16.msra.mxu0 %v4069
    %4336 = vmatprep.subr.bf16.mxu0 %v4068
    %4337 = vmatpush2.bf16.msra.mxu0 %v4067
    %4338 = vmatprep.subr.bf16.mxu0 %v4066
    %4339 = vmatpush2.bf16.msra.mxu0 %v4065
    %4340 = vmatprep.subr.bf16.mxu0 %v4064
    %4341 = vmatpush2.bf16.msra.mxu0 %v4063
    %4342 = vmatprep.subr.bf16.mxu0 %v4062
    %4343 = vmatpush2.bf16.msra.mxu0 %v4061
    %4344 = vmatprep.mubr.bf16.mxu0 %v3484
    %4345 = vmatmul.mubr.bf16.gmra.mxu0 %v3483
    %v4346 = vpop.f32.mrf.mxu0
    %v4347 = vadd.f32 %v4304, %v4346
    %v4348 = vpop.f32.mrf.mxu0
    %v4349 = vadd.f32 %v4306, %v4348
    %v4350 = vpop.f32.mrf.mxu0
    %v4351 = vadd.f32 %v4308, %v4350
    %v4352 = vpop.f32.mrf.mxu0
    %v4353 = vadd.f32 %v4310, %v4352
    %4354 = vdwg.mxu0
    %4355 = vmatprep.subr.bf16.mxu0 %v4092
    %4356 = vmatpush1.bf16.msra.mxu0 %v4091
    %4357 = vmatprep.subr.bf16.mxu0 %v4090
    %4358 = vmatpush1.bf16.msra.mxu0 %v4089
    %4359 = vmatprep.subr.bf16.mxu0 %v4088
    %4360 = vmatpush1.bf16.msra.mxu0 %v4087
    %4361 = vmatprep.subr.bf16.mxu0 %v4086
    %4362 = vmatpush1.bf16.msra.mxu0 %v4085
    %4363 = vmatprep.subr.bf16.mxu0 %v4084
    %4364 = vmatpush1.bf16.msra.mxu0 %v4083
    %4365 = vmatprep.subr.bf16.mxu0 %v4082
    %4366 = vmatpush1.bf16.msra.mxu0 %v4081
    %4367 = vmatprep.subr.bf16.mxu0 %v4080
    %4368 = vmatpush1.bf16.msra.mxu0 %v4079
    %4369 = vmatprep.subr.bf16.mxu0 %v4078
    %4370 = vmatpush1.bf16.msra.mxu0 %v4077
    %4371 = vmatprep.subr.bf16.mxu0 %v4108
    %4372 = vmatpush2.bf16.msra.mxu0 %v4107
    %4373 = vmatprep.subr.bf16.mxu0 %v4106
    %4374 = vmatpush2.bf16.msra.mxu0 %v4105
    %4375 = vmatprep.subr.bf16.mxu0 %v4104
    %4376 = vmatpush2.bf16.msra.mxu0 %v4103
    %4377 = vmatprep.subr.bf16.mxu0 %v4102
    %4378 = vmatpush2.bf16.msra.mxu0 %v4101
    %4379 = vmatprep.subr.bf16.mxu0 %v4100
    %4380 = vmatpush2.bf16.msra.mxu0 %v4099
    %4381 = vmatprep.subr.bf16.mxu0 %v4098
    %4382 = vmatpush2.bf16.msra.mxu0 %v4097
    %4383 = vmatprep.subr.bf16.mxu0 %v4096
    %4384 = vmatpush2.bf16.msra.mxu0 %v4095
    %4385 = vmatprep.subr.bf16.mxu0 %v4094
    %4386 = vmatpush2.bf16.msra.mxu0 %v4093
    %4387 = vmatprep.mubr.bf16.mxu0 %v3486
    %4388 = vmatmul.mubr.bf16.gmra.mxu0 %v3485
    %v4389 = vpop.f32.mrf.mxu0
    %v4390 = vadd.f32 %v4347, %v4389
    %v4391 = vpop.f32.mrf.mxu0
    %v4392 = vadd.f32 %v4349, %v4391
    %v4393 = vpop.f32.mrf.mxu0
    %v4394 = vadd.f32 %v4351, %v4393
    %v4395 = vpop.f32.mrf.mxu0
    %v4396 = vadd.f32 %v4353, %v4395
    %4397 = vdwg.mxu0
    %4398 = vmatprep.subr.bf16.mxu0 %v4124
    %4399 = vmatpush1.bf16.msra.mxu0 %v4123
    %4400 = vmatprep.subr.bf16.mxu0 %v4122
    %4401 = vmatpush1.bf16.msra.mxu0 %v4121
    %4402 = vmatprep.subr.bf16.mxu0 %v4120
    %4403 = vmatpush1.bf16.msra.mxu0 %v4119
    %4404 = vmatprep.subr.bf16.mxu0 %v4118
    %4405 = vmatpush1.bf16.msra.mxu0 %v4117
    %4406 = vmatprep.subr.bf16.mxu0 %v4116
    %4407 = vmatpush1.bf16.msra.mxu0 %v4115
    %4408 = vmatprep.subr.bf16.mxu0 %v4114
    %4409 = vmatpush1.bf16.msra.mxu0 %v4113
    %4410 = vmatprep.subr.bf16.mxu0 %v4112
    %4411 = vmatpush1.bf16.msra.mxu0 %v4111
    %4412 = vmatprep.subr.bf16.mxu0 %v4110
    %4413 = vmatpush1.bf16.msra.mxu0 %v4109
    %4414 = vmatprep.subr.bf16.mxu0 %v4140
    %4415 = vmatpush2.bf16.msra.mxu0 %v4139
    %4416 = vmatprep.subr.bf16.mxu0 %v4138
    %4417 = vmatpush2.bf16.msra.mxu0 %v4137
    %4418 = vmatprep.subr.bf16.mxu0 %v4136
    %4419 = vmatpush2.bf16.msra.mxu0 %v4135
    %4420 = vmatprep.subr.bf16.mxu0 %v4134
    %4421 = vmatpush2.bf16.msra.mxu0 %v4133
    %4422 = vmatprep.subr.bf16.mxu0 %v4132
    %4423 = vmatpush2.bf16.msra.mxu0 %v4131
    %4424 = vmatprep.subr.bf16.mxu0 %v4130
    %4425 = vmatpush2.bf16.msra.mxu0 %v4129
    %4426 = vmatprep.subr.bf16.mxu0 %v4128
    %4427 = vmatpush2.bf16.msra.mxu0 %v4127
    %4428 = vmatprep.subr.bf16.mxu0 %v4126
    %4429 = vmatpush2.bf16.msra.mxu0 %v4125
    %4430 = vmatprep.mubr.bf16.mxu0 %v3488
    %4431 = vmatmul.mubr.bf16.gmra.mxu0 %v3487
    %v4432 = vpop.f32.mrf.mxu0
    %v4433 = vadd.f32 %v4390, %v4432
    %v4434 = vpop.f32.mrf.mxu0
    %v4435 = vadd.f32 %v4392, %v4434
    %v4436 = vpop.f32.mrf.mxu0
    %v4437 = vadd.f32 %v4394, %v4436
    %v4438 = vpop.f32.mrf.mxu0
    %v4439 = vadd.f32 %v4396, %v4438
    %4440 = vdwg.mxu0
    %v4441 = vmax.f32 %v4433, 0.0
    %v4442 = vmax.f32 %v4435, 0.0
    %v4443 = vmax.f32 %v4437, 0.0
    %v4444 = vmax.f32 %v4439, 0.0
    %v4445 = vpack.c.bf16 %v4443, %v4441
    %v4446 = vpack.c.bf16 %v4444, %v4442
    %v4447 = vld [vmem:[#allocation13] sm:$0xf]
    %v4448 = vld [vmem:[#allocation13 + $0x4] sm:$0xf]
    %v4449 = vld [vmem:[#allocation13 + $0x8] sm:$0xf]
    %v4450 = vld [vmem:[#allocation13 + $0xc] sm:$0xf]
    %v4451 = vld [vmem:[#allocation13 + $0x10] sm:$0xf]
    %v4452 = vld [vmem:[#allocation13 + $0x14] sm:$0xf]
    %v4453 = vld [vmem:[#allocation13 + $0x18] sm:$0xf]
    %v4454 = vld [vmem:[#allocation13 + $0x1c] sm:$0xf]
    %v4455 = vld [vmem:[#allocation13 + $0x20] sm:$0xf]
    %v4456 = vld [vmem:[#allocation13 + $0x24] sm:$0xf]
    %v4457 = vld [vmem:[#allocation13 + $0x28] sm:$0xf]
    %v4458 = vld [vmem:[#allocation13 + $0x2c] sm:$0xf]
    %v4459 = vld [vmem:[#allocation13 + $0x30] sm:$0xf]
    %v4460 = vld [vmem:[#allocation13 + $0x34] sm:$0xf]
    %v4461 = vld [vmem:[#allocation13 + $0x38] sm:$0xf]
    %v4462 = vld [vmem:[#allocation13 + $0x3c] sm:$0xf]
    %v4463 = vld [vmem:[#allocation13 + $0x40] sm:$0xf]
    %v4464 = vld [vmem:[#allocation13 + $0x44] sm:$0xf]
    %v4465 = vld [vmem:[#allocation13 + $0x48] sm:$0xf]
    %v4466 = vld [vmem:[#allocation13 + $0x4c] sm:$0xf]
    %v4467 = vld [vmem:[#allocation13 + $0x50] sm:$0xf]
    %v4468 = vld [vmem:[#allocation13 + $0x54] sm:$0xf]
    %v4469 = vld [vmem:[#allocation13 + $0x58] sm:$0xf]
    %v4470 = vld [vmem:[#allocation13 + $0x5c] sm:$0xf]
    %v4471 = vld [vmem:[#allocation13 + $0x60] sm:$0xf]
    %v4472 = vld [vmem:[#allocation13 + $0x64] sm:$0xf]
    %v4473 = vld [vmem:[#allocation13 + $0x68] sm:$0xf]
    %v4474 = vld [vmem:[#allocation13 + $0x6c] sm:$0xf]
    %v4475 = vld [vmem:[#allocation13 + $0x70] sm:$0xf]
    %v4476 = vld [vmem:[#allocation13 + $0x74] sm:$0xf]
    %v4477 = vld [vmem:[#allocation13 + $0x78] sm:$0xf]
    %v4478 = vld [vmem:[#allocation13 + $0x7c] sm:$0xf]
    %v4479 = vld [vmem:[%s10] sm:$0x1]
    %v4481 = vlaneseq
    %v4482 = vshrl.u32 %v4481, 7
    %v4483 = vsub.s32 0, %v4482
    %v4484 = vrot.slane %v4479, %v4483
    %v4518 = vunpack.c.l.b16 %v4447
    %v4519 = vunpack.c.l.b16 %v4448
    %v4520 = vunpack.c.l.b16 %v4449
    %v4521 = vunpack.c.l.b16 %v4450
    %v4522 = vunpack.c.l.b16 %v4451
    %v4523 = vunpack.c.l.b16 %v4452
    %v4524 = vunpack.c.l.b16 %v4453
    %v4525 = vunpack.c.l.b16 %v4454
    %v4526 = vunpack.c.l.b16 %v4455
    %v4527 = vunpack.c.l.b16 %v4456
    %v4528 = vunpack.c.l.b16 %v4457
    %v4529 = vunpack.c.l.b16 %v4458
    %v4530 = vunpack.c.l.b16 %v4459
    %v4531 = vunpack.c.l.b16 %v4460
    %v4532 = vunpack.c.l.b16 %v4461
    %v4533 = vunpack.c.l.b16 %v4462
    %v4534 = vunpack.c.l.b16 %v4463
    %v4535 = vunpack.c.l.b16 %v4464
    %v4536 = vunpack.c.l.b16 %v4465
    %v4537 = vunpack.c.l.b16 %v4466
    %v4538 = vunpack.c.l.b16 %v4467
    %v4539 = vunpack.c.l.b16 %v4468
    %v4540 = vunpack.c.l.b16 %v4469
    %v4541 = vunpack.c.l.b16 %v4470
    %v4542 = vunpack.c.l.b16 %v4471
    %v4543 = vunpack.c.l.b16 %v4472
    %v4544 = vunpack.c.l.b16 %v4473
    %v4545 = vunpack.c.l.b16 %v4474
    %v4546 = vunpack.c.l.b16 %v4475
    %v4547 = vunpack.c.l.b16 %v4476
    %v4548 = vunpack.c.l.b16 %v4477
    %v4549 = vunpack.c.l.b16 %v4478
    %v4550 = vpack.c.b16 %v4519, %v4518
    %v4551 = vpack.c.b16 %v4521, %v4520
    %v4552 = vpack.c.b16 %v4523, %v4522
    %v4553 = vpack.c.b16 %v4525, %v4524
    %v4554 = vpack.c.b16 %v4527, %v4526
    %v4555 = vpack.c.b16 %v4529, %v4528
    %v4556 = vpack.c.b16 %v4531, %v4530
    %v4557 = vpack.c.b16 %v4533, %v4532
    %v4558 = vpack.c.b16 %v4535, %v4534
    %v4559 = vpack.c.b16 %v4537, %v4536
    %v4560 = vpack.c.b16 %v4539, %v4538
    %v4561 = vpack.c.b16 %v4541, %v4540
    %v4562 = vpack.c.b16 %v4543, %v4542
    %v4563 = vpack.c.b16 %v4545, %v4544
    %v4564 = vpack.c.b16 %v4547, %v4546
    %v4565 = vpack.c.b16 %v4549, %v4548
    %4582 = vmatprep.subr.bf16.mxu0 0
    %4583 = vmatpush1.bf16.msra.mxu0 %v4557
    %4584 = vmatprep.subr.bf16.mxu0 0
    %4585 = vmatpush1.bf16.msra.mxu0 %v4556
    %4586 = vmatprep.subr.bf16.mxu0 0
    %4587 = vmatpush1.bf16.msra.mxu0 %v4555
    %4588 = vmatprep.subr.bf16.mxu0 0
    %4589 = vmatpush1.bf16.msra.mxu0 %v4554
    %4590 = vmatprep.subr.bf16.mxu0 0
    %4591 = vmatpush1.bf16.msra.mxu0 %v4553
    %4592 = vmatprep.subr.bf16.mxu0 0
    %4593 = vmatpush1.bf16.msra.mxu0 %v4552
    %4594 = vmatprep.subr.bf16.mxu0 0
    %4595 = vmatpush1.bf16.msra.mxu0 %v4551
    %4596 = vmatprep.subr.bf16.mxu0 0
    %4597 = vmatpush1.bf16.msra.mxu0 %v4550
    %4598 = vmatprep.subr.bf16.mxu0 0
    %4599 = vmatpush2.bf16.msra.mxu0 %v4565
    %4600 = vmatprep.subr.bf16.mxu0 0
    %4601 = vmatpush2.bf16.msra.mxu0 %v4564
    %4602 = vmatprep.subr.bf16.mxu0 0
    %4603 = vmatpush2.bf16.msra.mxu0 %v4563
    %4604 = vmatprep.subr.bf16.mxu0 0
    %4605 = vmatpush2.bf16.msra.mxu0 %v4562
    %4606 = vmatprep.subr.bf16.mxu0 0
    %4607 = vmatpush2.bf16.msra.mxu0 %v4561
    %4608 = vmatprep.subr.bf16.mxu0 0
    %4609 = vmatpush2.bf16.msra.mxu0 %v4560
    %4610 = vmatprep.subr.bf16.mxu0 0
    %4611 = vmatpush2.bf16.msra.mxu0 %v4559
    %4612 = vmatprep.subr.bf16.mxu0 0
    %4613 = vmatpush2.bf16.msra.mxu0 %v4558
    %4614 = vmatprep.mubr.bf16.mxu0 %v4446
    %4615 = vmatmul.mubr.bf16.gmra.mxu0 %v4445
    %v4616 = vpop.f32.mrf.mxu0
    %v4617 = vadd.f32 %v4484, %v4616
    %v4618 = vpop.f32.mrf.mxu0
    %v4619 = vpop.f32.mrf.mxu0
    %v4620 = vadd.f32 %v4484, %v4619
    %v4621 = vpop.f32.mrf.mxu0
    %4622 = vdwg.mxu0
    %4623 = vst [vmem:[#allocation14] sm:$0xff] %v4617
    %4624 = vst [vmem:[#allocation14 + $0x8] sm:$0xff] %v4620
    // Predicated region
    $region74: #{tpu_custom_call.1} parent=1 // pred_check
      _
    $region75: #{tpu_custom_call.1} parent=1 // pred_check_branch
      %4626 = sbr.rel (0) target = $region77
    $region76: #{tpu_custom_call.1} parent=1 // pred_region
      %s4628 = ssub.s32 256, 256
      %4629 = vsyncadd [#allocation4], %s4628
      %s4630 = sshll.u32 [#allocation14], 4
      %s4631 = int_to_ptr.vmem [resolvable:$true] %s4630
      %4636 = dma.vmem_to_hbm [thread:$0]  %s4631, 256, %s11, [#allocation4], 128, 128, 8
    $region77: #{tpu_custom_call.1} parent=1 // pred_fallthru
      _
    // Predicated region
    $region78: #{tpu_custom_call.1} parent=1 // pred_check
      _
    $region79: #{tpu_custom_call.1} parent=1 // pred_check_branch
      %4638 = sbr.rel (0) target = $region81
    $region80: #{tpu_custom_call.1} parent=1 // pred_region
      %4639 = dma.done [#allocation4], 256
    $region81: #{tpu_custom_call.1} parent=1 // pred_fallthru
      _
    %4640 = vsyncpa [#allocation3], 1
    %4641 = vsyncpa [#allocation6], 1
    %4642 = vsyncpa [#allocation9], 1
    %4643 = vsyncpa [#allocation12], 1
    %4644 = vsyncpa [#allocation4], 1

</llo_original>
